<compile_context>
chip_gen: v5e
topology: v5e:2x2
jax: 0.10.0
libtpu: 0.0.40
codegen_flags: <defaults>
</compile_context>

<pallas_src>
import functools

import jax
import jax.numpy as jnp
from jax.experimental import pallas as pl
from jax.experimental.pallas import tpu as pltpu


def _ca_kernel(x_ref, fire_ref, w1x_ref, w1sx_ref, w1sy_ref, b1_ref, w2_ref,
               out_ref, *, H, W):
    C, L = x_ref.shape              # L = Nb * H * W  (batch folded into lanes)
    P = H * W                       # lane period of one sample
    x = x_ref[...]                  # (C, L)  pixels on lanes
    fire = fire_ref[...]            # (1, L)  per-pixel dropout mask

    # ---- identity-block matmul first: MXU overlaps the stencil below ----
    h = jnp.dot(w1x_ref[...], x, preferred_element_type=jnp.float32) + b1_ref[...]

    # ---- boundary masks: hoisted, computed once, periodic per sample ----
    p_idx = jax.lax.broadcasted_iota(jnp.int32, (1, L), 1)
    if P & (P - 1) == 0:
        pp = jnp.bitwise_and(p_idx, P - 1)          # within-sample pixel index
    else:
        pp = p_idx - (p_idx // P) * P
    if W & (W - 1) == 0:
        w_idx = jnp.bitwise_and(pp, W - 1)
    else:
        w_idx = pp - (pp // W) * W
    m_h_plus = pp < (H - 1) * W                     # row h+1 exists   (1, L)
    m_h_minus = pp >= W                             # row h-1 exists
    m_w_plus = w_idx < (W - 1)                      # col w+1 exists
    m_w_minus = w_idx >= 1                          # col w-1 exists
    # full-channel broadcasts done once (JAX does not CSE broadcast_in_dim)
    mcw_p = jnp.broadcast_to(m_w_plus, (C, L))
    mcw_m = jnp.broadcast_to(m_w_minus, (C, L))
    mch_p = jnp.broadcast_to(m_h_plus, (C, L))
    mch_m = jnp.broadcast_to(m_h_minus, (C, L))

    def sh(v, k, msk):
        # v at lane p+k (same sample); zero outside the sample's HxW grid.
        return jnp.where(msk, pltpu.roll(v, shift=(-k) % L, axis=1), 0.0)

    # ---- separable depthwise 3x3 Sobel (cross-correlation, zero padded) ----
    # row pass (w direction)
    xw_p = sh(x, +1, mcw_p)                         # x(h, w+1)
    xw_m = sh(x, -1, mcw_m)                         # x(h, w-1)
    r = xw_m + 2.0 * x + xw_p                       # (1,2,1) smooth along w
    rd = xw_p - xw_m                                # (-1,0,1) diff  along w
    # column pass (h direction)
    sy = (sh(r, +W, mch_p) - sh(r, -W, mch_m)) * 0.125
    sx = (sh(rd, -W, mch_m) + 2.0 * rd + sh(rd, +W, mch_p)) * 0.125

    # ---- separable 3x3 max-pool on a single alpha row (zero fill is valid
    # ---- because the living threshold 0.1 > 0) ----
    def pool3(a):                                   # a: (1, L)
        aw = jnp.maximum(jnp.maximum(a, sh(a, +1, m_w_plus)),
                         sh(a, -1, m_w_minus))
        return jnp.maximum(jnp.maximum(aw, sh(aw, +W, m_h_plus)),
                           sh(aw, -W, m_h_minus))

    pre_life = pool3(x[3:4, :]) > 0.1               # (1, L)

    # ---- update: remaining 1x1-conv blocks -> ReLU -> 1x1 conv (MXU) ----
    h = h + jnp.dot(w1sx_ref[...], sx, preferred_element_type=jnp.float32)
    h = h + jnp.dot(w1sy_ref[...], sy, preferred_element_type=jnp.float32)
    h = jnp.maximum(h, 0.0)                         # (HID, L)
    dx = jnp.dot(w2_ref[...], h, preferred_element_type=jnp.float32)  # (C, L)

    # ---- stochastic update (pixel mask over channels) + residual ----
    x_new = x + dx * fire

    # ---- post living mask + combine ----
    post_life = pool3(x_new[3:4, :]) > 0.1
    life = jnp.logical_and(pre_life, post_life)     # (1, L)
    out_ref[...] = jnp.where(life, x_new, 0.0)      # lane-dense store


def _pick_block_batch(n, nb_max):
    """Samples folded into one lane block.

    Prefer the widest slab that still leaves >= 2 grid steps (keeps both v7x
    TensorCores fed); for tiny batches fall back to folding everything into a
    single step."""
    for nb in range(min(n, nb_max), 0, -1):
        if n % nb == 0 and n // nb >= 2:
            return nb
    return n


def ca_forward(x_nchw, w1t, b1, w2t, drop_mask, *, nb_max=8):
    """CAModel forward.

    x_nchw:    (N, C, H, W) float32
    w1t:       (HID, 3C)    first 1x1 conv, feature blocks [x | sobel_x | sobel_y]
    b1:        (HID, 1)     first 1x1 conv bias
    w2t:       (C, HID)     second 1x1 conv (bias-free)
    drop_mask: (N, H, W)    per-pixel Bernoulli(fire_rate) mask, float32
    returns    (N, C, H, W)
    """
    N, C, H, W = x_nchw.shape
    HID = w1t.shape[0]
    P = H * W
    Nb = _pick_block_batch(N, nb_max)
    Lb = Nb * P

    # Fold batch into the lane axis: (N,C,H,W) -> (C, N*H*W).
    x = jnp.transpose(x_nchw, (1, 0, 2, 3)).reshape(C, N * P)
    fire = drop_mask.reshape(1, N * P)

    # Split w1 into [identity | sobel_x | sobel_y] blocks (no concat in VMEM,
    # identity matmul can overlap the stencil).
    w1x, w1sx, w1sy = w1t[:, :C], w1t[:, C:2 * C], w1t[:, 2 * C:]

    kernel = functools.partial(_ca_kernel, H=H, W=W)
    out = pl.pallas_call(
        kernel,
        out_shape=jax.ShapeDtypeStruct((C, N * P), jnp.float32),
        grid_spec=pltpu.PrefetchScalarGridSpec(
            num_scalar_prefetch=0,
            grid=(N // Nb,),                      # Nb samples per step
            in_specs=[
                pl.BlockSpec((C, Lb), lambda n: (0, n)),
                pl.BlockSpec((1, Lb), lambda n: (0, n)),
                pl.BlockSpec((HID, C), lambda n: (0, 0)),
                pl.BlockSpec((HID, C), lambda n: (0, 0)),
                pl.BlockSpec((HID, C), lambda n: (0, 0)),
                pl.BlockSpec((HID, 1), lambda n: (0, 0)),
                pl.BlockSpec((C, HID), lambda n: (0, 0)),
            ],
            out_specs=pl.BlockSpec((C, Lb), lambda n: (0, n)),
        ),
        compiler_params=pltpu.CompilerParams(
            dimension_semantics=("parallel",)),   # shards chunks across TCs
    )(x, fire, w1x, w1sx, w1sy, b1, w2t)
    return out.reshape(C, N, H, W).transpose(1, 0, 2, 3)


def ca_reference(x_nchw, w1t, b1, w2t, drop_mask):
    """Pure-JAX reference with identical conventions (correctness check)."""
    N, C, H, W = x_nchw.shape
    xp = jnp.pad(x_nchw, ((0, 0), (0, 0), (1, 1), (1, 1)))

    def sh(i, j):
        return xp[:, :, i:i + H, j:j + W]

    sx = (-sh(0, 0) + sh(0, 2) - 2 * sh(1, 0) + 2 * sh(1, 2)
          - sh(2, 0) + sh(2, 2)) / 8.0
    sy = (-sh(0, 0) - 2 * sh(0, 1) - sh(0, 2)
          + sh(2, 0) + 2 * sh(2, 1) + sh(2, 2)) / 8.0
    y = jnp.concatenate([x_nchw, sx, sy], axis=1)             # (N, 3C, H, W)
    h = jax.nn.relu(jnp.einsum('kf,nfhw->nkhw', w1t, y)
                    + b1.reshape(1, -1, 1, 1))
    dx = jnp.einsum('ck,nkhw->nchw', w2t, h)
    dx = dx * drop_mask[:, None, :, :]
    x_new = x_nchw + dx

    def pool3(a):                                             # (N, H, W)
        ap = jnp.pad(a, ((0, 0), (1, 1), (1, 1)))
        m = ap[:, 0:H, 0:W]
        for i in range(3):
            for j in range(3):
                m = jnp.maximum(m, ap[:, i:i + H, j:j + W])
        return m

    pre = pool3(x_nchw[:, 3]) > 0.1
    post = pool3(x_new[:, 3]) > 0.1
    life = jnp.logical_and(pre, post).astype(jnp.float32)[:, None]
    return x_new * life


if __name__ == "__main__":
    N, C, H, W, HID = 8, 16, 16, 16, 128
    FIRE_RATE = 0.5

    key = jax.random.PRNGKey(0)
    kx, k1, kb, k2, km = jax.random.split(key, 5)

    x = jax.random.normal(kx, (N, C, H, W), jnp.float32)
    # Weights in the kernel's layout: w1t (HID, 3C) over feature blocks
    # [identity | sobel_x | sobel_y] (fixed permutation of the PyTorch
    # per-channel interleave), w2t (C, HID), b1 (HID, 1).
    w1t = jax.random.normal(k1, (HID, 3 * C), jnp.float32) * 0.1
    b1 = jax.random.normal(kb, (HID, 1), jnp.float32) * 0.1
    # NOTE: the PyTorch __init__ zero-initializes the second 1x1 conv weight
    # (making dx identically 0); small random values here so the second
    # matmul is actually exercised.  Shapes match the module exactly.
    w2t = jax.random.normal(k2, (C, HID), jnp.float32) * 0.1

    # stochastic_update mask: (rand <= fire_rate), one value per pixel,
    # broadcast over channels (computed host-side for determinism).
    u = jax.random.uniform(km, (N, H, W), jnp.float32)
    drop_mask = (u <= FIRE_RATE).astype(jnp.float32)

    out = jax.block_until_ready(ca_forward(x, w1t, b1, w2t, drop_mask))
    ref = ca_reference(x, w1t, b1, w2t, drop_mask)

    assert out.shape == (N, C, H, W)
    err = float(jnp.max(jnp.abs(out - ref)))
    assert jnp.allclose(out, ref, atol=5e-4, rtol=5e-4), err
    print("KERNEL_OK")
</pallas_src>

<mosaic_0001>
module attributes {stable_mosaic.version = 11 : i64} {
  func.func @_ca_kernel(%arg0: i32, %arg1: memref<16x1024xf32, #tpu.memory_space<vmem>>, %arg2: memref<1x1024xf32, #tpu.memory_space<vmem>>, %arg3: memref<128x16xf32, #tpu.memory_space<vmem>>, %arg4: memref<128x16xf32, #tpu.memory_space<vmem>>, %arg5: memref<128x16xf32, #tpu.memory_space<vmem>>, %arg6: memref<128x1xf32, #tpu.memory_space<vmem>>, %arg7: memref<16x128xf32, #tpu.memory_space<vmem>>, %arg8: memref<16x1024xf32, #tpu.memory_space<vmem>>) attributes {dimension_semantics = [#tpu.dimension_semantics<parallel>], iteration_bounds = array<i64: 2>, scalar_prefetch = 0 : i64, scratch_operands = 0 : i64, tpu.core_type = #tpu.core_type<tc>, window_params = [{transform_indices = @transform_0, window_bounds = array<i64: 16, 1024>}, {transform_indices = @transform_1, window_bounds = array<i64: 1, 1024>}, {pipeline_mode = #tpu.pipeline_mode<synchronous>, transform_indices = @transform_2, window_bounds = array<i64: 128, 16>}, {pipeline_mode = #tpu.pipeline_mode<synchronous>, transform_indices = @transform_3, window_bounds = array<i64: 128, 16>}, {pipeline_mode = #tpu.pipeline_mode<synchronous>, transform_indices = @transform_4, window_bounds = array<i64: 128, 16>}, {pipeline_mode = #tpu.pipeline_mode<synchronous>, transform_indices = @transform_5, window_bounds = array<i64: 128, 1>}, {pipeline_mode = #tpu.pipeline_mode<synchronous>, transform_indices = @transform_6, window_bounds = array<i64: 16, 128>}, {transform_indices = @transform_7, window_bounds = array<i64: 16, 1024>}]} {
    %c0 = arith.constant 0 : index
    %c0_0 = arith.constant 0 : index
    %0 = vector.load %arg1[%c0, %c0_0] : memref<16x1024xf32, #tpu.memory_space<vmem>>, vector<16x1024xf32>
    %c0_1 = arith.constant 0 : index
    %c0_2 = arith.constant 0 : index
    %1 = vector.load %arg2[%c0_1, %c0_2] : memref<1x1024xf32, #tpu.memory_space<vmem>>, vector<1x1024xf32>
    %c0_3 = arith.constant 0 : index
    %c0_4 = arith.constant 0 : index
    %2 = vector.load %arg3[%c0_3, %c0_4] : memref<128x16xf32, #tpu.memory_space<vmem>>, vector<128x16xf32>
    %cst = arith.constant dense<0.000000e+00> : vector<128x1024xf32>
    %3 = tpu.matmul %2, %0, %cst {dimension_numbers = #tpu.dot_dimension_numbers<[1], [0], [0], [1], [0, 0, 1, 1], [], []>} : vector<128x16xf32>, vector<16x1024xf32>, vector<128x1024xf32> -> vector<128x1024xf32>
    %c0_5 = arith.constant 0 : index
    %c0_6 = arith.constant 0 : index
    %4 = vector.load %arg6[%c0_5, %c0_6] : memref<128x1xf32, #tpu.memory_space<vmem>>, vector<128x1xf32>
    %5 = vector.broadcast %4 : vector<128x1xf32> to vector<128x1024xf32>
    %6 = arith.addf %3, %5 : vector<128x1024xf32>
    %7 = tpu.iota {dimensions = array<i32: 1>} : vector<1x1024xi32>
    %c255_i32 = arith.constant 255 : i32
    %8 = vector.broadcast %c255_i32 : i32 to vector<1x1024xi32>
    %9 = arith.andi %7, %8 : vector<1x1024xi32>
    %c15_i32 = arith.constant 15 : i32
    %10 = vector.broadcast %c15_i32 : i32 to vector<1x1024xi32>
    %11 = arith.andi %9, %10 : vector<1x1024xi32>
    %c240_i32 = arith.constant 240 : i32
    %12 = vector.broadcast %c240_i32 : i32 to vector<1x1024xi32>
    %13 = arith.cmpi slt, %9, %12 : vector<1x1024xi32>
    %c16_i32 = arith.constant 16 : i32
    %14 = vector.broadcast %c16_i32 : i32 to vector<1x1024xi32>
    %15 = arith.cmpi sge, %9, %14 : vector<1x1024xi32>
    %c15_i32_7 = arith.constant 15 : i32
    %16 = vector.broadcast %c15_i32_7 : i32 to vector<1x1024xi32>
    %17 = arith.cmpi slt, %11, %16 : vector<1x1024xi32>
    %c1_i32 = arith.constant 1 : i32
    %18 = vector.broadcast %c1_i32 : i32 to vector<1x1024xi32>
    %19 = arith.cmpi sge, %11, %18 : vector<1x1024xi32>
    %20 = vector.shape_cast %17 : vector<1x1024xi1> to vector<1x1024xi1>
    %21 = vector.broadcast %20 : vector<1x1024xi1> to vector<16x1024xi1>
    %22 = vector.shape_cast %19 : vector<1x1024xi1> to vector<1x1024xi1>
    %23 = vector.broadcast %22 : vector<1x1024xi1> to vector<16x1024xi1>
    %24 = vector.shape_cast %13 : vector<1x1024xi1> to vector<1x1024xi1>
    %25 = vector.broadcast %24 : vector<1x1024xi1> to vector<16x1024xi1>
    %26 = vector.shape_cast %15 : vector<1x1024xi1> to vector<1x1024xi1>
    %27 = vector.broadcast %26 : vector<1x1024xi1> to vector<16x1024xi1>
    %c1023_i32 = arith.constant 1023 : i32
    %28 = tpu.dynamic_rotate %0 by %c1023_i32 dim 1 : vector<16x1024xf32>, i32 -> vector<16x1024xf32>
    %cst_8 = arith.constant 0.000000e+00 : f32
    %29 = vector.broadcast %cst_8 : f32 to vector<16x1024xf32>
    %30 = arith.select %21, %28, %29 : vector<16x1024xi1>, vector<16x1024xf32>
    %c1_i32_9 = arith.constant 1 : i32
    %31 = tpu.dynamic_rotate %0 by %c1_i32_9 dim 1 : vector<16x1024xf32>, i32 -> vector<16x1024xf32>
    %cst_10 = arith.constant 0.000000e+00 : f32
    %32 = vector.broadcast %cst_10 : f32 to vector<16x1024xf32>
    %33 = arith.select %23, %31, %32 : vector<16x1024xi1>, vector<16x1024xf32>
    %cst_11 = arith.constant 2.000000e+00 : f32
    %34 = vector.broadcast %cst_11 : f32 to vector<16x1024xf32>
    %35 = arith.mulf %34, %0 : vector<16x1024xf32>
    %36 = arith.addf %33, %35 : vector<16x1024xf32>
    %37 = arith.addf %36, %30 : vector<16x1024xf32>
    %38 = arith.subf %30, %33 : vector<16x1024xf32>
    %c1008_i32 = arith.constant 1008 : i32
    %39 = tpu.dynamic_rotate %37 by %c1008_i32 dim 1 : vector<16x1024xf32>, i32 -> vector<16x1024xf32>
    %cst_12 = arith.constant 0.000000e+00 : f32
    %40 = vector.broadcast %cst_12 : f32 to vector<16x1024xf32>
    %41 = arith.select %25, %39, %40 : vector<16x1024xi1>, vector<16x1024xf32>
    %c16_i32_13 = arith.constant 16 : i32
    %42 = tpu.dynamic_rotate %37 by %c16_i32_13 dim 1 : vector<16x1024xf32>, i32 -> vector<16x1024xf32>
    %cst_14 = arith.constant 0.000000e+00 : f32
    %43 = vector.broadcast %cst_14 : f32 to vector<16x1024xf32>
    %44 = arith.select %27, %42, %43 : vector<16x1024xi1>, vector<16x1024xf32>
    %45 = arith.subf %41, %44 : vector<16x1024xf32>
    %cst_15 = arith.constant 1.250000e-01 : f32
    %46 = vector.broadcast %cst_15 : f32 to vector<16x1024xf32>
    %47 = arith.mulf %45, %46 : vector<16x1024xf32>
    %c16_i32_16 = arith.constant 16 : i32
    %48 = tpu.dynamic_rotate %38 by %c16_i32_16 dim 1 : vector<16x1024xf32>, i32 -> vector<16x1024xf32>
    %cst_17 = arith.constant 0.000000e+00 : f32
    %49 = vector.broadcast %cst_17 : f32 to vector<16x1024xf32>
    %50 = arith.select %27, %48, %49 : vector<16x1024xi1>, vector<16x1024xf32>
    %cst_18 = arith.constant 2.000000e+00 : f32
    %51 = vector.broadcast %cst_18 : f32 to vector<16x1024xf32>
    %52 = arith.mulf %51, %38 : vector<16x1024xf32>
    %53 = arith.addf %50, %52 : vector<16x1024xf32>
    %c1008_i32_19 = arith.constant 1008 : i32
    %54 = tpu.dynamic_rotate %38 by %c1008_i32_19 dim 1 : vector<16x1024xf32>, i32 -> vector<16x1024xf32>
    %cst_20 = arith.constant 0.000000e+00 : f32
    %55 = vector.broadcast %cst_20 : f32 to vector<16x1024xf32>
    %56 = arith.select %25, %54, %55 : vector<16x1024xi1>, vector<16x1024xf32>
    %57 = arith.addf %53, %56 : vector<16x1024xf32>
    %cst_21 = arith.constant 1.250000e-01 : f32
    %58 = vector.broadcast %cst_21 : f32 to vector<16x1024xf32>
    %59 = arith.mulf %57, %58 : vector<16x1024xf32>
    %60 = vector.extract_strided_slice %0 {offsets = [3, 0], sizes = [1, 1024], strides = [1, 1]} : vector<16x1024xf32> to vector<1x1024xf32>
    %c1023_i32_22 = arith.constant 1023 : i32
    %61 = tpu.dynamic_rotate %60 by %c1023_i32_22 dim 1 : vector<1x1024xf32>, i32 -> vector<1x1024xf32>
    %cst_23 = arith.constant 0.000000e+00 : f32
    %62 = vector.broadcast %cst_23 : f32 to vector<1x1024xf32>
    %63 = arith.select %17, %61, %62 : vector<1x1024xi1>, vector<1x1024xf32>
    %64 = arith.maximumf %60, %63 : vector<1x1024xf32>
    %c1_i32_24 = arith.constant 1 : i32
    %65 = tpu.dynamic_rotate %60 by %c1_i32_24 dim 1 : vector<1x1024xf32>, i32 -> vector<1x1024xf32>
    %cst_25 = arith.constant 0.000000e+00 : f32
    %66 = vector.broadcast %cst_25 : f32 to vector<1x1024xf32>
    %67 = arith.select %19, %65, %66 : vector<1x1024xi1>, vector<1x1024xf32>
    %68 = arith.maximumf %64, %67 : vector<1x1024xf32>
    %c1008_i32_26 = arith.constant 1008 : i32
    %69 = tpu.dynamic_rotate %68 by %c1008_i32_26 dim 1 : vector<1x1024xf32>, i32 -> vector<1x1024xf32>
    %cst_27 = arith.constant 0.000000e+00 : f32
    %70 = vector.broadcast %cst_27 : f32 to vector<1x1024xf32>
    %71 = arith.select %13, %69, %70 : vector<1x1024xi1>, vector<1x1024xf32>
    %72 = arith.maximumf %68, %71 : vector<1x1024xf32>
    %c16_i32_28 = arith.constant 16 : i32
    %73 = tpu.dynamic_rotate %68 by %c16_i32_28 dim 1 : vector<1x1024xf32>, i32 -> vector<1x1024xf32>
    %cst_29 = arith.constant 0.000000e+00 : f32
    %74 = vector.broadcast %cst_29 : f32 to vector<1x1024xf32>
    %75 = arith.select %15, %73, %74 : vector<1x1024xi1>, vector<1x1024xf32>
    %76 = arith.maximumf %72, %75 : vector<1x1024xf32>
    %cst_30 = arith.constant 1.000000e-01 : f32
    %77 = vector.broadcast %cst_30 : f32 to vector<1x1024xf32>
    %78 = arith.cmpf ogt, %76, %77 : vector<1x1024xf32>
    %c0_31 = arith.constant 0 : index
    %c0_32 = arith.constant 0 : index
    %79 = vector.load %arg4[%c0_31, %c0_32] : memref<128x16xf32, #tpu.memory_space<vmem>>, vector<128x16xf32>
    %cst_33 = arith.constant dense<0.000000e+00> : vector<128x1024xf32>
    %80 = tpu.matmul %79, %59, %cst_33 {dimension_numbers = #tpu.dot_dimension_numbers<[1], [0], [0], [1], [0, 0, 1, 1], [], []>} : vector<128x16xf32>, vector<16x1024xf32>, vector<128x1024xf32> -> vector<128x1024xf32>
    %81 = arith.addf %6, %80 : vector<128x1024xf32>
    %c0_34 = arith.constant 0 : index
    %c0_35 = arith.constant 0 : index
    %82 = vector.load %arg5[%c0_34, %c0_35] : memref<128x16xf32, #tpu.memory_space<vmem>>, vector<128x16xf32>
    %cst_36 = arith.constant dense<0.000000e+00> : vector<128x1024xf32>
    %83 = tpu.matmul %82, %47, %cst_36 {dimension_numbers = #tpu.dot_dimension_numbers<[1], [0], [0], [1], [0, 0, 1, 1], [], []>} : vector<128x16xf32>, vector<16x1024xf32>, vector<128x1024xf32> -> vector<128x1024xf32>
    %84 = arith.addf %81, %83 : vector<128x1024xf32>
    %cst_37 = arith.constant 0.000000e+00 : f32
    %85 = vector.broadcast %cst_37 : f32 to vector<128x1024xf32>
    %86 = arith.maximumf %84, %85 : vector<128x1024xf32>
    %c0_38 = arith.constant 0 : index
    %c0_39 = arith.constant 0 : index
    %87 = vector.load %arg7[%c0_38, %c0_39] : memref<16x128xf32, #tpu.memory_space<vmem>>, vector<16x128xf32>
    %cst_40 = arith.constant dense<0.000000e+00> : vector<16x1024xf32>
    %88 = tpu.matmul %87, %86, %cst_40 {dimension_numbers = #tpu.dot_dimension_numbers<[1], [0], [0], [1], [0, 0, 1, 1], [], []>} : vector<16x128xf32>, vector<128x1024xf32>, vector<16x1024xf32> -> vector<16x1024xf32>
    %89 = vector.broadcast %1 : vector<1x1024xf32> to vector<16x1024xf32>
    %90 = arith.mulf %88, %89 : vector<16x1024xf32>
    %91 = arith.addf %0, %90 : vector<16x1024xf32>
    %92 = vector.extract_strided_slice %91 {offsets = [3, 0], sizes = [1, 1024], strides = [1, 1]} : vector<16x1024xf32> to vector<1x1024xf32>
    %c1023_i32_41 = arith.constant 1023 : i32
    %93 = tpu.dynamic_rotate %92 by %c1023_i32_41 dim 1 : vector<1x1024xf32>, i32 -> vector<1x1024xf32>
    %cst_42 = arith.constant 0.000000e+00 : f32
    %94 = vector.broadcast %cst_42 : f32 to vector<1x1024xf32>
    %95 = arith.select %17, %93, %94 : vector<1x1024xi1>, vector<1x1024xf32>
    %96 = arith.maximumf %92, %95 : vector<1x1024xf32>
    %c1_i32_43 = arith.constant 1 : i32
    %97 = tpu.dynamic_rotate %92 by %c1_i32_43 dim 1 : vector<1x1024xf32>, i32 -> vector<1x1024xf32>
    %cst_44 = arith.constant 0.000000e+00 : f32
    %98 = vector.broadcast %cst_44 : f32 to vector<1x1024xf32>
    %99 = arith.select %19, %97, %98 : vector<1x1024xi1>, vector<1x1024xf32>
    %100 = arith.maximumf %96, %99 : vector<1x1024xf32>
    %c1008_i32_45 = arith.constant 1008 : i32
    %101 = tpu.dynamic_rotate %100 by %c1008_i32_45 dim 1 : vector<1x1024xf32>, i32 -> vector<1x1024xf32>
    %cst_46 = arith.constant 0.000000e+00 : f32
    %102 = vector.broadcast %cst_46 : f32 to vector<1x1024xf32>
    %103 = arith.select %13, %101, %102 : vector<1x1024xi1>, vector<1x1024xf32>
    %104 = arith.maximumf %100, %103 : vector<1x1024xf32>
    %c16_i32_47 = arith.constant 16 : i32
    %105 = tpu.dynamic_rotate %100 by %c16_i32_47 dim 1 : vector<1x1024xf32>, i32 -> vector<1x1024xf32>
    %cst_48 = arith.constant 0.000000e+00 : f32
    %106 = vector.broadcast %cst_48 : f32 to vector<1x1024xf32>
    %107 = arith.select %15, %105, %106 : vector<1x1024xi1>, vector<1x1024xf32>
    %108 = arith.maximumf %104, %107 : vector<1x1024xf32>
    %cst_49 = arith.constant 1.000000e-01 : f32
    %109 = vector.broadcast %cst_49 : f32 to vector<1x1024xf32>
    %110 = arith.cmpf ogt, %108, %109 : vector<1x1024xf32>
    %111 = arith.andi %78, %110 : vector<1x1024xi1>
    %cst_50 = arith.constant 0.000000e+00 : f32
    %112 = vector.shape_cast %111 : vector<1x1024xi1> to vector<1x1024xi1>
    %113 = vector.broadcast %112 : vector<1x1024xi1> to vector<16x1024xi1>
    %114 = vector.broadcast %cst_50 : f32 to vector<16x1024xf32>
    %115 = arith.select %113, %91, %114 : vector<16x1024xi1>, vector<16x1024xf32>
    %c0_51 = arith.constant 0 : index
    %c0_52 = arith.constant 0 : index
    %116 = vector.load %arg8[%c0_51, %c0_52] : memref<16x1024xf32, #tpu.memory_space<vmem>>, vector<16x1024xf32>
    tpu.vector_store %arg8[%c0_51, %c0_52], %115 {strides = array<i32>} : memref<16x1024xf32, #tpu.memory_space<vmem>>, vector<16x1024xf32>,
    return
  }
  func.func @transform_0(%arg0: i32) -> (i32, i32) {
    %c0_i32 = arith.constant 0 : i32
    %c0_i32_0 = arith.constant 0 : i32
    return %c0_i32, %arg0 : i32, i32
  }
  func.func @transform_1(%arg0: i32) -> (i32, i32) {
    %c0_i32 = arith.constant 0 : i32
    %c0_i32_0 = arith.constant 0 : i32
    return %c0_i32, %arg0 : i32, i32
  }
  func.func @transform_2(%arg0: i32) -> (i32, i32) {
    %c0_i32 = arith.constant 0 : i32
    %c0_i32_0 = arith.constant 0 : i32
    %c0_i32_1 = arith.constant 0 : i32
    return %c0_i32, %c0_i32_0 : i32, i32
  }
  func.func @transform_3(%arg0: i32) -> (i32, i32) {
    %c0_i32 = arith.constant 0 : i32
    %c0_i32_0 = arith.constant 0 : i32
    %c0_i32_1 = arith.constant 0 : i32
    return %c0_i32, %c0_i32_0 : i32, i32
  }
  func.func @transform_4(%arg0: i32) -> (i32, i32) {
    %c0_i32 = arith.constant 0 : i32
    %c0_i32_0 = arith.constant 0 : i32
    %c0_i32_1 = arith.constant 0 : i32
    return %c0_i32, %c0_i32_0 : i32, i32
  }
  func.func @transform_5(%arg0: i32) -> (i32, i32) {
    %c0_i32 = arith.constant 0 : i32
    %c0_i32_0 = arith.constant 0 : i32
    %c0_i32_1 = arith.constant 0 : i32
    return %c0_i32, %c0_i32_0 : i32, i32
  }
  func.func @transform_6(%arg0: i32) -> (i32, i32) {
    %c0_i32 = arith.constant 0 : i32
    %c0_i32_0 = arith.constant 0 : i32
    %c0_i32_1 = arith.constant 0 : i32
    return %c0_i32, %c0_i32_0 : i32, i32
  }
  func.func @transform_7(%arg0: i32) -> (i32, i32) {
    %c0_i32 = arith.constant 0 : i32
    %c0_i32_0 = arith.constant 0 : i32
    return %c0_i32, %arg0 : i32, i32
  }
}

</mosaic_0001>

<llo_original>
// kernel: tpu_custom_call.1
$region0: #{tpu_custom_call.1}
  #allocation0 [shape = 'u32[]', space=smem, size = 0x4, offset = 0x4, fixed_abs, tag = 'smem constant byte address 0x4 - core index']
  #allocation1 [shape = 'u32[72,128]{1,0:T(1,128)}', space=vmem, size = 0x9000, scoped, tag = 'internal scratch']
  %s0 = inlined_call_operand.vmem [shape: f32[16,2048], index: 0, kind: input, shape index: {}]
  %s1 = inlined_call_operand.vmem [shape: f32[1,2048], index: 1, kind: input, shape index: {}]
  %s2 = inlined_call_operand.vmem [shape: f32[128,16], index: 2, kind: input, shape index: {}]
  %s3 = inlined_call_operand.vmem [shape: f32[128,16], index: 3, kind: input, shape index: {}]
  %s4 = inlined_call_operand.vmem [shape: f32[128,16], index: 4, kind: input, shape index: {}]
  %s5 = inlined_call_operand.vmem [shape: f32[128,1], index: 5, kind: input, shape index: {}]
  %s6 = inlined_call_operand.vmem [shape: f32[16,128], index: 6, kind: input, shape index: {}]
  %s7 = inlined_call_operand.hbm [shape: f32[16,2048], index: 7, kind: output, shape index: {}]
  %s8 = sld [smem:[#allocation0]]
  $region84: #{tpu_custom_call.1} parent=0
    _
  %s10 = ssub.s32 1, %s8
  %s11 = scalar_select 0, %s10, %s8
  $region1: #{tpu_custom_call.1} parent=0
    #allocation2 [shape = 'u8[131072]{0}', space=vmem, size = 0x20000, scoped, tag = 'input window, operand 0']
    #allocation3 [shape = 'u8[131072]{0}', space=vmem, size = 0x20000, scoped, tag = 'output window, operand 0']
    #allocation4 [shape = 's32[2]{0}', space=sflag, size = 0x8, scoped, tag = 'scoped memory for tpu_custom_call.1']
    %12 = vsyncpa [#allocation4], 0
    %s13 = scalar_lea.sflag [#allocation4], 1
    %14 = vsyncpa %s13, 0
    loop: start=0, step=1, limit=4
    $region2: #{tpu_custom_call.1} parent=1 // loop_pre_header
      _
    $region3: #{tpu_custom_call.1} parent=1 // loop_header
      %s16 = sphi 0, %s20
      %p17 = scmp.ge.s32.totalorder %s16, 4
      %s26 = sphi 0, %s28
      %s29 = sphi 0, %s26
      %s30 = sphi 0, %s29
      %s46 = sphi 0, %s30
      %s52 = sphi 0, %s54
      %s55 = sphi 0, %s52
      %s56 = sphi 0, %s55
      %s72 = sphi 0, %s56
      %s76 = sphi 0, %s76
      %s78 = sphi 0, %s76
      %s79 = sphi 0, %s78
      %s93 = sphi 0, %s79
      %s97 = sphi 0, %s97
      %s99 = sphi 0, %s97
      %s100 = sphi 0, %s99
      %s114 = sphi 0, %s100
      %s118 = sphi 0, %s118
      %s120 = sphi 0, %s118
      %s121 = sphi 0, %s120
      %s135 = sphi 0, %s121
      %s139 = sphi 0, %s139
      %s141 = sphi 0, %s139
      %s142 = sphi 0, %s141
      %s156 = sphi 0, %s142
      %s160 = sphi 0, %s160
      %s162 = sphi 0, %s160
      %s163 = sphi 0, %s162
      %s177 = sphi 0, %s163
      %s183 = sphi 0, %s185
      %s186 = sphi 0, %s183
      %s187 = sphi 0, %s186
      %s203 = sphi 0, %s187
    $region4: #{tpu_custom_call.1} parent=1 // loop_header_branch
      %19 = sbr.rel (%p17) target = $region8
    $region5: #{tpu_custom_call.1} parent=1 // loop_body
      %s21 = ssub.s32 %s16, 1
      %s22 = ssub.s32 %s16, 2
      %s23 = sadd.s32 %s16, 1
      %s24 = ssub.s32 %s16, %s23
      %p25 = scmp.eq.s32.totalorder %s24, 0
      %s27 = sadd.s32 %s26, 1
      %s28 = scalar_select %p25, %s26, %s27
      %p31 = pneg %p25
      %p32 = scmp.eq.s32.totalorder %s16, 1
      %p33 = por %p31, %p32
      %p34 = scmp.ne.s32.totalorder %s26, %s29
      %p35 = scmp.eq.s32.totalorder %s16, 0
      %p36 = por %p34, %p35
      %p37 = scmp.ne.s32.totalorder %s26, %s29
      %p38 = scmp.eq.s32.totalorder %s21, 1
      %p39 = por %p37, %p38
      %p40 = scmp.ne.s32.totalorder %s29, %s30
      %p41 = scmp.eq.s32.totalorder %s21, 0
      %p42 = por %p40, %p41
      %p43 = scmp.ne.s32.totalorder %s29, %s30
      %p44 = scmp.eq.s32.totalorder %s22, 1
      %p45 = por %p43, %p44
      %p47 = scmp.ne.s32.totalorder %s30, %s46
      %p48 = scmp.eq.s32.totalorder %s22, 0
      %p49 = por %p47, %p48
      %s50 = ssub.s32 %s16, %s23
      %p51 = scmp.eq.s32.totalorder %s50, 0
      %s53 = sadd.s32 %s52, 1
      %s54 = scalar_select %p51, %s52, %s53
      %p57 = pneg %p51
      %p58 = scmp.eq.s32.totalorder %s16, 1
      %p59 = por %p57, %p58
      %p60 = scmp.ne.s32.totalorder %s52, %s55
      %p61 = scmp.eq.s32.totalorder %s16, 0
      %p62 = por %p60, %p61
      %p63 = scmp.ne.s32.totalorder %s52, %s55
      %p64 = scmp.eq.s32.totalorder %s21, 1
      %p65 = por %p63, %p64
      %p66 = scmp.ne.s32.totalorder %s55, %s56
      %p67 = scmp.eq.s32.totalorder %s21, 0
      %p68 = por %p66, %p67
      %p69 = scmp.ne.s32.totalorder %s55, %s56
      %p70 = scmp.eq.s32.totalorder %s22, 1
      %p71 = por %p69, %p70
      %p73 = scmp.ne.s32.totalorder %s56, %s72
      %p74 = scmp.eq.s32.totalorder %s22, 0
      %p75 = por %p73, %p74
      %s77 = sadd.s32 %s76, 1
      %p80 = scmp.eq.s32.totalorder %s16, 1
      %p81 = scmp.ne.s32.totalorder %s76, %s78
      %p82 = scmp.eq.s32.totalorder %s16, 0
      %p83 = por %p81, %p82
      %p84 = scmp.ne.s32.totalorder %s76, %s78
      %p85 = scmp.eq.s32.totalorder %s21, 1
      %p86 = por %p84, %p85
      %p87 = scmp.ne.s32.totalorder %s78, %s79
      %p88 = scmp.eq.s32.totalorder %s21, 0
      %p89 = por %p87, %p88
      %p90 = scmp.ne.s32.totalorder %s78, %s79
      %p91 = scmp.eq.s32.totalorder %s22, 1
      %p92 = por %p90, %p91
      %p94 = scmp.ne.s32.totalorder %s79, %s93
      %p95 = scmp.eq.s32.totalorder %s22, 0
      %p96 = por %p94, %p95
      %s98 = sadd.s32 %s97, 1
      %p101 = scmp.eq.s32.totalorder %s16, 1
      %p102 = scmp.ne.s32.totalorder %s97, %s99
      %p103 = scmp.eq.s32.totalorder %s16, 0
      %p104 = por %p102, %p103
      %p105 = scmp.ne.s32.totalorder %s97, %s99
      %p106 = scmp.eq.s32.totalorder %s21, 1
      %p107 = por %p105, %p106
      %p108 = scmp.ne.s32.totalorder %s99, %s100
      %p109 = scmp.eq.s32.totalorder %s21, 0
      %p110 = por %p108, %p109
      %p111 = scmp.ne.s32.totalorder %s99, %s100
      %p112 = scmp.eq.s32.totalorder %s22, 1
      %p113 = por %p111, %p112
      %p115 = scmp.ne.s32.totalorder %s100, %s114
      %p116 = scmp.eq.s32.totalorder %s22, 0
      %p117 = por %p115, %p116
      %s119 = sadd.s32 %s118, 1
      %p122 = scmp.eq.s32.totalorder %s16, 1
      %p123 = scmp.ne.s32.totalorder %s118, %s120
      %p124 = scmp.eq.s32.totalorder %s16, 0
      %p125 = por %p123, %p124
      %p126 = scmp.ne.s32.totalorder %s118, %s120
      %p127 = scmp.eq.s32.totalorder %s21, 1
      %p128 = por %p126, %p127
      %p129 = scmp.ne.s32.totalorder %s120, %s121
      %p130 = scmp.eq.s32.totalorder %s21, 0
      %p131 = por %p129, %p130
      %p132 = scmp.ne.s32.totalorder %s120, %s121
      %p133 = scmp.eq.s32.totalorder %s22, 1
      %p134 = por %p132, %p133
      %p136 = scmp.ne.s32.totalorder %s121, %s135
      %p137 = scmp.eq.s32.totalorder %s22, 0
      %p138 = por %p136, %p137
      %s140 = sadd.s32 %s139, 1
      %p143 = scmp.eq.s32.totalorder %s16, 1
      %p144 = scmp.ne.s32.totalorder %s139, %s141
      %p145 = scmp.eq.s32.totalorder %s16, 0
      %p146 = por %p144, %p145
      %p147 = scmp.ne.s32.totalorder %s139, %s141
      %p148 = scmp.eq.s32.totalorder %s21, 1
      %p149 = por %p147, %p148
      %p150 = scmp.ne.s32.totalorder %s141, %s142
      %p151 = scmp.eq.s32.totalorder %s21, 0
      %p152 = por %p150, %p151
      %p153 = scmp.ne.s32.totalorder %s141, %s142
      %p154 = scmp.eq.s32.totalorder %s22, 1
      %p155 = por %p153, %p154
      %p157 = scmp.ne.s32.totalorder %s142, %s156
      %p158 = scmp.eq.s32.totalorder %s22, 0
      %p159 = por %p157, %p158
      %s161 = sadd.s32 %s160, 1
      %p164 = scmp.eq.s32.totalorder %s16, 1
      %p165 = scmp.ne.s32.totalorder %s160, %s162
      %p166 = scmp.eq.s32.totalorder %s16, 0
      %p167 = por %p165, %p166
      %p168 = scmp.ne.s32.totalorder %s160, %s162
      %p169 = scmp.eq.s32.totalorder %s21, 1
      %p170 = por %p168, %p169
      %p171 = scmp.ne.s32.totalorder %s162, %s163
      %p172 = scmp.eq.s32.totalorder %s21, 0
      %p173 = por %p171, %p172
      %p174 = scmp.ne.s32.totalorder %s162, %s163
      %p175 = scmp.eq.s32.totalorder %s22, 1
      %p176 = por %p174, %p175
      %p178 = scmp.ne.s32.totalorder %s163, %s177
      %p179 = scmp.eq.s32.totalorder %s22, 0
      %p180 = por %p178, %p179
      %s181 = ssub.s32 %s16, %s23
      %p182 = scmp.eq.s32.totalorder %s181, 0
      %s184 = sadd.s32 %s183, 1
      %s185 = scalar_select %p182, %s183, %s184
      %p188 = pneg %p182
      %p189 = scmp.eq.s32.totalorder %s16, 1
      %p190 = por %p188, %p189
      %p191 = scmp.ne.s32.totalorder %s183, %s186
      %p192 = scmp.eq.s32.totalorder %s16, 0
      %p193 = por %p191, %p192
      %p194 = scmp.ne.s32.totalorder %s183, %s186
      %p195 = scmp.eq.s32.totalorder %s21, 1
      %p196 = por %p194, %p195
      %p197 = scmp.ne.s32.totalorder %s186, %s187
      %p198 = scmp.eq.s32.totalorder %s21, 0
      %p199 = por %p197, %p198
      %p200 = scmp.ne.s32.totalorder %s186, %s187
      %p201 = scmp.eq.s32.totalorder %s22, 1
      %p202 = por %p200, %p201
      %p204 = scmp.ne.s32.totalorder %s187, %s203
      %p205 = scmp.eq.s32.totalorder %s22, 0
      %p206 = por %p204, %p205
      %p207 = scmp.le.s32.totalorder 1, %s16
      %p208 = scmp.lt.s32.totalorder %s16, 3
      %p209 = pnand %p207, %p208
      %p210 = pneg %p209
      // Predicated region
      $region9: #{tpu_custom_call.1} parent=5 // pred_check
        _
      $region10: #{tpu_custom_call.1} parent=5 // pred_check_branch
        %212 = sbr.rel (%p209) target = $region12
      $region11: #{tpu_custom_call.1} parent=5 // pred_region
        %s213 = ssub.s32 %s16, 1
        // Predicated region
        $region13: #{tpu_custom_call.1} parent=11 // pred_check
          %p214 = pneg %p89
        $region14: #{tpu_custom_call.1} parent=11 // pred_check_branch
          %216 = sbr.rel (%p214) target = $region16
        $region15: #{tpu_custom_call.1} parent=11 // pred_region
          _
        $region16: #{tpu_custom_call.1} parent=11 // pred_fallthru
          _
        // Predicated region
        $region17: #{tpu_custom_call.1} parent=11 // pred_check
          %p217 = pneg %p110
        $region18: #{tpu_custom_call.1} parent=11 // pred_check_branch
          %219 = sbr.rel (%p217) target = $region20
        $region19: #{tpu_custom_call.1} parent=11 // pred_region
          _
        $region20: #{tpu_custom_call.1} parent=11 // pred_fallthru
          _
        // Predicated region
        $region21: #{tpu_custom_call.1} parent=11 // pred_check
          %p220 = pneg %p131
        $region22: #{tpu_custom_call.1} parent=11 // pred_check_branch
          %222 = sbr.rel (%p220) target = $region24
        $region23: #{tpu_custom_call.1} parent=11 // pred_region
          _
        $region24: #{tpu_custom_call.1} parent=11 // pred_fallthru
          _
        // Predicated region
        $region25: #{tpu_custom_call.1} parent=11 // pred_check
          %p223 = pneg %p152
        $region26: #{tpu_custom_call.1} parent=11 // pred_check_branch
          %225 = sbr.rel (%p223) target = $region28
        $region27: #{tpu_custom_call.1} parent=11 // pred_region
          _
        $region28: #{tpu_custom_call.1} parent=11 // pred_fallthru
          _
        // Predicated region
        $region29: #{tpu_custom_call.1} parent=11 // pred_check
          %p226 = pneg %p173
        $region30: #{tpu_custom_call.1} parent=11 // pred_check_branch
          %228 = sbr.rel (%p226) target = $region32
        $region31: #{tpu_custom_call.1} parent=11 // pred_region
          _
        $region32: #{tpu_custom_call.1} parent=11 // pred_fallthru
          _
      $region12: #{tpu_custom_call.1} parent=5 // pred_fallthru
        _
      %p229 = scmp.lt.s32.totalorder %s16, 2
      // Predicated region
      $region33: #{tpu_custom_call.1} parent=5 // pred_check
        %p230 = pneg %p229
      $region34: #{tpu_custom_call.1} parent=5 // pred_check_branch
        %232 = sbr.rel (%p230) target = $region36
      $region35: #{tpu_custom_call.1} parent=5 // pred_region
        // Predicated region
        $region37: #{tpu_custom_call.1} parent=35 // pred_check
          %p233 = pneg %p36
        $region38: #{tpu_custom_call.1} parent=35 // pred_check_branch
          %235 = sbr.rel (%p233) target = $region40
        $region39: #{tpu_custom_call.1} parent=35 // pred_region
          %s236 = sand.u32 %s26, 1
          %s237 = sand.u32 %s26, 1
          %s238 = smul.addr %s237, 128
          %s239 = scalar_lea.vmem [#allocation2], %s238
          %s240 = smul.u32 8, %s16
          %s241 = smul.addr %s240, 8
          %s242 = scalar_lea.vmem %s0, %s241
          // Predicated region
          $region41: #{tpu_custom_call.1} parent=39 // pred_check
            _
          $region42: #{tpu_custom_call.1} parent=39 // pred_check_branch
            %244 = sbr.rel (0) target = $region44
          $region43: #{tpu_custom_call.1} parent=39 // pred_region
            // Predicated region
            $region45: #{tpu_custom_call.1} parent=43 // pred_check
              _
            $region46: #{tpu_custom_call.1} parent=43 // pred_check_branch
              %246 = sbr.rel (0) target = $region48
            $region47: #{tpu_custom_call.1} parent=43 // pred_region
              loop: start=0, step=1, limit=1
              $region49: #{tpu_custom_call.1} parent=47 // loop_pre_header
                _
              $region50: #{tpu_custom_call.1} parent=47 // loop_header
                %s248 = sphi 0, %s252
                %p249 = scmp.ge.s32.totalorder %s248, 1
                %s253 = sphi %s242, %s242
                %s254 = sphi %s239, %s239
              $region51: #{tpu_custom_call.1} parent=47 // loop_header_branch
                %251 = sbr.rel (%p249) target = $region55
              $region52: #{tpu_custom_call.1} parent=47 // loop_body
                %v255 = vld [vmem:[%s253] sm:$0xff]
                %256 = vst [vmem:[%s254] sm:$0xff] %v255
                %v257 = vld [vmem:[%s253 + $0x8] sm:$0xff]
                %258 = vst [vmem:[%s254 + $0x8] sm:$0xff] %v257
                %v259 = vld [vmem:[%s253 + $0x10] sm:$0xff]
                %260 = vst [vmem:[%s254 + $0x10] sm:$0xff] %v259
                %v261 = vld [vmem:[%s253 + $0x18] sm:$0xff]
                %262 = vst [vmem:[%s254 + $0x18] sm:$0xff] %v261
                %v263 = vld [vmem:[%s253 + $0x20] sm:$0xff]
                %264 = vst [vmem:[%s254 + $0x20] sm:$0xff] %v263
                %v265 = vld [vmem:[%s253 + $0x28] sm:$0xff]
                %266 = vst [vmem:[%s254 + $0x28] sm:$0xff] %v265
                %v267 = vld [vmem:[%s253 + $0x30] sm:$0xff]
                %268 = vst [vmem:[%s254 + $0x30] sm:$0xff] %v267
                %v269 = vld [vmem:[%s253 + $0x38] sm:$0xff]
                %270 = vst [vmem:[%s254 + $0x38] sm:$0xff] %v269
                %v271 = vld [vmem:[%s253 + $0x80] sm:$0xff]
                %272 = vst [vmem:[%s254 + $0x40] sm:$0xff] %v271
                %v273 = vld [vmem:[%s253 + $0x88] sm:$0xff]
                %274 = vst [vmem:[%s254 + $0x48] sm:$0xff] %v273
                %v275 = vld [vmem:[%s253 + $0x90] sm:$0xff]
                %276 = vst [vmem:[%s254 + $0x50] sm:$0xff] %v275
                %v277 = vld [vmem:[%s253 + $0x98] sm:$0xff]
                %278 = vst [vmem:[%s254 + $0x58] sm:$0xff] %v277
                %v279 = vld [vmem:[%s253 + $0xa0] sm:$0xff]
                %280 = vst [vmem:[%s254 + $0x60] sm:$0xff] %v279
                %v281 = vld [vmem:[%s253 + $0xa8] sm:$0xff]
                %282 = vst [vmem:[%s254 + $0x68] sm:$0xff] %v281
                %v283 = vld [vmem:[%s253 + $0xb0] sm:$0xff]
                %284 = vst [vmem:[%s254 + $0x70] sm:$0xff] %v283
                %v285 = vld [vmem:[%s253 + $0xb8] sm:$0xff]
                %286 = vst [vmem:[%s254 + $0x78] sm:$0xff] %v285
              $region53: #{tpu_custom_call.1} parent=47 // loop_footer
                %s252 = sadd.s32 1, %s248
              $region54: #{tpu_custom_call.1} parent=47 // loop_footer_branch
                %247 = sbr.rel target = $region50
              $region55: #{tpu_custom_call.1} parent=47 // loop_exit
                _
            $region48: #{tpu_custom_call.1} parent=43 // pred_fallthru
              _
            // Predicated region
            $region56: #{tpu_custom_call.1} parent=43 // pred_check
              _
            $region57: #{tpu_custom_call.1} parent=43 // pred_check_branch
              %288 = sbr.rel target = $region59
            $region58: #{tpu_custom_call.1} parent=43 // pred_region
              _
            $region59: #{tpu_custom_call.1} parent=43 // pred_fallthru
              _
          $region44: #{tpu_custom_call.1} parent=39 // pred_fallthru
            _
          %289 = vnop
        $region40: #{tpu_custom_call.1} parent=35 // pred_fallthru
          _
        // Predicated region
        $region60: #{tpu_custom_call.1} parent=35 // pred_check
          %p290 = pneg %p62
        $region61: #{tpu_custom_call.1} parent=35 // pred_check_branch
          %292 = sbr.rel (%p290) target = $region63
        $region62: #{tpu_custom_call.1} parent=35 // pred_region
          %s293 = smul.u32 8, %s16
          %p294 = scmp.lt.s32.totalorder %s293, 15
          %s295 = scalar_select %p294, %s293, 15
          %s296 = scalar_lea.vmem %s1, %s295
          %s297 = smul.u32 8, %s16
        $region63: #{tpu_custom_call.1} parent=35 // pred_fallthru
          _
      $region36: #{tpu_custom_call.1} parent=5 // pred_fallthru
        _
      %p298 = scmp.le.s32.totalorder 1, %s16
      %p299 = scmp.lt.s32.totalorder %s16, 3
      %p300 = pnand %p298, %p299
      %p301 = pneg %p300
      // Predicated region
      $region64: #{tpu_custom_call.1} parent=5 // pred_check
        _
      $region65: #{tpu_custom_call.1} parent=5 // pred_check_branch
        %303 = sbr.rel (%p300) target = $region67
      $region66: #{tpu_custom_call.1} parent=5 // pred_region
        %s304 = ssub.s32 %s16, 1
        %s305 = sand.u32 %s29, 1
        %s306 = sand.u32 %s29, 1
        %s307 = smul.addr %s306, 128
        %s308 = scalar_lea.vmem [#allocation2], %s307
        // Predicated region
        $region68: #{tpu_custom_call.1} parent=66 // pred_check
          %p309 = pneg %p42
        $region69: #{tpu_custom_call.1} parent=66 // pred_check_branch
          %311 = sbr.rel (%p309) target = $region71
        $region70: #{tpu_custom_call.1} parent=66 // pred_region
          _
        $region71: #{tpu_custom_call.1} parent=66 // pred_fallthru
          _
        %s312 = sand.u32 %s29, 1
        %s313 = sand.u32 %s29, 1
        %s314 = smul.addr %s313, 128
        %s315 = scalar_lea.vmem [#allocation2], %s314
        %p316 = pneg %p42
        %p317 = pneg %p39
        %s318 = smul.u32 8, %s21
        %p319 = scmp.lt.s32.totalorder %s318, 15
        %s320 = scalar_select %p319, %s318, 15
        %s321 = scalar_lea.vmem %s1, %s320
        %p322 = pneg %p68
        %p323 = pneg %p65
        %p324 = pneg %p89
        %p325 = pneg %p86
        %p326 = pneg %p110
        %p327 = pneg %p107
        %p328 = pneg %p131
        %p329 = pneg %p128
        %p330 = pneg %p152
        %p331 = pneg %p149
        %p332 = pneg %p173
        %p333 = pneg %p170
        %p334 = pneg %p199
        %p335 = pneg %p196
        %s336 = sand.u32 %s186, 1
        %s337 = scalar_lea.sflag [#allocation4], %s336
        %s338 = sand.u32 %s186, 1
        %s339 = smul.addr %s338, 128
        %s340 = scalar_lea.vmem [#allocation3], %s339
        %s341 = smul.u32 8, %s21
        %s342 = smul.u32 8, %s21
        %p343 = scmp.lt.s32.totalorder %s342, 15
        %s344 = scalar_select %p343, %s342, 15
        %s345 = scalar_lea.vmem %s1, %s344
        %s346 = smul.u32 8, %s21
        %s347 = smul.u32 8, %s21
        %v348 = vld [vmem:[%s308] sm:$0xff]
        %v349 = vld [vmem:[%s308 + $0x8] sm:$0xff]
        %v350 = vld [vmem:[%s308 + $0x10] sm:$0xff]
        %v351 = vld [vmem:[%s308 + $0x18] sm:$0xff]
        %v352 = vld [vmem:[%s308 + $0x20] sm:$0xff]
        %v353 = vld [vmem:[%s308 + $0x28] sm:$0xff]
        %v354 = vld [vmem:[%s308 + $0x30] sm:$0xff]
        %v355 = vld [vmem:[%s308 + $0x38] sm:$0xff]
        %v356 = vld [vmem:[%s308 + $0x40] sm:$0xff]
        %v357 = vld [vmem:[%s308 + $0x48] sm:$0xff]
        %v358 = vld [vmem:[%s308 + $0x50] sm:$0xff]
        %v359 = vld [vmem:[%s308 + $0x58] sm:$0xff]
        %v360 = vld [vmem:[%s308 + $0x60] sm:$0xff]
        %v361 = vld [vmem:[%s308 + $0x68] sm:$0xff]
        %v362 = vld [vmem:[%s308 + $0x70] sm:$0xff]
        %v363 = vld [vmem:[%s308 + $0x78] sm:$0xff]
        %v364 = vld [vmem:[%s345] sm:$0xff]
        %v365 = vld [vmem:[%s2] sm:$0xff]
        %v366 = vld [vmem:[%s2 + $0x8] sm:$0xff]
        %v367 = vld [vmem:[%s2 + $0x10] sm:$0xff]
        %v368 = vld [vmem:[%s2 + $0x18] sm:$0xff]
        %v369 = vld [vmem:[%s2 + $0x20] sm:$0xff]
        %v370 = vld [vmem:[%s2 + $0x28] sm:$0xff]
        %v371 = vld [vmem:[%s2 + $0x30] sm:$0xff]
        %v372 = vld [vmem:[%s2 + $0x38] sm:$0xff]
        %v373 = vld [vmem:[%s2 + $0x40] sm:$0xff]
        %v374 = vld [vmem:[%s2 + $0x48] sm:$0xff]
        %v375 = vld [vmem:[%s2 + $0x50] sm:$0xff]
        %v376 = vld [vmem:[%s2 + $0x58] sm:$0xff]
        %v377 = vld [vmem:[%s2 + $0x60] sm:$0xff]
        %v378 = vld [vmem:[%s2 + $0x68] sm:$0xff]
        %v379 = vld [vmem:[%s2 + $0x70] sm:$0xff]
        %v380 = vld [vmem:[%s2 + $0x78] sm:$0xff]
        %v381 = vld [vmem:[%s5] sm:$0xff]
        %v382 = vld [vmem:[%s5 + $0x8] sm:$0xff]
        %v383 = vld [vmem:[%s5 + $0x10] sm:$0xff]
        %v384 = vld [vmem:[%s5 + $0x18] sm:$0xff]
        %v385 = vld [vmem:[%s5 + $0x20] sm:$0xff]
        %v386 = vld [vmem:[%s5 + $0x28] sm:$0xff]
        %v387 = vld [vmem:[%s5 + $0x30] sm:$0xff]
        %v388 = vld [vmem:[%s5 + $0x38] sm:$0xff]
        %v389 = vld [vmem:[%s5 + $0x40] sm:$0xff]
        %v390 = vld [vmem:[%s5 + $0x48] sm:$0xff]
        %v391 = vld [vmem:[%s5 + $0x50] sm:$0xff]
        %v392 = vld [vmem:[%s5 + $0x58] sm:$0xff]
        %v393 = vld [vmem:[%s5 + $0x60] sm:$0xff]
        %v394 = vld [vmem:[%s5 + $0x68] sm:$0xff]
        %v395 = vld [vmem:[%s5 + $0x70] sm:$0xff]
        %v396 = vld [vmem:[%s5 + $0x78] sm:$0xff]
        %398 = vset.pattern.permute.xlu0 0
        %399 = vperm.xlu0 %398, %v381
        %v400 = vpop.permute.xlu0 %399
        %403 = vset.pattern.permute.xlu0 0
        %404 = vperm.xlu0 %403, %v382
        %v405 = vpop.permute.xlu0 %404
        %408 = vset.pattern.permute.xlu0 0
        %409 = vperm.xlu0 %408, %v383
        %v410 = vpop.permute.xlu0 %409
        %413 = vset.pattern.permute.xlu0 0
        %414 = vperm.xlu0 %413, %v384
        %v415 = vpop.permute.xlu0 %414
        %418 = vset.pattern.permute.xlu0 0
        %419 = vperm.xlu0 %418, %v385
        %v420 = vpop.permute.xlu0 %419
        %423 = vset.pattern.permute.xlu0 0
        %424 = vperm.xlu0 %423, %v386
        %v425 = vpop.permute.xlu0 %424
        %428 = vset.pattern.permute.xlu0 0
        %429 = vperm.xlu0 %428, %v387
        %v430 = vpop.permute.xlu0 %429
        %433 = vset.pattern.permute.xlu0 0
        %434 = vperm.xlu0 %433, %v388
        %v435 = vpop.permute.xlu0 %434
        %438 = vset.pattern.permute.xlu0 0
        %439 = vperm.xlu0 %438, %v389
        %v440 = vpop.permute.xlu0 %439
        %443 = vset.pattern.permute.xlu0 0
        %444 = vperm.xlu0 %443, %v390
        %v445 = vpop.permute.xlu0 %444
        %448 = vset.pattern.permute.xlu0 0
        %449 = vperm.xlu0 %448, %v391
        %v450 = vpop.permute.xlu0 %449
        %453 = vset.pattern.permute.xlu0 0
        %454 = vperm.xlu0 %453, %v392
        %v455 = vpop.permute.xlu0 %454
        %458 = vset.pattern.permute.xlu0 0
        %459 = vperm.xlu0 %458, %v393
        %v460 = vpop.permute.xlu0 %459
        %463 = vset.pattern.permute.xlu0 0
        %464 = vperm.xlu0 %463, %v394
        %v465 = vpop.permute.xlu0 %464
        %468 = vset.pattern.permute.xlu0 0
        %469 = vperm.xlu0 %468, %v395
        %v470 = vpop.permute.xlu0 %469
        %473 = vset.pattern.permute.xlu0 0
        %474 = vperm.xlu0 %473, %v396
        %v475 = vpop.permute.xlu0 %474
        %vm477 = vcmask 130048
        %v479 = vsel %vm477, %v365, 0
        %v482 = vsel %vm477, %v366, 0
        %v485 = vsel %vm477, %v367, 0
        %v488 = vsel %vm477, %v368, 0
        %v491 = vsel %vm477, %v369, 0
        %v494 = vsel %vm477, %v370, 0
        %v497 = vsel %vm477, %v371, 0
        %v500 = vsel %vm477, %v372, 0
        %v503 = vsel %vm477, %v373, 0
        %v506 = vsel %vm477, %v374, 0
        %v509 = vsel %vm477, %v375, 0
        %v512 = vsel %vm477, %v376, 0
        %v515 = vsel %vm477, %v377, 0
        %v518 = vsel %vm477, %v378, 0
        %v521 = vsel %vm477, %v379, 0
        %v524 = vsel %vm477, %v380, 0
        %526 = vmatpush.msra.mxu0 0.0
        %527 = vmatpush.msra.mxu0 0.0
        %528 = vmatpush.msra.mxu0 0.0
        %529 = vmatpush.msra.mxu0 0.0
        %530 = vmatpush.msra.mxu0 0.0
        %531 = vmatpush.msra.mxu0 0.0
        %532 = vmatpush.msra.mxu0 0.0
        %533 = vmatpush.msra.mxu0 0.0
        %534 = vmatpush.msra.mxu0 0.0
        %535 = vmatpush.msra.mxu0 0.0
        %536 = vmatpush.msra.mxu0 0.0
        %537 = vmatpush.msra.mxu0 0.0
        %538 = vmatpush.msra.mxu0 0.0
        %539 = vmatpush.msra.mxu0 0.0
        %540 = vmatpush.msra.mxu0 %v356
        %541 = vmatpush.msra.mxu0 %v348
        %542 = vmatmul.f32.gmra.mxu0 %v479
        %v543 = vpop.f32.mrf.mxu0
        %v544 = vadd.f32 %v400, %v543
        %545 = vmatmul.f32.gmra.mxu0 %v482
        %v546 = vpop.f32.mrf.mxu0
        %v547 = vadd.f32 %v405, %v546
        %548 = vmatmul.f32.gmra.mxu0 %v485
        %v549 = vpop.f32.mrf.mxu0
        %v550 = vadd.f32 %v410, %v549
        %551 = vmatmul.f32.gmra.mxu0 %v488
        %v552 = vpop.f32.mrf.mxu0
        %v553 = vadd.f32 %v415, %v552
        %554 = vmatmul.f32.gmra.mxu0 %v491
        %v555 = vpop.f32.mrf.mxu0
        %v556 = vadd.f32 %v420, %v555
        %557 = vmatmul.f32.gmra.mxu0 %v494
        %v558 = vpop.f32.mrf.mxu0
        %v559 = vadd.f32 %v425, %v558
        %560 = vmatmul.f32.gmra.mxu0 %v497
        %v561 = vpop.f32.mrf.mxu0
        %v562 = vadd.f32 %v430, %v561
        %563 = vmatmul.f32.gmra.mxu0 %v500
        %v564 = vpop.f32.mrf.mxu0
        %v565 = vadd.f32 %v435, %v564
        %566 = vmatmul.f32.gmra.mxu0 %v503
        %v567 = vpop.f32.mrf.mxu0
        %v568 = vadd.f32 %v440, %v567
        %569 = vmatmul.f32.gmra.mxu0 %v506
        %v570 = vpop.f32.mrf.mxu0
        %v571 = vadd.f32 %v445, %v570
        %572 = vmatmul.f32.gmra.mxu0 %v509
        %v573 = vpop.f32.mrf.mxu0
        %v574 = vadd.f32 %v450, %v573
        %575 = vmatmul.f32.gmra.mxu0 %v512
        %v576 = vpop.f32.mrf.mxu0
        %v577 = vadd.f32 %v455, %v576
        %578 = vmatmul.f32.gmra.mxu0 %v515
        %v579 = vpop.f32.mrf.mxu0
        %v580 = vadd.f32 %v460, %v579
        %581 = vmatmul.f32.gmra.mxu0 %v518
        %v582 = vpop.f32.mrf.mxu0
        %v583 = vadd.f32 %v465, %v582
        %584 = vmatmul.f32.gmra.mxu0 %v521
        %v585 = vpop.f32.mrf.mxu0
        %v586 = vadd.f32 %v470, %v585
        %587 = vmatmul.f32.gmra.mxu0 %v524
        %v588 = vpop.f32.mrf.mxu0
        %v589 = vadd.f32 %v475, %v588
        %590 = vdwg.mxu0
        %591 = vmatpush.msra.mxu0 0.0
        %592 = vmatpush.msra.mxu0 0.0
        %593 = vmatpush.msra.mxu0 0.0
        %594 = vmatpush.msra.mxu0 0.0
        %595 = vmatpush.msra.mxu0 0.0
        %596 = vmatpush.msra.mxu0 0.0
        %597 = vmatpush.msra.mxu0 0.0
        %598 = vmatpush.msra.mxu0 0.0
        %599 = vmatpush.msra.mxu0 0.0
        %600 = vmatpush.msra.mxu0 0.0
        %601 = vmatpush.msra.mxu0 0.0
        %602 = vmatpush.msra.mxu0 0.0
        %603 = vmatpush.msra.mxu0 0.0
        %604 = vmatpush.msra.mxu0 0.0
        %605 = vmatpush.msra.mxu0 %v357
        %606 = vmatpush.msra.mxu0 %v349
        %607 = vmatmul.f32.gmra.mxu0 %v479
        %v608 = vpop.f32.mrf.mxu0
        %v609 = vadd.f32 %v400, %v608
        %610 = vmatmul.f32.gmra.mxu0 %v482
        %v611 = vpop.f32.mrf.mxu0
        %v612 = vadd.f32 %v405, %v611
        %613 = vmatmul.f32.gmra.mxu0 %v485
        %v614 = vpop.f32.mrf.mxu0
        %v615 = vadd.f32 %v410, %v614
        %616 = vmatmul.f32.gmra.mxu0 %v488
        %v617 = vpop.f32.mrf.mxu0
        %v618 = vadd.f32 %v415, %v617
        %619 = vmatmul.f32.gmra.mxu0 %v491
        %v620 = vpop.f32.mrf.mxu0
        %v621 = vadd.f32 %v420, %v620
        %622 = vmatmul.f32.gmra.mxu0 %v494
        %v623 = vpop.f32.mrf.mxu0
        %v624 = vadd.f32 %v425, %v623
        %625 = vmatmul.f32.gmra.mxu0 %v497
        %v626 = vpop.f32.mrf.mxu0
        %v627 = vadd.f32 %v430, %v626
        %628 = vmatmul.f32.gmra.mxu0 %v500
        %v629 = vpop.f32.mrf.mxu0
        %v630 = vadd.f32 %v435, %v629
        %631 = vmatmul.f32.gmra.mxu0 %v503
        %v632 = vpop.f32.mrf.mxu0
        %v633 = vadd.f32 %v440, %v632
        %634 = vmatmul.f32.gmra.mxu0 %v506
        %v635 = vpop.f32.mrf.mxu0
        %v636 = vadd.f32 %v445, %v635
        %637 = vmatmul.f32.gmra.mxu0 %v509
        %v638 = vpop.f32.mrf.mxu0
        %v639 = vadd.f32 %v450, %v638
        %640 = vmatmul.f32.gmra.mxu0 %v512
        %v641 = vpop.f32.mrf.mxu0
        %v642 = vadd.f32 %v455, %v641
        %643 = vmatmul.f32.gmra.mxu0 %v515
        %v644 = vpop.f32.mrf.mxu0
        %v645 = vadd.f32 %v460, %v644
        %646 = vmatmul.f32.gmra.mxu0 %v518
        %v647 = vpop.f32.mrf.mxu0
        %v648 = vadd.f32 %v465, %v647
        %649 = vmatmul.f32.gmra.mxu0 %v521
        %v650 = vpop.f32.mrf.mxu0
        %v651 = vadd.f32 %v470, %v650
        %652 = vmatmul.f32.gmra.mxu0 %v524
        %v653 = vpop.f32.mrf.mxu0
        %v654 = vadd.f32 %v475, %v653
        %655 = vdwg.mxu0
        %656 = vmatpush.msra.mxu0 0.0
        %657 = vmatpush.msra.mxu0 0.0
        %658 = vmatpush.msra.mxu0 0.0
        %659 = vmatpush.msra.mxu0 0.0
        %660 = vmatpush.msra.mxu0 0.0
        %661 = vmatpush.msra.mxu0 0.0
        %662 = vmatpush.msra.mxu0 0.0
        %663 = vmatpush.msra.mxu0 0.0
        %664 = vmatpush.msra.mxu0 0.0
        %665 = vmatpush.msra.mxu0 0.0
        %666 = vmatpush.msra.mxu0 0.0
        %667 = vmatpush.msra.mxu0 0.0
        %668 = vmatpush.msra.mxu0 0.0
        %669 = vmatpush.msra.mxu0 0.0
        %670 = vmatpush.msra.mxu0 %v358
        %671 = vmatpush.msra.mxu0 %v350
        %672 = vmatmul.f32.gmra.mxu0 %v479
        %v673 = vpop.f32.mrf.mxu0
        %v674 = vadd.f32 %v400, %v673
        %675 = vmatmul.f32.gmra.mxu0 %v482
        %v676 = vpop.f32.mrf.mxu0
        %v677 = vadd.f32 %v405, %v676
        %678 = vmatmul.f32.gmra.mxu0 %v485
        %v679 = vpop.f32.mrf.mxu0
        %v680 = vadd.f32 %v410, %v679
        %681 = vmatmul.f32.gmra.mxu0 %v488
        %v682 = vpop.f32.mrf.mxu0
        %v683 = vadd.f32 %v415, %v682
        %684 = vmatmul.f32.gmra.mxu0 %v491
        %v685 = vpop.f32.mrf.mxu0
        %v686 = vadd.f32 %v420, %v685
        %687 = vmatmul.f32.gmra.mxu0 %v494
        %v688 = vpop.f32.mrf.mxu0
        %v689 = vadd.f32 %v425, %v688
        %690 = vmatmul.f32.gmra.mxu0 %v497
        %v691 = vpop.f32.mrf.mxu0
        %v692 = vadd.f32 %v430, %v691
        %693 = vmatmul.f32.gmra.mxu0 %v500
        %v694 = vpop.f32.mrf.mxu0
        %v695 = vadd.f32 %v435, %v694
        %696 = vmatmul.f32.gmra.mxu0 %v503
        %v697 = vpop.f32.mrf.mxu0
        %v698 = vadd.f32 %v440, %v697
        %699 = vmatmul.f32.gmra.mxu0 %v506
        %v700 = vpop.f32.mrf.mxu0
        %v701 = vadd.f32 %v445, %v700
        %702 = vmatmul.f32.gmra.mxu0 %v509
        %v703 = vpop.f32.mrf.mxu0
        %v704 = vadd.f32 %v450, %v703
        %705 = vmatmul.f32.gmra.mxu0 %v512
        %v706 = vpop.f32.mrf.mxu0
        %v707 = vadd.f32 %v455, %v706
        %708 = vmatmul.f32.gmra.mxu0 %v515
        %v709 = vpop.f32.mrf.mxu0
        %v710 = vadd.f32 %v460, %v709
        %711 = vmatmul.f32.gmra.mxu0 %v518
        %v712 = vpop.f32.mrf.mxu0
        %v713 = vadd.f32 %v465, %v712
        %714 = vmatmul.f32.gmra.mxu0 %v521
        %v715 = vpop.f32.mrf.mxu0
        %v716 = vadd.f32 %v470, %v715
        %717 = vmatmul.f32.gmra.mxu0 %v524
        %v718 = vpop.f32.mrf.mxu0
        %v719 = vadd.f32 %v475, %v718
        %720 = vdwg.mxu0
        %721 = vmatpush.msra.mxu0 0.0
        %722 = vmatpush.msra.mxu0 0.0
        %723 = vmatpush.msra.mxu0 0.0
        %724 = vmatpush.msra.mxu0 0.0
        %725 = vmatpush.msra.mxu0 0.0
        %726 = vmatpush.msra.mxu0 0.0
        %727 = vmatpush.msra.mxu0 0.0
        %728 = vmatpush.msra.mxu0 0.0
        %729 = vmatpush.msra.mxu0 0.0
        %730 = vmatpush.msra.mxu0 0.0
        %731 = vmatpush.msra.mxu0 0.0
        %732 = vmatpush.msra.mxu0 0.0
        %733 = vmatpush.msra.mxu0 0.0
        %734 = vmatpush.msra.mxu0 0.0
        %735 = vmatpush.msra.mxu0 %v359
        %736 = vmatpush.msra.mxu0 %v351
        %737 = vmatmul.f32.gmra.mxu0 %v479
        %v738 = vpop.f32.mrf.mxu0
        %v739 = vadd.f32 %v400, %v738
        %740 = vmatmul.f32.gmra.mxu0 %v482
        %v741 = vpop.f32.mrf.mxu0
        %v742 = vadd.f32 %v405, %v741
        %743 = vmatmul.f32.gmra.mxu0 %v485
        %v744 = vpop.f32.mrf.mxu0
        %v745 = vadd.f32 %v410, %v744
        %746 = vmatmul.f32.gmra.mxu0 %v488
        %v747 = vpop.f32.mrf.mxu0
        %v748 = vadd.f32 %v415, %v747
        %749 = vmatmul.f32.gmra.mxu0 %v491
        %v750 = vpop.f32.mrf.mxu0
        %v751 = vadd.f32 %v420, %v750
        %752 = vmatmul.f32.gmra.mxu0 %v494
        %v753 = vpop.f32.mrf.mxu0
        %v754 = vadd.f32 %v425, %v753
        %755 = vmatmul.f32.gmra.mxu0 %v497
        %v756 = vpop.f32.mrf.mxu0
        %v757 = vadd.f32 %v430, %v756
        %758 = vmatmul.f32.gmra.mxu0 %v500
        %v759 = vpop.f32.mrf.mxu0
        %v760 = vadd.f32 %v435, %v759
        %761 = vmatmul.f32.gmra.mxu0 %v503
        %v762 = vpop.f32.mrf.mxu0
        %v763 = vadd.f32 %v440, %v762
        %764 = vmatmul.f32.gmra.mxu0 %v506
        %v765 = vpop.f32.mrf.mxu0
        %v766 = vadd.f32 %v445, %v765
        %767 = vmatmul.f32.gmra.mxu0 %v509
        %v768 = vpop.f32.mrf.mxu0
        %v769 = vadd.f32 %v450, %v768
        %770 = vmatmul.f32.gmra.mxu0 %v512
        %v771 = vpop.f32.mrf.mxu0
        %v772 = vadd.f32 %v455, %v771
        %773 = vmatmul.f32.gmra.mxu0 %v515
        %v774 = vpop.f32.mrf.mxu0
        %v775 = vadd.f32 %v460, %v774
        %776 = vmatmul.f32.gmra.mxu0 %v518
        %v777 = vpop.f32.mrf.mxu0
        %v778 = vadd.f32 %v465, %v777
        %779 = vmatmul.f32.gmra.mxu0 %v521
        %v780 = vpop.f32.mrf.mxu0
        %v781 = vadd.f32 %v470, %v780
        %782 = vmatmul.f32.gmra.mxu0 %v524
        %v783 = vpop.f32.mrf.mxu0
        %v784 = vadd.f32 %v475, %v783
        %785 = vdwg.mxu0
        %786 = vmatpush.msra.mxu0 0.0
        %787 = vmatpush.msra.mxu0 0.0
        %788 = vmatpush.msra.mxu0 0.0
        %789 = vmatpush.msra.mxu0 0.0
        %790 = vmatpush.msra.mxu0 0.0
        %791 = vmatpush.msra.mxu0 0.0
        %792 = vmatpush.msra.mxu0 0.0
        %793 = vmatpush.msra.mxu0 0.0
        %794 = vmatpush.msra.mxu0 0.0
        %795 = vmatpush.msra.mxu0 0.0
        %796 = vmatpush.msra.mxu0 0.0
        %797 = vmatpush.msra.mxu0 0.0
        %798 = vmatpush.msra.mxu0 0.0
        %799 = vmatpush.msra.mxu0 0.0
        %800 = vmatpush.msra.mxu0 %v360
        %801 = vmatpush.msra.mxu0 %v352
        %802 = vmatmul.f32.gmra.mxu0 %v479
        %v803 = vpop.f32.mrf.mxu0
        %v804 = vadd.f32 %v400, %v803
        %805 = vmatmul.f32.gmra.mxu0 %v482
        %v806 = vpop.f32.mrf.mxu0
        %v807 = vadd.f32 %v405, %v806
        %808 = vmatmul.f32.gmra.mxu0 %v485
        %v809 = vpop.f32.mrf.mxu0
        %v810 = vadd.f32 %v410, %v809
        %811 = vmatmul.f32.gmra.mxu0 %v488
        %v812 = vpop.f32.mrf.mxu0
        %v813 = vadd.f32 %v415, %v812
        %814 = vmatmul.f32.gmra.mxu0 %v491
        %v815 = vpop.f32.mrf.mxu0
        %v816 = vadd.f32 %v420, %v815
        %817 = vmatmul.f32.gmra.mxu0 %v494
        %v818 = vpop.f32.mrf.mxu0
        %v819 = vadd.f32 %v425, %v818
        %820 = vmatmul.f32.gmra.mxu0 %v497
        %v821 = vpop.f32.mrf.mxu0
        %v822 = vadd.f32 %v430, %v821
        %823 = vmatmul.f32.gmra.mxu0 %v500
        %v824 = vpop.f32.mrf.mxu0
        %v825 = vadd.f32 %v435, %v824
        %826 = vmatmul.f32.gmra.mxu0 %v503
        %v827 = vpop.f32.mrf.mxu0
        %v828 = vadd.f32 %v440, %v827
        %829 = vmatmul.f32.gmra.mxu0 %v506
        %v830 = vpop.f32.mrf.mxu0
        %v831 = vadd.f32 %v445, %v830
        %832 = vmatmul.f32.gmra.mxu0 %v509
        %v833 = vpop.f32.mrf.mxu0
        %v834 = vadd.f32 %v450, %v833
        %835 = vmatmul.f32.gmra.mxu0 %v512
        %v836 = vpop.f32.mrf.mxu0
        %v837 = vadd.f32 %v455, %v836
        %838 = vmatmul.f32.gmra.mxu0 %v515
        %v839 = vpop.f32.mrf.mxu0
        %v840 = vadd.f32 %v460, %v839
        %841 = vmatmul.f32.gmra.mxu0 %v518
        %v842 = vpop.f32.mrf.mxu0
        %v843 = vadd.f32 %v465, %v842
        %844 = vmatmul.f32.gmra.mxu0 %v521
        %v845 = vpop.f32.mrf.mxu0
        %v846 = vadd.f32 %v470, %v845
        %847 = vmatmul.f32.gmra.mxu0 %v524
        %v848 = vpop.f32.mrf.mxu0
        %v849 = vadd.f32 %v475, %v848
        %850 = vdwg.mxu0
        %851 = vmatpush.msra.mxu0 0.0
        %852 = vmatpush.msra.mxu0 0.0
        %853 = vmatpush.msra.mxu0 0.0
        %854 = vmatpush.msra.mxu0 0.0
        %855 = vmatpush.msra.mxu0 0.0
        %856 = vmatpush.msra.mxu0 0.0
        %857 = vmatpush.msra.mxu0 0.0
        %858 = vmatpush.msra.mxu0 0.0
        %859 = vmatpush.msra.mxu0 0.0
        %860 = vmatpush.msra.mxu0 0.0
        %861 = vmatpush.msra.mxu0 0.0
        %862 = vmatpush.msra.mxu0 0.0
        %863 = vmatpush.msra.mxu0 0.0
        %864 = vmatpush.msra.mxu0 0.0
        %865 = vmatpush.msra.mxu0 %v361
        %866 = vmatpush.msra.mxu0 %v353
        %867 = vmatmul.f32.gmra.mxu0 %v479
        %v868 = vpop.f32.mrf.mxu0
        %v869 = vadd.f32 %v400, %v868
        %870 = vmatmul.f32.gmra.mxu0 %v482
        %v871 = vpop.f32.mrf.mxu0
        %v872 = vadd.f32 %v405, %v871
        %873 = vmatmul.f32.gmra.mxu0 %v485
        %v874 = vpop.f32.mrf.mxu0
        %v875 = vadd.f32 %v410, %v874
        %876 = vmatmul.f32.gmra.mxu0 %v488
        %v877 = vpop.f32.mrf.mxu0
        %v878 = vadd.f32 %v415, %v877
        %879 = vmatmul.f32.gmra.mxu0 %v491
        %v880 = vpop.f32.mrf.mxu0
        %v881 = vadd.f32 %v420, %v880
        %882 = vmatmul.f32.gmra.mxu0 %v494
        %v883 = vpop.f32.mrf.mxu0
        %v884 = vadd.f32 %v425, %v883
        %885 = vmatmul.f32.gmra.mxu0 %v497
        %v886 = vpop.f32.mrf.mxu0
        %v887 = vadd.f32 %v430, %v886
        %888 = vmatmul.f32.gmra.mxu0 %v500
        %v889 = vpop.f32.mrf.mxu0
        %v890 = vadd.f32 %v435, %v889
        %891 = vmatmul.f32.gmra.mxu0 %v503
        %v892 = vpop.f32.mrf.mxu0
        %v893 = vadd.f32 %v440, %v892
        %894 = vmatmul.f32.gmra.mxu0 %v506
        %v895 = vpop.f32.mrf.mxu0
        %v896 = vadd.f32 %v445, %v895
        %897 = vmatmul.f32.gmra.mxu0 %v509
        %v898 = vpop.f32.mrf.mxu0
        %v899 = vadd.f32 %v450, %v898
        %900 = vmatmul.f32.gmra.mxu0 %v512
        %v901 = vpop.f32.mrf.mxu0
        %v902 = vadd.f32 %v455, %v901
        %903 = vmatmul.f32.gmra.mxu0 %v515
        %v904 = vpop.f32.mrf.mxu0
        %v905 = vadd.f32 %v460, %v904
        %906 = vmatmul.f32.gmra.mxu0 %v518
        %v907 = vpop.f32.mrf.mxu0
        %v908 = vadd.f32 %v465, %v907
        %909 = vmatmul.f32.gmra.mxu0 %v521
        %v910 = vpop.f32.mrf.mxu0
        %v911 = vadd.f32 %v470, %v910
        %912 = vmatmul.f32.gmra.mxu0 %v524
        %v913 = vpop.f32.mrf.mxu0
        %v914 = vadd.f32 %v475, %v913
        %915 = vdwg.mxu0
        %916 = vmatpush.msra.mxu0 0.0
        %917 = vmatpush.msra.mxu0 0.0
        %918 = vmatpush.msra.mxu0 0.0
        %919 = vmatpush.msra.mxu0 0.0
        %920 = vmatpush.msra.mxu0 0.0
        %921 = vmatpush.msra.mxu0 0.0
        %922 = vmatpush.msra.mxu0 0.0
        %923 = vmatpush.msra.mxu0 0.0
        %924 = vmatpush.msra.mxu0 0.0
        %925 = vmatpush.msra.mxu0 0.0
        %926 = vmatpush.msra.mxu0 0.0
        %927 = vmatpush.msra.mxu0 0.0
        %928 = vmatpush.msra.mxu0 0.0
        %929 = vmatpush.msra.mxu0 0.0
        %930 = vmatpush.msra.mxu0 %v362
        %931 = vmatpush.msra.mxu0 %v354
        %932 = vmatmul.f32.gmra.mxu0 %v479
        %v933 = vpop.f32.mrf.mxu0
        %v934 = vadd.f32 %v400, %v933
        %935 = vmatmul.f32.gmra.mxu0 %v482
        %v936 = vpop.f32.mrf.mxu0
        %v937 = vadd.f32 %v405, %v936
        %938 = vmatmul.f32.gmra.mxu0 %v485
        %v939 = vpop.f32.mrf.mxu0
        %v940 = vadd.f32 %v410, %v939
        %941 = vmatmul.f32.gmra.mxu0 %v488
        %v942 = vpop.f32.mrf.mxu0
        %v943 = vadd.f32 %v415, %v942
        %944 = vmatmul.f32.gmra.mxu0 %v491
        %v945 = vpop.f32.mrf.mxu0
        %v946 = vadd.f32 %v420, %v945
        %947 = vmatmul.f32.gmra.mxu0 %v494
        %v948 = vpop.f32.mrf.mxu0
        %v949 = vadd.f32 %v425, %v948
        %950 = vmatmul.f32.gmra.mxu0 %v497
        %v951 = vpop.f32.mrf.mxu0
        %v952 = vadd.f32 %v430, %v951
        %953 = vmatmul.f32.gmra.mxu0 %v500
        %v954 = vpop.f32.mrf.mxu0
        %v955 = vadd.f32 %v435, %v954
        %956 = vmatmul.f32.gmra.mxu0 %v503
        %v957 = vpop.f32.mrf.mxu0
        %v958 = vadd.f32 %v440, %v957
        %959 = vmatmul.f32.gmra.mxu0 %v506
        %v960 = vpop.f32.mrf.mxu0
        %v961 = vadd.f32 %v445, %v960
        %962 = vmatmul.f32.gmra.mxu0 %v509
        %v963 = vpop.f32.mrf.mxu0
        %v964 = vadd.f32 %v450, %v963
        %965 = vmatmul.f32.gmra.mxu0 %v512
        %v966 = vpop.f32.mrf.mxu0
        %v967 = vadd.f32 %v455, %v966
        %968 = vmatmul.f32.gmra.mxu0 %v515
        %v969 = vpop.f32.mrf.mxu0
        %v970 = vadd.f32 %v460, %v969
        %971 = vmatmul.f32.gmra.mxu0 %v518
        %v972 = vpop.f32.mrf.mxu0
        %v973 = vadd.f32 %v465, %v972
        %974 = vmatmul.f32.gmra.mxu0 %v521
        %v975 = vpop.f32.mrf.mxu0
        %v976 = vadd.f32 %v470, %v975
        %977 = vmatmul.f32.gmra.mxu0 %v524
        %v978 = vpop.f32.mrf.mxu0
        %v979 = vadd.f32 %v475, %v978
        %980 = vdwg.mxu0
        %981 = vmatpush.msra.mxu0 0.0
        %982 = vmatpush.msra.mxu0 0.0
        %983 = vmatpush.msra.mxu0 0.0
        %984 = vmatpush.msra.mxu0 0.0
        %985 = vmatpush.msra.mxu0 0.0
        %986 = vmatpush.msra.mxu0 0.0
        %987 = vmatpush.msra.mxu0 0.0
        %988 = vmatpush.msra.mxu0 0.0
        %989 = vmatpush.msra.mxu0 0.0
        %990 = vmatpush.msra.mxu0 0.0
        %991 = vmatpush.msra.mxu0 0.0
        %992 = vmatpush.msra.mxu0 0.0
        %993 = vmatpush.msra.mxu0 0.0
        %994 = vmatpush.msra.mxu0 0.0
        %995 = vmatpush.msra.mxu0 %v363
        %996 = vmatpush.msra.mxu0 %v355
        %997 = vmatmul.f32.gmra.mxu0 %v479
        %v998 = vpop.f32.mrf.mxu0
        %v999 = vadd.f32 %v400, %v998
        %1000 = vmatmul.f32.gmra.mxu0 %v482
        %v1001 = vpop.f32.mrf.mxu0
        %v1002 = vadd.f32 %v405, %v1001
        %1003 = vmatmul.f32.gmra.mxu0 %v485
        %v1004 = vpop.f32.mrf.mxu0
        %v1005 = vadd.f32 %v410, %v1004
        %1006 = vmatmul.f32.gmra.mxu0 %v488
        %v1007 = vpop.f32.mrf.mxu0
        %v1008 = vadd.f32 %v415, %v1007
        %1009 = vmatmul.f32.gmra.mxu0 %v491
        %v1010 = vpop.f32.mrf.mxu0
        %v1011 = vadd.f32 %v420, %v1010
        %1012 = vmatmul.f32.gmra.mxu0 %v494
        %v1013 = vpop.f32.mrf.mxu0
        %v1014 = vadd.f32 %v425, %v1013
        %1015 = vmatmul.f32.gmra.mxu0 %v497
        %v1016 = vpop.f32.mrf.mxu0
        %v1017 = vadd.f32 %v430, %v1016
        %1018 = vmatmul.f32.gmra.mxu0 %v500
        %v1019 = vpop.f32.mrf.mxu0
        %v1020 = vadd.f32 %v435, %v1019
        %1021 = vmatmul.f32.gmra.mxu0 %v503
        %v1022 = vpop.f32.mrf.mxu0
        %v1023 = vadd.f32 %v440, %v1022
        %1024 = vmatmul.f32.gmra.mxu0 %v506
        %v1025 = vpop.f32.mrf.mxu0
        %v1026 = vadd.f32 %v445, %v1025
        %1027 = vmatmul.f32.gmra.mxu0 %v509
        %v1028 = vpop.f32.mrf.mxu0
        %v1029 = vadd.f32 %v450, %v1028
        %1030 = vmatmul.f32.gmra.mxu0 %v512
        %v1031 = vpop.f32.mrf.mxu0
        %v1032 = vadd.f32 %v455, %v1031
        %1033 = vmatmul.f32.gmra.mxu0 %v515
        %v1034 = vpop.f32.mrf.mxu0
        %v1035 = vadd.f32 %v460, %v1034
        %1036 = vmatmul.f32.gmra.mxu0 %v518
        %v1037 = vpop.f32.mrf.mxu0
        %v1038 = vadd.f32 %v465, %v1037
        %1039 = vmatmul.f32.gmra.mxu0 %v521
        %v1040 = vpop.f32.mrf.mxu0
        %v1041 = vadd.f32 %v470, %v1040
        %1042 = vmatmul.f32.gmra.mxu0 %v524
        %v1043 = vpop.f32.mrf.mxu0
        %v1044 = vadd.f32 %v475, %v1043
        %1045 = vdwg.mxu0
        %v1046 = vlaneseq
        %v1047 = vand.u32 %v1046, 127
        %v1048 = vadd.s32 %v1047, 128
        %v1049 = vadd.s32 %v1047, 256
        %v1050 = vadd.s32 %v1047, 384
        %v1051 = vadd.s32 %v1047, 512
        %v1052 = vadd.s32 %v1047, 640
        %v1053 = vadd.s32 %v1047, 768
        %v1054 = vadd.s32 %v1047, 896
        %v1055 = vand.u32 %v1047, 255
        %v1056 = vand.u32 %v1048, 255
        %v1057 = vand.u32 %v1049, 255
        %v1058 = vand.u32 %v1050, 255
        %v1059 = vand.u32 %v1051, 255
        %v1060 = vand.u32 %v1052, 255
        %v1061 = vand.u32 %v1053, 255
        %v1062 = vand.u32 %v1054, 255
        %v1063 = vand.u32 %v1055, 15
        %v1064 = vand.u32 %v1056, 15
        %v1065 = vand.u32 %v1057, 15
        %v1066 = vand.u32 %v1058, 15
        %v1067 = vand.u32 %v1059, 15
        %v1068 = vand.u32 %v1060, 15
        %v1069 = vand.u32 %v1061, 15
        %v1070 = vand.u32 %v1062, 15
        %vm1071 = vcmp.lt.s32.totalorder %v1055, 240
        %vm1072 = vcmp.lt.s32.totalorder %v1056, 240
        %vm1073 = vcmp.lt.s32.totalorder %v1057, 240
        %vm1074 = vcmp.lt.s32.totalorder %v1058, 240
        %vm1075 = vcmp.lt.s32.totalorder %v1059, 240
        %vm1076 = vcmp.lt.s32.totalorder %v1060, 240
        %vm1077 = vcmp.lt.s32.totalorder %v1061, 240
        %vm1078 = vcmp.lt.s32.totalorder %v1062, 240
        %vm1079 = vcmp.ge.s32.totalorder %v1055, 16
        %vm1080 = vcmp.ge.s32.totalorder %v1056, 16
        %vm1081 = vcmp.ge.s32.totalorder %v1057, 16
        %vm1082 = vcmp.ge.s32.totalorder %v1058, 16
        %vm1083 = vcmp.ge.s32.totalorder %v1059, 16
        %vm1084 = vcmp.ge.s32.totalorder %v1060, 16
        %vm1085 = vcmp.ge.s32.totalorder %v1061, 16
        %vm1086 = vcmp.ge.s32.totalorder %v1062, 16
        %vm1087 = vcmp.lt.s32.totalorder %v1063, 15
        %vm1088 = vcmp.lt.s32.totalorder %v1064, 15
        %vm1089 = vcmp.lt.s32.totalorder %v1065, 15
        %vm1090 = vcmp.lt.s32.totalorder %v1066, 15
        %vm1091 = vcmp.lt.s32.totalorder %v1067, 15
        %vm1092 = vcmp.lt.s32.totalorder %v1068, 15
        %vm1093 = vcmp.lt.s32.totalorder %v1069, 15
        %vm1094 = vcmp.lt.s32.totalorder %v1070, 15
        %vm1095 = vcmp.ge.s32.totalorder %v1063, 1
        %vm1096 = vcmp.ge.s32.totalorder %v1064, 1
        %vm1097 = vcmp.ge.s32.totalorder %v1065, 1
        %vm1098 = vcmp.ge.s32.totalorder %v1066, 1
        %vm1099 = vcmp.ge.s32.totalorder %v1067, 1
        %vm1100 = vcmp.ge.s32.totalorder %v1068, 1
        %vm1101 = vcmp.ge.s32.totalorder %v1069, 1
        %vm1102 = vcmp.ge.s32.totalorder %v1070, 1
        %v1103 = vsel %vm1087, 1, 0
        %v1104 = vsel %vm1088, 1, 0
        %v1105 = vsel %vm1089, 1, 0
        %v1106 = vsel %vm1090, 1, 0
        %v1107 = vsel %vm1091, 1, 0
        %v1108 = vsel %vm1092, 1, 0
        %v1109 = vsel %vm1093, 1, 0
        %v1110 = vsel %vm1094, 1, 0
        %vm1111 = vcmp.eq.s32.totalorder %v1103, 1
        %vm1112 = vcmp.eq.s32.totalorder %v1104, 1
        %vm1113 = vcmp.eq.s32.totalorder %v1105, 1
        %vm1114 = vcmp.eq.s32.totalorder %v1106, 1
        %vm1115 = vcmp.eq.s32.totalorder %v1107, 1
        %vm1116 = vcmp.eq.s32.totalorder %v1108, 1
        %vm1117 = vcmp.eq.s32.totalorder %v1109, 1
        %vm1118 = vcmp.eq.s32.totalorder %v1110, 1
        %v1119 = vsel %vm1095, 1, 0
        %v1120 = vsel %vm1096, 1, 0
        %v1121 = vsel %vm1097, 1, 0
        %v1122 = vsel %vm1098, 1, 0
        %v1123 = vsel %vm1099, 1, 0
        %v1124 = vsel %vm1100, 1, 0
        %v1125 = vsel %vm1101, 1, 0
        %v1126 = vsel %vm1102, 1, 0
        %vm1127 = vcmp.eq.s32.totalorder %v1119, 1
        %vm1128 = vcmp.eq.s32.totalorder %v1120, 1
        %vm1129 = vcmp.eq.s32.totalorder %v1121, 1
        %vm1130 = vcmp.eq.s32.totalorder %v1122, 1
        %vm1131 = vcmp.eq.s32.totalorder %v1123, 1
        %vm1132 = vcmp.eq.s32.totalorder %v1124, 1
        %vm1133 = vcmp.eq.s32.totalorder %v1125, 1
        %vm1134 = vcmp.eq.s32.totalorder %v1126, 1
        %v1135 = vsel %vm1071, 1, 0
        %v1136 = vsel %vm1072, 1, 0
        %v1137 = vsel %vm1073, 1, 0
        %v1138 = vsel %vm1074, 1, 0
        %v1139 = vsel %vm1075, 1, 0
        %v1140 = vsel %vm1076, 1, 0
        %v1141 = vsel %vm1077, 1, 0
        %v1142 = vsel %vm1078, 1, 0
        %vm1143 = vcmp.eq.s32.totalorder %v1135, 1
        %vm1144 = vcmp.eq.s32.totalorder %v1136, 1
        %vm1145 = vcmp.eq.s32.totalorder %v1137, 1
        %vm1146 = vcmp.eq.s32.totalorder %v1138, 1
        %vm1147 = vcmp.eq.s32.totalorder %v1139, 1
        %vm1148 = vcmp.eq.s32.totalorder %v1140, 1
        %vm1149 = vcmp.eq.s32.totalorder %v1141, 1
        %vm1150 = vcmp.eq.s32.totalorder %v1142, 1
        %v1151 = vsel %vm1079, 1, 0
        %v1152 = vsel %vm1080, 1, 0
        %v1153 = vsel %vm1081, 1, 0
        %v1154 = vsel %vm1082, 1, 0
        %v1155 = vsel %vm1083, 1, 0
        %v1156 = vsel %vm1084, 1, 0
        %v1157 = vsel %vm1085, 1, 0
        %v1158 = vsel %vm1086, 1, 0
        %vm1159 = vcmp.eq.s32.totalorder %v1151, 1
        %vm1160 = vcmp.eq.s32.totalorder %v1152, 1
        %vm1161 = vcmp.eq.s32.totalorder %v1153, 1
        %vm1162 = vcmp.eq.s32.totalorder %v1154, 1
        %vm1163 = vcmp.eq.s32.totalorder %v1155, 1
        %vm1164 = vcmp.eq.s32.totalorder %v1156, 1
        %vm1165 = vcmp.eq.s32.totalorder %v1157, 1
        %vm1166 = vcmp.eq.s32.totalorder %v1158, 1
        %1167 = vrot.lane.b32.xlu0 %v348, 127
        %v1168 = vpop.permute.xlu0 %1167
        %1169 = vrot.lane.b32.xlu0 %v356, 127
        %v1170 = vpop.permute.xlu0 %1169
        %1171 = vrot.lane.b32.xlu0 %v349, 127
        %v1172 = vpop.permute.xlu0 %1171
        %1173 = vrot.lane.b32.xlu0 %v357, 127
        %v1174 = vpop.permute.xlu0 %1173
        %1175 = vrot.lane.b32.xlu0 %v350, 127
        %v1176 = vpop.permute.xlu0 %1175
        %1177 = vrot.lane.b32.xlu0 %v358, 127
        %v1178 = vpop.permute.xlu0 %1177
        %1179 = vrot.lane.b32.xlu0 %v351, 127
        %v1180 = vpop.permute.xlu0 %1179
        %1181 = vrot.lane.b32.xlu0 %v359, 127
        %v1182 = vpop.permute.xlu0 %1181
        %1183 = vrot.lane.b32.xlu0 %v352, 127
        %v1184 = vpop.permute.xlu0 %1183
        %1185 = vrot.lane.b32.xlu0 %v360, 127
        %v1186 = vpop.permute.xlu0 %1185
        %1187 = vrot.lane.b32.xlu0 %v353, 127
        %v1188 = vpop.permute.xlu0 %1187
        %1189 = vrot.lane.b32.xlu0 %v361, 127
        %v1190 = vpop.permute.xlu0 %1189
        %1191 = vrot.lane.b32.xlu0 %v354, 127
        %v1192 = vpop.permute.xlu0 %1191
        %1193 = vrot.lane.b32.xlu0 %v362, 127
        %v1194 = vpop.permute.xlu0 %1193
        %1195 = vrot.lane.b32.xlu0 %v355, 127
        %v1196 = vpop.permute.xlu0 %1195
        %1197 = vrot.lane.b32.xlu0 %v363, 127
        %v1198 = vpop.permute.xlu0 %1197
        %vm1199 = vcmp.lt.s32.totalorder %v1047, 127
        %v1200 = vsel %vm1199, %v1192, %v1196
        %v1201 = vsel %vm1199, %v1194, %v1198
        %v1202 = vsel %vm1199, %v1188, %v1192
        %v1203 = vsel %vm1199, %v1190, %v1194
        %v1204 = vsel %vm1199, %v1184, %v1188
        %v1205 = vsel %vm1199, %v1186, %v1190
        %v1206 = vsel %vm1199, %v1180, %v1184
        %v1207 = vsel %vm1199, %v1182, %v1186
        %v1208 = vsel %vm1199, %v1176, %v1180
        %v1209 = vsel %vm1199, %v1178, %v1182
        %v1210 = vsel %vm1199, %v1172, %v1176
        %v1211 = vsel %vm1199, %v1174, %v1178
        %v1212 = vsel %vm1199, %v1168, %v1172
        %v1213 = vsel %vm1199, %v1170, %v1174
        %v1214 = vsel %vm1199, %v1196, %v1168
        %v1215 = vsel %vm1199, %v1198, %v1170
        %v1216 = vsel %vm1111, %v1212, 0.0
        %v1217 = vsel %vm1112, %v1210, 0.0
        %v1218 = vsel %vm1113, %v1208, 0.0
        %v1219 = vsel %vm1114, %v1206, 0.0
        %v1220 = vsel %vm1115, %v1204, 0.0
        %v1221 = vsel %vm1116, %v1202, 0.0
        %v1222 = vsel %vm1117, %v1200, 0.0
        %v1223 = vsel %vm1118, %v1214, 0.0
        %v1224 = vsel %vm1111, %v1213, 0.0
        %v1225 = vsel %vm1112, %v1211, 0.0
        %v1226 = vsel %vm1113, %v1209, 0.0
        %v1227 = vsel %vm1114, %v1207, 0.0
        %v1228 = vsel %vm1115, %v1205, 0.0
        %v1229 = vsel %vm1116, %v1203, 0.0
        %v1230 = vsel %vm1117, %v1201, 0.0
        %v1231 = vsel %vm1118, %v1215, 0.0
        %1232 = vrot.lane.b32.xlu0 %v348, 1
        %v1233 = vpop.permute.xlu0 %1232
        %1234 = vrot.lane.b32.xlu0 %v356, 1
        %v1235 = vpop.permute.xlu0 %1234
        %1236 = vrot.lane.b32.xlu0 %v349, 1
        %v1237 = vpop.permute.xlu0 %1236
        %1238 = vrot.lane.b32.xlu0 %v357, 1
        %v1239 = vpop.permute.xlu0 %1238
        %1240 = vrot.lane.b32.xlu0 %v350, 1
        %v1241 = vpop.permute.xlu0 %1240
        %1242 = vrot.lane.b32.xlu0 %v358, 1
        %v1243 = vpop.permute.xlu0 %1242
        %1244 = vrot.lane.b32.xlu0 %v351, 1
        %v1245 = vpop.permute.xlu0 %1244
        %1246 = vrot.lane.b32.xlu0 %v359, 1
        %v1247 = vpop.permute.xlu0 %1246
        %1248 = vrot.lane.b32.xlu0 %v352, 1
        %v1249 = vpop.permute.xlu0 %1248
        %1250 = vrot.lane.b32.xlu0 %v360, 1
        %v1251 = vpop.permute.xlu0 %1250
        %1252 = vrot.lane.b32.xlu0 %v353, 1
        %v1253 = vpop.permute.xlu0 %1252
        %1254 = vrot.lane.b32.xlu0 %v361, 1
        %v1255 = vpop.permute.xlu0 %1254
        %1256 = vrot.lane.b32.xlu0 %v354, 1
        %v1257 = vpop.permute.xlu0 %1256
        %1258 = vrot.lane.b32.xlu0 %v362, 1
        %v1259 = vpop.permute.xlu0 %1258
        %1260 = vrot.lane.b32.xlu0 %v355, 1
        %v1261 = vpop.permute.xlu0 %1260
        %1262 = vrot.lane.b32.xlu0 %v363, 1
        %v1263 = vpop.permute.xlu0 %1262
        %vm1264 = vcmp.lt.s32.totalorder %v1047, 1
        %v1265 = vsel %vm1264, %v1257, %v1261
        %v1266 = vsel %vm1264, %v1259, %v1263
        %v1267 = vsel %vm1264, %v1253, %v1257
        %v1268 = vsel %vm1264, %v1255, %v1259
        %v1269 = vsel %vm1264, %v1249, %v1253
        %v1270 = vsel %vm1264, %v1251, %v1255
        %v1271 = vsel %vm1264, %v1245, %v1249
        %v1272 = vsel %vm1264, %v1247, %v1251
        %v1273 = vsel %vm1264, %v1241, %v1245
        %v1274 = vsel %vm1264, %v1243, %v1247
        %v1275 = vsel %vm1264, %v1237, %v1241
        %v1276 = vsel %vm1264, %v1239, %v1243
        %v1277 = vsel %vm1264, %v1233, %v1237
        %v1278 = vsel %vm1264, %v1235, %v1239
        %v1279 = vsel %vm1264, %v1261, %v1233
        %v1280 = vsel %vm1264, %v1263, %v1235
        %v1281 = vsel %vm1127, %v1279, 0.0
        %v1282 = vsel %vm1128, %v1277, 0.0
        %v1283 = vsel %vm1129, %v1275, 0.0
        %v1284 = vsel %vm1130, %v1273, 0.0
        %v1285 = vsel %vm1131, %v1271, 0.0
        %v1286 = vsel %vm1132, %v1269, 0.0
        %v1287 = vsel %vm1133, %v1267, 0.0
        %v1288 = vsel %vm1134, %v1265, 0.0
        %v1289 = vsel %vm1127, %v1280, 0.0
        %v1290 = vsel %vm1128, %v1278, 0.0
        %v1291 = vsel %vm1129, %v1276, 0.0
        %v1292 = vsel %vm1130, %v1274, 0.0
        %v1293 = vsel %vm1131, %v1272, 0.0
        %v1294 = vsel %vm1132, %v1270, 0.0
        %v1295 = vsel %vm1133, %v1268, 0.0
        %v1296 = vsel %vm1134, %v1266, 0.0
        %v1297 = vmul.f32 %v348, 2.0
        %v1298 = vmul.f32 %v349, 2.0
        %v1299 = vmul.f32 %v350, 2.0
        %v1300 = vmul.f32 %v351, 2.0
        %v1301 = vmul.f32 %v352, 2.0
        %v1302 = vmul.f32 %v353, 2.0
        %v1303 = vmul.f32 %v354, 2.0
        %v1304 = vmul.f32 %v355, 2.0
        %v1305 = vmul.f32 %v356, 2.0
        %v1306 = vmul.f32 %v357, 2.0
        %v1307 = vmul.f32 %v358, 2.0
        %v1308 = vmul.f32 %v359, 2.0
        %v1309 = vmul.f32 %v360, 2.0
        %v1310 = vmul.f32 %v361, 2.0
        %v1311 = vmul.f32 %v362, 2.0
        %v1312 = vmul.f32 %v363, 2.0
        %v1313 = vadd.f32 %v1281, %v1297
        %v1314 = vadd.f32 %v1282, %v1298
        %v1315 = vadd.f32 %v1283, %v1299
        %v1316 = vadd.f32 %v1284, %v1300
        %v1317 = vadd.f32 %v1285, %v1301
        %v1318 = vadd.f32 %v1286, %v1302
        %v1319 = vadd.f32 %v1287, %v1303
        %v1320 = vadd.f32 %v1288, %v1304
        %v1321 = vadd.f32 %v1289, %v1305
        %v1322 = vadd.f32 %v1290, %v1306
        %v1323 = vadd.f32 %v1291, %v1307
        %v1324 = vadd.f32 %v1292, %v1308
        %v1325 = vadd.f32 %v1293, %v1309
        %v1326 = vadd.f32 %v1294, %v1310
        %v1327 = vadd.f32 %v1295, %v1311
        %v1328 = vadd.f32 %v1296, %v1312
        %v1329 = vadd.f32 %v1313, %v1216
        %v1330 = vadd.f32 %v1314, %v1217
        %v1331 = vadd.f32 %v1315, %v1218
        %v1332 = vadd.f32 %v1316, %v1219
        %v1333 = vadd.f32 %v1317, %v1220
        %v1334 = vadd.f32 %v1318, %v1221
        %v1335 = vadd.f32 %v1319, %v1222
        %v1336 = vadd.f32 %v1320, %v1223
        %v1337 = vadd.f32 %v1321, %v1224
        %v1338 = vadd.f32 %v1322, %v1225
        %v1339 = vadd.f32 %v1323, %v1226
        %v1340 = vadd.f32 %v1324, %v1227
        %v1341 = vadd.f32 %v1325, %v1228
        %v1342 = vadd.f32 %v1326, %v1229
        %v1343 = vadd.f32 %v1327, %v1230
        %v1344 = vadd.f32 %v1328, %v1231
        %v1345 = vsub.f32 %v1216, %v1281
        %v1346 = vsub.f32 %v1217, %v1282
        %v1347 = vsub.f32 %v1218, %v1283
        %v1348 = vsub.f32 %v1219, %v1284
        %v1349 = vsub.f32 %v1220, %v1285
        %v1350 = vsub.f32 %v1221, %v1286
        %v1351 = vsub.f32 %v1222, %v1287
        %v1352 = vsub.f32 %v1223, %v1288
        %v1353 = vsub.f32 %v1224, %v1289
        %v1354 = vsub.f32 %v1225, %v1290
        %v1355 = vsub.f32 %v1226, %v1291
        %v1356 = vsub.f32 %v1227, %v1292
        %v1357 = vsub.f32 %v1228, %v1293
        %v1358 = vsub.f32 %v1229, %v1294
        %v1359 = vsub.f32 %v1230, %v1295
        %v1360 = vsub.f32 %v1231, %v1296
        %1361 = vrot.lane.b32.xlu0 %v1329, 112
        %v1362 = vpop.permute.xlu0 %1361
        %1363 = vrot.lane.b32.xlu0 %v1337, 112
        %v1364 = vpop.permute.xlu0 %1363
        %1365 = vrot.lane.b32.xlu0 %v1330, 112
        %v1366 = vpop.permute.xlu0 %1365
        %1367 = vrot.lane.b32.xlu0 %v1338, 112
        %v1368 = vpop.permute.xlu0 %1367
        %1369 = vrot.lane.b32.xlu0 %v1331, 112
        %v1370 = vpop.permute.xlu0 %1369
        %1371 = vrot.lane.b32.xlu0 %v1339, 112
        %v1372 = vpop.permute.xlu0 %1371
        %1373 = vrot.lane.b32.xlu0 %v1332, 112
        %v1374 = vpop.permute.xlu0 %1373
        %1375 = vrot.lane.b32.xlu0 %v1340, 112
        %v1376 = vpop.permute.xlu0 %1375
        %1377 = vrot.lane.b32.xlu0 %v1333, 112
        %v1378 = vpop.permute.xlu0 %1377
        %1379 = vrot.lane.b32.xlu0 %v1341, 112
        %v1380 = vpop.permute.xlu0 %1379
        %1381 = vrot.lane.b32.xlu0 %v1334, 112
        %v1382 = vpop.permute.xlu0 %1381
        %1383 = vrot.lane.b32.xlu0 %v1342, 112
        %v1384 = vpop.permute.xlu0 %1383
        %1385 = vrot.lane.b32.xlu0 %v1335, 112
        %v1386 = vpop.permute.xlu0 %1385
        %1387 = vrot.lane.b32.xlu0 %v1343, 112
        %v1388 = vpop.permute.xlu0 %1387
        %1389 = vrot.lane.b32.xlu0 %v1336, 112
        %v1390 = vpop.permute.xlu0 %1389
        %1391 = vrot.lane.b32.xlu0 %v1344, 112
        %v1392 = vpop.permute.xlu0 %1391
        %vm1393 = vcmp.lt.s32.totalorder %v1047, 112
        %v1394 = vsel %vm1393, %v1386, %v1390
        %v1395 = vsel %vm1393, %v1388, %v1392
        %v1396 = vsel %vm1393, %v1382, %v1386
        %v1397 = vsel %vm1393, %v1384, %v1388
        %v1398 = vsel %vm1393, %v1378, %v1382
        %v1399 = vsel %vm1393, %v1380, %v1384
        %v1400 = vsel %vm1393, %v1374, %v1378
        %v1401 = vsel %vm1393, %v1376, %v1380
        %v1402 = vsel %vm1393, %v1370, %v1374
        %v1403 = vsel %vm1393, %v1372, %v1376
        %v1404 = vsel %vm1393, %v1366, %v1370
        %v1405 = vsel %vm1393, %v1368, %v1372
        %v1406 = vsel %vm1393, %v1362, %v1366
        %v1407 = vsel %vm1393, %v1364, %v1368
        %v1408 = vsel %vm1393, %v1390, %v1362
        %v1409 = vsel %vm1393, %v1392, %v1364
        %v1410 = vsel %vm1143, %v1406, 0.0
        %v1411 = vsel %vm1144, %v1404, 0.0
        %v1412 = vsel %vm1145, %v1402, 0.0
        %v1413 = vsel %vm1146, %v1400, 0.0
        %v1414 = vsel %vm1147, %v1398, 0.0
        %v1415 = vsel %vm1148, %v1396, 0.0
        %v1416 = vsel %vm1149, %v1394, 0.0
        %v1417 = vsel %vm1150, %v1408, 0.0
        %v1418 = vsel %vm1143, %v1407, 0.0
        %v1419 = vsel %vm1144, %v1405, 0.0
        %v1420 = vsel %vm1145, %v1403, 0.0
        %v1421 = vsel %vm1146, %v1401, 0.0
        %v1422 = vsel %vm1147, %v1399, 0.0
        %v1423 = vsel %vm1148, %v1397, 0.0
        %v1424 = vsel %vm1149, %v1395, 0.0
        %v1425 = vsel %vm1150, %v1409, 0.0
        %1426 = vrot.lane.b32.xlu0 %v1329, 16
        %v1427 = vpop.permute.xlu0 %1426
        %1428 = vrot.lane.b32.xlu0 %v1337, 16
        %v1429 = vpop.permute.xlu0 %1428
        %1430 = vrot.lane.b32.xlu0 %v1330, 16
        %v1431 = vpop.permute.xlu0 %1430
        %1432 = vrot.lane.b32.xlu0 %v1338, 16
        %v1433 = vpop.permute.xlu0 %1432
        %1434 = vrot.lane.b32.xlu0 %v1331, 16
        %v1435 = vpop.permute.xlu0 %1434
        %1436 = vrot.lane.b32.xlu0 %v1339, 16
        %v1437 = vpop.permute.xlu0 %1436
        %1438 = vrot.lane.b32.xlu0 %v1332, 16
        %v1439 = vpop.permute.xlu0 %1438
        %1440 = vrot.lane.b32.xlu0 %v1340, 16
        %v1441 = vpop.permute.xlu0 %1440
        %1442 = vrot.lane.b32.xlu0 %v1333, 16
        %v1443 = vpop.permute.xlu0 %1442
        %1444 = vrot.lane.b32.xlu0 %v1341, 16
        %v1445 = vpop.permute.xlu0 %1444
        %1446 = vrot.lane.b32.xlu0 %v1334, 16
        %v1447 = vpop.permute.xlu0 %1446
        %1448 = vrot.lane.b32.xlu0 %v1342, 16
        %v1449 = vpop.permute.xlu0 %1448
        %1450 = vrot.lane.b32.xlu0 %v1335, 16
        %v1451 = vpop.permute.xlu0 %1450
        %1452 = vrot.lane.b32.xlu0 %v1343, 16
        %v1453 = vpop.permute.xlu0 %1452
        %1454 = vrot.lane.b32.xlu0 %v1336, 16
        %v1455 = vpop.permute.xlu0 %1454
        %1456 = vrot.lane.b32.xlu0 %v1344, 16
        %v1457 = vpop.permute.xlu0 %1456
        %vm1458 = vcmp.lt.s32.totalorder %v1047, 16
        %v1459 = vsel %vm1458, %v1451, %v1455
        %v1460 = vsel %vm1458, %v1453, %v1457
        %v1461 = vsel %vm1458, %v1447, %v1451
        %v1462 = vsel %vm1458, %v1449, %v1453
        %v1463 = vsel %vm1458, %v1443, %v1447
        %v1464 = vsel %vm1458, %v1445, %v1449
        %v1465 = vsel %vm1458, %v1439, %v1443
        %v1466 = vsel %vm1458, %v1441, %v1445
        %v1467 = vsel %vm1458, %v1435, %v1439
        %v1468 = vsel %vm1458, %v1437, %v1441
        %v1469 = vsel %vm1458, %v1431, %v1435
        %v1470 = vsel %vm1458, %v1433, %v1437
        %v1471 = vsel %vm1458, %v1427, %v1431
        %v1472 = vsel %vm1458, %v1429, %v1433
        %v1473 = vsel %vm1458, %v1455, %v1427
        %v1474 = vsel %vm1458, %v1457, %v1429
        %v1475 = vsel %vm1159, %v1473, 0.0
        %v1476 = vsel %vm1160, %v1471, 0.0
        %v1477 = vsel %vm1161, %v1469, 0.0
        %v1478 = vsel %vm1162, %v1467, 0.0
        %v1479 = vsel %vm1163, %v1465, 0.0
        %v1480 = vsel %vm1164, %v1463, 0.0
        %v1481 = vsel %vm1165, %v1461, 0.0
        %v1482 = vsel %vm1166, %v1459, 0.0
        %v1483 = vsel %vm1159, %v1474, 0.0
        %v1484 = vsel %vm1160, %v1472, 0.0
        %v1485 = vsel %vm1161, %v1470, 0.0
        %v1486 = vsel %vm1162, %v1468, 0.0
        %v1487 = vsel %vm1163, %v1466, 0.0
        %v1488 = vsel %vm1164, %v1464, 0.0
        %v1489 = vsel %vm1165, %v1462, 0.0
        %v1490 = vsel %vm1166, %v1460, 0.0
        %v1491 = vsub.f32 %v1410, %v1475
        %v1492 = vsub.f32 %v1411, %v1476
        %v1493 = vsub.f32 %v1412, %v1477
        %v1494 = vsub.f32 %v1413, %v1478
        %v1495 = vsub.f32 %v1414, %v1479
        %v1496 = vsub.f32 %v1415, %v1480
        %v1497 = vsub.f32 %v1416, %v1481
        %v1498 = vsub.f32 %v1417, %v1482
        %v1499 = vsub.f32 %v1418, %v1483
        %v1500 = vsub.f32 %v1419, %v1484
        %v1501 = vsub.f32 %v1420, %v1485
        %v1502 = vsub.f32 %v1421, %v1486
        %v1503 = vsub.f32 %v1422, %v1487
        %v1504 = vsub.f32 %v1423, %v1488
        %v1505 = vsub.f32 %v1424, %v1489
        %v1506 = vsub.f32 %v1425, %v1490
        %v1507 = vmul.f32 %v1491, 0.125
        %v1508 = vmul.f32 %v1492, 0.125
        %v1509 = vmul.f32 %v1493, 0.125
        %v1510 = vmul.f32 %v1494, 0.125
        %v1511 = vmul.f32 %v1495, 0.125
        %v1512 = vmul.f32 %v1496, 0.125
        %v1513 = vmul.f32 %v1497, 0.125
        %v1514 = vmul.f32 %v1498, 0.125
        %v1515 = vmul.f32 %v1499, 0.125
        %v1516 = vmul.f32 %v1500, 0.125
        %v1517 = vmul.f32 %v1501, 0.125
        %v1518 = vmul.f32 %v1502, 0.125
        %v1519 = vmul.f32 %v1503, 0.125
        %v1520 = vmul.f32 %v1504, 0.125
        %v1521 = vmul.f32 %v1505, 0.125
        %v1522 = vmul.f32 %v1506, 0.125
        %1523 = vrot.lane.b32.xlu0 %v1345, 16
        %v1524 = vpop.permute.xlu0 %1523
        %1525 = vrot.lane.b32.xlu0 %v1353, 16
        %v1526 = vpop.permute.xlu0 %1525
        %1527 = vrot.lane.b32.xlu0 %v1346, 16
        %v1528 = vpop.permute.xlu0 %1527
        %1529 = vrot.lane.b32.xlu0 %v1354, 16
        %v1530 = vpop.permute.xlu0 %1529
        %1531 = vrot.lane.b32.xlu0 %v1347, 16
        %v1532 = vpop.permute.xlu0 %1531
        %1533 = vrot.lane.b32.xlu0 %v1355, 16
        %v1534 = vpop.permute.xlu0 %1533
        %1535 = vrot.lane.b32.xlu0 %v1348, 16
        %v1536 = vpop.permute.xlu0 %1535
        %1537 = vrot.lane.b32.xlu0 %v1356, 16
        %v1538 = vpop.permute.xlu0 %1537
        %1539 = vrot.lane.b32.xlu0 %v1349, 16
        %v1540 = vpop.permute.xlu0 %1539
        %1541 = vrot.lane.b32.xlu0 %v1357, 16
        %v1542 = vpop.permute.xlu0 %1541
        %1543 = vrot.lane.b32.xlu0 %v1350, 16
        %v1544 = vpop.permute.xlu0 %1543
        %1545 = vrot.lane.b32.xlu0 %v1358, 16
        %v1546 = vpop.permute.xlu0 %1545
        %1547 = vrot.lane.b32.xlu0 %v1351, 16
        %v1548 = vpop.permute.xlu0 %1547
        %1549 = vrot.lane.b32.xlu0 %v1359, 16
        %v1550 = vpop.permute.xlu0 %1549
        %1551 = vrot.lane.b32.xlu0 %v1352, 16
        %v1552 = vpop.permute.xlu0 %1551
        %1553 = vrot.lane.b32.xlu0 %v1360, 16
        %v1554 = vpop.permute.xlu0 %1553
        %v1555 = vsel %vm1458, %v1548, %v1552
        %v1556 = vsel %vm1458, %v1550, %v1554
        %v1557 = vsel %vm1458, %v1544, %v1548
        %v1558 = vsel %vm1458, %v1546, %v1550
        %v1559 = vsel %vm1458, %v1540, %v1544
        %v1560 = vsel %vm1458, %v1542, %v1546
        %v1561 = vsel %vm1458, %v1536, %v1540
        %v1562 = vsel %vm1458, %v1538, %v1542
        %v1563 = vsel %vm1458, %v1532, %v1536
        %v1564 = vsel %vm1458, %v1534, %v1538
        %v1565 = vsel %vm1458, %v1528, %v1532
        %v1566 = vsel %vm1458, %v1530, %v1534
        %v1567 = vsel %vm1458, %v1524, %v1528
        %v1568 = vsel %vm1458, %v1526, %v1530
        %v1569 = vsel %vm1458, %v1552, %v1524
        %v1570 = vsel %vm1458, %v1554, %v1526
        %v1571 = vsel %vm1159, %v1569, 0.0
        %v1572 = vsel %vm1160, %v1567, 0.0
        %v1573 = vsel %vm1161, %v1565, 0.0
        %v1574 = vsel %vm1162, %v1563, 0.0
        %v1575 = vsel %vm1163, %v1561, 0.0
        %v1576 = vsel %vm1164, %v1559, 0.0
        %v1577 = vsel %vm1165, %v1557, 0.0
        %v1578 = vsel %vm1166, %v1555, 0.0
        %v1579 = vsel %vm1159, %v1570, 0.0
        %v1580 = vsel %vm1160, %v1568, 0.0
        %v1581 = vsel %vm1161, %v1566, 0.0
        %v1582 = vsel %vm1162, %v1564, 0.0
        %v1583 = vsel %vm1163, %v1562, 0.0
        %v1584 = vsel %vm1164, %v1560, 0.0
        %v1585 = vsel %vm1165, %v1558, 0.0
        %v1586 = vsel %vm1166, %v1556, 0.0
        %v1587 = vmul.f32 %v1345, 2.0
        %v1588 = vmul.f32 %v1346, 2.0
        %v1589 = vmul.f32 %v1347, 2.0
        %v1590 = vmul.f32 %v1348, 2.0
        %v1591 = vmul.f32 %v1349, 2.0
        %v1592 = vmul.f32 %v1350, 2.0
        %v1593 = vmul.f32 %v1351, 2.0
        %v1594 = vmul.f32 %v1352, 2.0
        %v1595 = vmul.f32 %v1353, 2.0
        %v1596 = vmul.f32 %v1354, 2.0
        %v1597 = vmul.f32 %v1355, 2.0
        %v1598 = vmul.f32 %v1356, 2.0
        %v1599 = vmul.f32 %v1357, 2.0
        %v1600 = vmul.f32 %v1358, 2.0
        %v1601 = vmul.f32 %v1359, 2.0
        %v1602 = vmul.f32 %v1360, 2.0
        %v1603 = vadd.f32 %v1571, %v1587
        %v1604 = vadd.f32 %v1572, %v1588
        %v1605 = vadd.f32 %v1573, %v1589
        %v1606 = vadd.f32 %v1574, %v1590
        %v1607 = vadd.f32 %v1575, %v1591
        %v1608 = vadd.f32 %v1576, %v1592
        %v1609 = vadd.f32 %v1577, %v1593
        %v1610 = vadd.f32 %v1578, %v1594
        %v1611 = vadd.f32 %v1579, %v1595
        %v1612 = vadd.f32 %v1580, %v1596
        %v1613 = vadd.f32 %v1581, %v1597
        %v1614 = vadd.f32 %v1582, %v1598
        %v1615 = vadd.f32 %v1583, %v1599
        %v1616 = vadd.f32 %v1584, %v1600
        %v1617 = vadd.f32 %v1585, %v1601
        %v1618 = vadd.f32 %v1586, %v1602
        %1619 = vrot.lane.b32.xlu0 %v1345, 112
        %v1620 = vpop.permute.xlu0 %1619
        %1621 = vrot.lane.b32.xlu0 %v1353, 112
        %v1622 = vpop.permute.xlu0 %1621
        %1623 = vrot.lane.b32.xlu0 %v1346, 112
        %v1624 = vpop.permute.xlu0 %1623
        %1625 = vrot.lane.b32.xlu0 %v1354, 112
        %v1626 = vpop.permute.xlu0 %1625
        %1627 = vrot.lane.b32.xlu0 %v1347, 112
        %v1628 = vpop.permute.xlu0 %1627
        %1629 = vrot.lane.b32.xlu0 %v1355, 112
        %v1630 = vpop.permute.xlu0 %1629
        %1631 = vrot.lane.b32.xlu0 %v1348, 112
        %v1632 = vpop.permute.xlu0 %1631
        %1633 = vrot.lane.b32.xlu0 %v1356, 112
        %v1634 = vpop.permute.xlu0 %1633
        %1635 = vrot.lane.b32.xlu0 %v1349, 112
        %v1636 = vpop.permute.xlu0 %1635
        %1637 = vrot.lane.b32.xlu0 %v1357, 112
        %v1638 = vpop.permute.xlu0 %1637
        %1639 = vrot.lane.b32.xlu0 %v1350, 112
        %v1640 = vpop.permute.xlu0 %1639
        %1641 = vrot.lane.b32.xlu0 %v1358, 112
        %v1642 = vpop.permute.xlu0 %1641
        %1643 = vrot.lane.b32.xlu0 %v1351, 112
        %v1644 = vpop.permute.xlu0 %1643
        %1645 = vrot.lane.b32.xlu0 %v1359, 112
        %v1646 = vpop.permute.xlu0 %1645
        %1647 = vrot.lane.b32.xlu0 %v1352, 112
        %v1648 = vpop.permute.xlu0 %1647
        %1649 = vrot.lane.b32.xlu0 %v1360, 112
        %v1650 = vpop.permute.xlu0 %1649
        %v1651 = vsel %vm1393, %v1644, %v1648
        %v1652 = vsel %vm1393, %v1646, %v1650
        %v1653 = vsel %vm1393, %v1640, %v1644
        %v1654 = vsel %vm1393, %v1642, %v1646
        %v1655 = vsel %vm1393, %v1636, %v1640
        %v1656 = vsel %vm1393, %v1638, %v1642
        %v1657 = vsel %vm1393, %v1632, %v1636
        %v1658 = vsel %vm1393, %v1634, %v1638
        %v1659 = vsel %vm1393, %v1628, %v1632
        %v1660 = vsel %vm1393, %v1630, %v1634
        %v1661 = vsel %vm1393, %v1624, %v1628
        %v1662 = vsel %vm1393, %v1626, %v1630
        %v1663 = vsel %vm1393, %v1620, %v1624
        %v1664 = vsel %vm1393, %v1622, %v1626
        %v1665 = vsel %vm1393, %v1648, %v1620
        %v1666 = vsel %vm1393, %v1650, %v1622
        %v1667 = vsel %vm1143, %v1663, 0.0
        %v1668 = vsel %vm1144, %v1661, 0.0
        %v1669 = vsel %vm1145, %v1659, 0.0
        %v1670 = vsel %vm1146, %v1657, 0.0
        %v1671 = vsel %vm1147, %v1655, 0.0
        %v1672 = vsel %vm1148, %v1653, 0.0
        %v1673 = vsel %vm1149, %v1651, 0.0
        %v1674 = vsel %vm1150, %v1665, 0.0
        %v1675 = vsel %vm1143, %v1664, 0.0
        %v1676 = vsel %vm1144, %v1662, 0.0
        %v1677 = vsel %vm1145, %v1660, 0.0
        %v1678 = vsel %vm1146, %v1658, 0.0
        %v1679 = vsel %vm1147, %v1656, 0.0
        %v1680 = vsel %vm1148, %v1654, 0.0
        %v1681 = vsel %vm1149, %v1652, 0.0
        %v1682 = vsel %vm1150, %v1666, 0.0
        %v1683 = vadd.f32 %v1603, %v1667
        %v1684 = vadd.f32 %v1604, %v1668
        %v1685 = vadd.f32 %v1605, %v1669
        %v1686 = vadd.f32 %v1606, %v1670
        %v1687 = vadd.f32 %v1607, %v1671
        %v1688 = vadd.f32 %v1608, %v1672
        %v1689 = vadd.f32 %v1609, %v1673
        %v1690 = vadd.f32 %v1610, %v1674
        %v1691 = vadd.f32 %v1611, %v1675
        %v1692 = vadd.f32 %v1612, %v1676
        %v1693 = vadd.f32 %v1613, %v1677
        %v1694 = vadd.f32 %v1614, %v1678
        %v1695 = vadd.f32 %v1615, %v1679
        %v1696 = vadd.f32 %v1616, %v1680
        %v1697 = vadd.f32 %v1617, %v1681
        %v1698 = vadd.f32 %v1618, %v1682
        %v1699 = vmul.f32 %v1683, 0.125
        %v1700 = vmul.f32 %v1684, 0.125
        %v1701 = vmul.f32 %v1685, 0.125
        %v1702 = vmul.f32 %v1686, 0.125
        %v1703 = vmul.f32 %v1687, 0.125
        %v1704 = vmul.f32 %v1688, 0.125
        %v1705 = vmul.f32 %v1689, 0.125
        %v1706 = vmul.f32 %v1690, 0.125
        %v1707 = vmul.f32 %v1691, 0.125
        %v1708 = vmul.f32 %v1692, 0.125
        %v1709 = vmul.f32 %v1693, 0.125
        %v1710 = vmul.f32 %v1694, 0.125
        %v1711 = vmul.f32 %v1695, 0.125
        %v1712 = vmul.f32 %v1696, 0.125
        %v1713 = vmul.f32 %v1697, 0.125
        %v1714 = vmul.f32 %v1698, 0.125
        %v1723 = vrot.slane %v348, 3
        %v1724 = vrot.slane %v349, 3
        %v1725 = vrot.slane %v350, 3
        %v1726 = vrot.slane %v351, 3
        %v1727 = vrot.slane %v352, 3
        %v1728 = vrot.slane %v353, 3
        %v1729 = vrot.slane %v354, 3
        %v1730 = vrot.slane %v355, 3
        %1739 = vrot.lane.b32.xlu0 %v1723, 127
        %v1740 = vpop.permute.xlu0 %1739
        %1741 = vrot.lane.b32.xlu0 %v1724, 127
        %v1742 = vpop.permute.xlu0 %1741
        %1743 = vrot.lane.b32.xlu0 %v1725, 127
        %v1744 = vpop.permute.xlu0 %1743
        %1745 = vrot.lane.b32.xlu0 %v1726, 127
        %v1746 = vpop.permute.xlu0 %1745
        %1747 = vrot.lane.b32.xlu0 %v1727, 127
        %v1748 = vpop.permute.xlu0 %1747
        %1749 = vrot.lane.b32.xlu0 %v1728, 127
        %v1750 = vpop.permute.xlu0 %1749
        %1751 = vrot.lane.b32.xlu0 %v1729, 127
        %v1752 = vpop.permute.xlu0 %1751
        %1753 = vrot.lane.b32.xlu0 %v1730, 127
        %v1754 = vpop.permute.xlu0 %1753
        %v1755 = vsel %vm1199, %v1752, %v1754
        %v1756 = vsel %vm1199, %v1750, %v1752
        %v1757 = vsel %vm1199, %v1748, %v1750
        %v1758 = vsel %vm1199, %v1746, %v1748
        %v1759 = vsel %vm1199, %v1744, %v1746
        %v1760 = vsel %vm1199, %v1742, %v1744
        %v1761 = vsel %vm1199, %v1740, %v1742
        %v1762 = vsel %vm1199, %v1754, %v1740
        %v1763 = vsel %vm1087, %v1761, 0.0
        %v1764 = vsel %vm1088, %v1760, 0.0
        %v1765 = vsel %vm1089, %v1759, 0.0
        %v1766 = vsel %vm1090, %v1758, 0.0
        %v1767 = vsel %vm1091, %v1757, 0.0
        %v1768 = vsel %vm1092, %v1756, 0.0
        %v1769 = vsel %vm1093, %v1755, 0.0
        %v1770 = vsel %vm1094, %v1762, 0.0
        %v1779 = vrot.slane %v1763, 5
        %v1780 = vrot.slane %v1764, 5
        %v1781 = vrot.slane %v1765, 5
        %v1782 = vrot.slane %v1766, 5
        %v1783 = vrot.slane %v1767, 5
        %v1784 = vrot.slane %v1768, 5
        %v1785 = vrot.slane %v1769, 5
        %v1786 = vrot.slane %v1770, 5
        %v1795 = vmax.f32 %v348, %v1779
        %v1796 = vmax.f32 %v349, %v1780
        %v1797 = vmax.f32 %v350, %v1781
        %v1798 = vmax.f32 %v351, %v1782
        %v1799 = vmax.f32 %v352, %v1783
        %v1800 = vmax.f32 %v353, %v1784
        %v1801 = vmax.f32 %v354, %v1785
        %v1802 = vmax.f32 %v355, %v1786
        %1803 = vrot.lane.b32.xlu0 %v1723, 1
        %v1804 = vpop.permute.xlu0 %1803
        %1805 = vrot.lane.b32.xlu0 %v1724, 1
        %v1806 = vpop.permute.xlu0 %1805
        %1807 = vrot.lane.b32.xlu0 %v1725, 1
        %v1808 = vpop.permute.xlu0 %1807
        %1809 = vrot.lane.b32.xlu0 %v1726, 1
        %v1810 = vpop.permute.xlu0 %1809
        %1811 = vrot.lane.b32.xlu0 %v1727, 1
        %v1812 = vpop.permute.xlu0 %1811
        %1813 = vrot.lane.b32.xlu0 %v1728, 1
        %v1814 = vpop.permute.xlu0 %1813
        %1815 = vrot.lane.b32.xlu0 %v1729, 1
        %v1816 = vpop.permute.xlu0 %1815
        %1817 = vrot.lane.b32.xlu0 %v1730, 1
        %v1818 = vpop.permute.xlu0 %1817
        %v1819 = vsel %vm1264, %v1816, %v1818
        %v1820 = vsel %vm1264, %v1814, %v1816
        %v1821 = vsel %vm1264, %v1812, %v1814
        %v1822 = vsel %vm1264, %v1810, %v1812
        %v1823 = vsel %vm1264, %v1808, %v1810
        %v1824 = vsel %vm1264, %v1806, %v1808
        %v1825 = vsel %vm1264, %v1804, %v1806
        %v1826 = vsel %vm1264, %v1818, %v1804
        %v1827 = vsel %vm1095, %v1826, 0.0
        %v1828 = vsel %vm1096, %v1825, 0.0
        %v1829 = vsel %vm1097, %v1824, 0.0
        %v1830 = vsel %vm1098, %v1823, 0.0
        %v1831 = vsel %vm1099, %v1822, 0.0
        %v1832 = vsel %vm1100, %v1821, 0.0
        %v1833 = vsel %vm1101, %v1820, 0.0
        %v1834 = vsel %vm1102, %v1819, 0.0
        %v1843 = vrot.slane %v1827, 5
        %v1844 = vrot.slane %v1828, 5
        %v1845 = vrot.slane %v1829, 5
        %v1846 = vrot.slane %v1830, 5
        %v1847 = vrot.slane %v1831, 5
        %v1848 = vrot.slane %v1832, 5
        %v1849 = vrot.slane %v1833, 5
        %v1850 = vrot.slane %v1834, 5
        %v1859 = vmax.f32 %v1795, %v1843
        %v1860 = vmax.f32 %v1796, %v1844
        %v1861 = vmax.f32 %v1797, %v1845
        %v1862 = vmax.f32 %v1798, %v1846
        %v1863 = vmax.f32 %v1799, %v1847
        %v1864 = vmax.f32 %v1800, %v1848
        %v1865 = vmax.f32 %v1801, %v1849
        %v1866 = vmax.f32 %v1802, %v1850
        %v1875 = vrot.slane %v1859, 3
        %v1876 = vrot.slane %v1860, 3
        %v1877 = vrot.slane %v1861, 3
        %v1878 = vrot.slane %v1862, 3
        %v1879 = vrot.slane %v1863, 3
        %v1880 = vrot.slane %v1864, 3
        %v1881 = vrot.slane %v1865, 3
        %v1882 = vrot.slane %v1866, 3
        %1891 = vrot.lane.b32.xlu0 %v1875, 112
        %v1892 = vpop.permute.xlu0 %1891
        %1893 = vrot.lane.b32.xlu0 %v1876, 112
        %v1894 = vpop.permute.xlu0 %1893
        %1895 = vrot.lane.b32.xlu0 %v1877, 112
        %v1896 = vpop.permute.xlu0 %1895
        %1897 = vrot.lane.b32.xlu0 %v1878, 112
        %v1898 = vpop.permute.xlu0 %1897
        %1899 = vrot.lane.b32.xlu0 %v1879, 112
        %v1900 = vpop.permute.xlu0 %1899
        %1901 = vrot.lane.b32.xlu0 %v1880, 112
        %v1902 = vpop.permute.xlu0 %1901
        %1903 = vrot.lane.b32.xlu0 %v1881, 112
        %v1904 = vpop.permute.xlu0 %1903
        %1905 = vrot.lane.b32.xlu0 %v1882, 112
        %v1906 = vpop.permute.xlu0 %1905
        %v1907 = vsel %vm1393, %v1904, %v1906
        %v1908 = vsel %vm1393, %v1902, %v1904
        %v1909 = vsel %vm1393, %v1900, %v1902
        %v1910 = vsel %vm1393, %v1898, %v1900
        %v1911 = vsel %vm1393, %v1896, %v1898
        %v1912 = vsel %vm1393, %v1894, %v1896
        %v1913 = vsel %vm1393, %v1892, %v1894
        %v1914 = vsel %vm1393, %v1906, %v1892
        %v1915 = vsel %vm1071, %v1913, 0.0
        %v1916 = vsel %vm1072, %v1912, 0.0
        %v1917 = vsel %vm1073, %v1911, 0.0
        %v1918 = vsel %vm1074, %v1910, 0.0
        %v1919 = vsel %vm1075, %v1909, 0.0
        %v1920 = vsel %vm1076, %v1908, 0.0
        %v1921 = vsel %vm1077, %v1907, 0.0
        %v1922 = vsel %vm1078, %v1914, 0.0
        %v1931 = vrot.slane %v1915, 5
        %v1932 = vrot.slane %v1916, 5
        %v1933 = vrot.slane %v1917, 5
        %v1934 = vrot.slane %v1918, 5
        %v1935 = vrot.slane %v1919, 5
        %v1936 = vrot.slane %v1920, 5
        %v1937 = vrot.slane %v1921, 5
        %v1938 = vrot.slane %v1922, 5
        %v1947 = vmax.f32 %v1859, %v1931
        %v1948 = vmax.f32 %v1860, %v1932
        %v1949 = vmax.f32 %v1861, %v1933
        %v1950 = vmax.f32 %v1862, %v1934
        %v1951 = vmax.f32 %v1863, %v1935
        %v1952 = vmax.f32 %v1864, %v1936
        %v1953 = vmax.f32 %v1865, %v1937
        %v1954 = vmax.f32 %v1866, %v1938
        %1955 = vrot.lane.b32.xlu0 %v1875, 16
        %v1956 = vpop.permute.xlu0 %1955
        %1957 = vrot.lane.b32.xlu0 %v1876, 16
        %v1958 = vpop.permute.xlu0 %1957
        %1959 = vrot.lane.b32.xlu0 %v1877, 16
        %v1960 = vpop.permute.xlu0 %1959
        %1961 = vrot.lane.b32.xlu0 %v1878, 16
        %v1962 = vpop.permute.xlu0 %1961
        %1963 = vrot.lane.b32.xlu0 %v1879, 16
        %v1964 = vpop.permute.xlu0 %1963
        %1965 = vrot.lane.b32.xlu0 %v1880, 16
        %v1966 = vpop.permute.xlu0 %1965
        %1967 = vrot.lane.b32.xlu0 %v1881, 16
        %v1968 = vpop.permute.xlu0 %1967
        %1969 = vrot.lane.b32.xlu0 %v1882, 16
        %v1970 = vpop.permute.xlu0 %1969
        %v1971 = vsel %vm1458, %v1968, %v1970
        %v1972 = vsel %vm1458, %v1966, %v1968
        %v1973 = vsel %vm1458, %v1964, %v1966
        %v1974 = vsel %vm1458, %v1962, %v1964
        %v1975 = vsel %vm1458, %v1960, %v1962
        %v1976 = vsel %vm1458, %v1958, %v1960
        %v1977 = vsel %vm1458, %v1956, %v1958
        %v1978 = vsel %vm1458, %v1970, %v1956
        %v1979 = vsel %vm1079, %v1978, 0.0
        %v1980 = vsel %vm1080, %v1977, 0.0
        %v1981 = vsel %vm1081, %v1976, 0.0
        %v1982 = vsel %vm1082, %v1975, 0.0
        %v1983 = vsel %vm1083, %v1974, 0.0
        %v1984 = vsel %vm1084, %v1973, 0.0
        %v1985 = vsel %vm1085, %v1972, 0.0
        %v1986 = vsel %vm1086, %v1971, 0.0
        %v1995 = vrot.slane %v1979, 5
        %v1996 = vrot.slane %v1980, 5
        %v1997 = vrot.slane %v1981, 5
        %v1998 = vrot.slane %v1982, 5
        %v1999 = vrot.slane %v1983, 5
        %v2000 = vrot.slane %v1984, 5
        %v2001 = vrot.slane %v1985, 5
        %v2002 = vrot.slane %v1986, 5
        %v2011 = vmax.f32 %v1947, %v1995
        %v2012 = vmax.f32 %v1948, %v1996
        %v2013 = vmax.f32 %v1949, %v1997
        %v2014 = vmax.f32 %v1950, %v1998
        %v2015 = vmax.f32 %v1951, %v1999
        %v2016 = vmax.f32 %v1952, %v2000
        %v2017 = vmax.f32 %v1953, %v2001
        %v2018 = vmax.f32 %v1954, %v2002
        %vm2019 = vcmp.gt.f32.partialorder %v2011, 0.1
        %vm2020 = vcmp.gt.f32.partialorder %v2012, 0.1
        %vm2021 = vcmp.gt.f32.partialorder %v2013, 0.1
        %vm2022 = vcmp.gt.f32.partialorder %v2014, 0.1
        %vm2023 = vcmp.gt.f32.partialorder %v2015, 0.1
        %vm2024 = vcmp.gt.f32.partialorder %v2016, 0.1
        %vm2025 = vcmp.gt.f32.partialorder %v2017, 0.1
        %vm2026 = vcmp.gt.f32.partialorder %v2018, 0.1
        %v2027 = vld [vmem:[%s3] sm:$0xff]
        %v2028 = vld [vmem:[%s3 + $0x8] sm:$0xff]
        %v2029 = vld [vmem:[%s3 + $0x10] sm:$0xff]
        %v2030 = vld [vmem:[%s3 + $0x18] sm:$0xff]
        %v2031 = vld [vmem:[%s3 + $0x20] sm:$0xff]
        %v2032 = vld [vmem:[%s3 + $0x28] sm:$0xff]
        %v2033 = vld [vmem:[%s3 + $0x30] sm:$0xff]
        %v2034 = vld [vmem:[%s3 + $0x38] sm:$0xff]
        %v2035 = vld [vmem:[%s3 + $0x40] sm:$0xff]
        %v2036 = vld [vmem:[%s3 + $0x48] sm:$0xff]
        %v2037 = vld [vmem:[%s3 + $0x50] sm:$0xff]
        %v2038 = vld [vmem:[%s3 + $0x58] sm:$0xff]
        %v2039 = vld [vmem:[%s3 + $0x60] sm:$0xff]
        %v2040 = vld [vmem:[%s3 + $0x68] sm:$0xff]
        %v2041 = vld [vmem:[%s3 + $0x70] sm:$0xff]
        %v2042 = vld [vmem:[%s3 + $0x78] sm:$0xff]
        %v2044 = vsel %vm477, %v2027, 0
        %v2047 = vsel %vm477, %v2028, 0
        %v2050 = vsel %vm477, %v2029, 0
        %v2053 = vsel %vm477, %v2030, 0
        %v2056 = vsel %vm477, %v2031, 0
        %v2059 = vsel %vm477, %v2032, 0
        %v2062 = vsel %vm477, %v2033, 0
        %v2065 = vsel %vm477, %v2034, 0
        %v2068 = vsel %vm477, %v2035, 0
        %v2071 = vsel %vm477, %v2036, 0
        %v2074 = vsel %vm477, %v2037, 0
        %v2077 = vsel %vm477, %v2038, 0
        %v2080 = vsel %vm477, %v2039, 0
        %v2083 = vsel %vm477, %v2040, 0
        %v2086 = vsel %vm477, %v2041, 0
        %v2089 = vsel %vm477, %v2042, 0
        %2091 = vmatpush.msra.mxu0 0.0
        %2092 = vmatpush.msra.mxu0 0.0
        %2093 = vmatpush.msra.mxu0 0.0
        %2094 = vmatpush.msra.mxu0 0.0
        %2095 = vmatpush.msra.mxu0 0.0
        %2096 = vmatpush.msra.mxu0 0.0
        %2097 = vmatpush.msra.mxu0 0.0
        %2098 = vmatpush.msra.mxu0 0.0
        %2099 = vmatpush.msra.mxu0 0.0
        %2100 = vmatpush.msra.mxu0 0.0
        %2101 = vmatpush.msra.mxu0 0.0
        %2102 = vmatpush.msra.mxu0 0.0
        %2103 = vmatpush.msra.mxu0 0.0
        %2104 = vmatpush.msra.mxu0 0.0
        %2105 = vmatpush.msra.mxu0 %v1707
        %2106 = vmatpush.msra.mxu0 %v1699
        %2107 = vmatmul.f32.gmra.mxu0 %v2044
        %v2108 = vpop.f32.mrf.mxu0
        %v2109 = vadd.f32 0.0, %v2108
        %2110 = vmatmul.f32.gmra.mxu0 %v2047
        %v2111 = vpop.f32.mrf.mxu0
        %v2112 = vadd.f32 0.0, %v2111
        %2113 = vmatmul.f32.gmra.mxu0 %v2050
        %v2114 = vpop.f32.mrf.mxu0
        %v2115 = vadd.f32 0.0, %v2114
        %2116 = vmatmul.f32.gmra.mxu0 %v2053
        %v2117 = vpop.f32.mrf.mxu0
        %v2118 = vadd.f32 0.0, %v2117
        %2119 = vmatmul.f32.gmra.mxu0 %v2056
        %v2120 = vpop.f32.mrf.mxu0
        %v2121 = vadd.f32 0.0, %v2120
        %2122 = vmatmul.f32.gmra.mxu0 %v2059
        %v2123 = vpop.f32.mrf.mxu0
        %v2124 = vadd.f32 0.0, %v2123
        %2125 = vmatmul.f32.gmra.mxu0 %v2062
        %v2126 = vpop.f32.mrf.mxu0
        %v2127 = vadd.f32 0.0, %v2126
        %2128 = vmatmul.f32.gmra.mxu0 %v2065
        %v2129 = vpop.f32.mrf.mxu0
        %v2130 = vadd.f32 0.0, %v2129
        %2131 = vmatmul.f32.gmra.mxu0 %v2068
        %v2132 = vpop.f32.mrf.mxu0
        %v2133 = vadd.f32 0.0, %v2132
        %2134 = vmatmul.f32.gmra.mxu0 %v2071
        %v2135 = vpop.f32.mrf.mxu0
        %v2136 = vadd.f32 0.0, %v2135
        %2137 = vmatmul.f32.gmra.mxu0 %v2074
        %v2138 = vpop.f32.mrf.mxu0
        %v2139 = vadd.f32 0.0, %v2138
        %2140 = vmatmul.f32.gmra.mxu0 %v2077
        %v2141 = vpop.f32.mrf.mxu0
        %v2142 = vadd.f32 0.0, %v2141
        %2143 = vmatmul.f32.gmra.mxu0 %v2080
        %v2144 = vpop.f32.mrf.mxu0
        %v2145 = vadd.f32 0.0, %v2144
        %2146 = vmatmul.f32.gmra.mxu0 %v2083
        %v2147 = vpop.f32.mrf.mxu0
        %v2148 = vadd.f32 0.0, %v2147
        %2149 = vmatmul.f32.gmra.mxu0 %v2086
        %v2150 = vpop.f32.mrf.mxu0
        %v2151 = vadd.f32 0.0, %v2150
        %2152 = vmatmul.f32.gmra.mxu0 %v2089
        %v2153 = vpop.f32.mrf.mxu0
        %v2154 = vadd.f32 0.0, %v2153
        %2155 = vdwg.mxu0
        %2156 = vmatpush.msra.mxu0 0.0
        %2157 = vmatpush.msra.mxu0 0.0
        %2158 = vmatpush.msra.mxu0 0.0
        %2159 = vmatpush.msra.mxu0 0.0
        %2160 = vmatpush.msra.mxu0 0.0
        %2161 = vmatpush.msra.mxu0 0.0
        %2162 = vmatpush.msra.mxu0 0.0
        %2163 = vmatpush.msra.mxu0 0.0
        %2164 = vmatpush.msra.mxu0 0.0
        %2165 = vmatpush.msra.mxu0 0.0
        %2166 = vmatpush.msra.mxu0 0.0
        %2167 = vmatpush.msra.mxu0 0.0
        %2168 = vmatpush.msra.mxu0 0.0
        %2169 = vmatpush.msra.mxu0 0.0
        %2170 = vmatpush.msra.mxu0 %v1708
        %2171 = vmatpush.msra.mxu0 %v1700
        %2172 = vmatmul.f32.gmra.mxu0 %v2044
        %v2173 = vpop.f32.mrf.mxu0
        %v2174 = vadd.f32 0.0, %v2173
        %2175 = vmatmul.f32.gmra.mxu0 %v2047
        %v2176 = vpop.f32.mrf.mxu0
        %v2177 = vadd.f32 0.0, %v2176
        %2178 = vmatmul.f32.gmra.mxu0 %v2050
        %v2179 = vpop.f32.mrf.mxu0
        %v2180 = vadd.f32 0.0, %v2179
        %2181 = vmatmul.f32.gmra.mxu0 %v2053
        %v2182 = vpop.f32.mrf.mxu0
        %v2183 = vadd.f32 0.0, %v2182
        %2184 = vmatmul.f32.gmra.mxu0 %v2056
        %v2185 = vpop.f32.mrf.mxu0
        %v2186 = vadd.f32 0.0, %v2185
        %2187 = vmatmul.f32.gmra.mxu0 %v2059
        %v2188 = vpop.f32.mrf.mxu0
        %v2189 = vadd.f32 0.0, %v2188
        %2190 = vmatmul.f32.gmra.mxu0 %v2062
        %v2191 = vpop.f32.mrf.mxu0
        %v2192 = vadd.f32 0.0, %v2191
        %2193 = vmatmul.f32.gmra.mxu0 %v2065
        %v2194 = vpop.f32.mrf.mxu0
        %v2195 = vadd.f32 0.0, %v2194
        %2196 = vmatmul.f32.gmra.mxu0 %v2068
        %v2197 = vpop.f32.mrf.mxu0
        %v2198 = vadd.f32 0.0, %v2197
        %2199 = vmatmul.f32.gmra.mxu0 %v2071
        %v2200 = vpop.f32.mrf.mxu0
        %v2201 = vadd.f32 0.0, %v2200
        %2202 = vmatmul.f32.gmra.mxu0 %v2074
        %v2203 = vpop.f32.mrf.mxu0
        %v2204 = vadd.f32 0.0, %v2203
        %2205 = vmatmul.f32.gmra.mxu0 %v2077
        %v2206 = vpop.f32.mrf.mxu0
        %v2207 = vadd.f32 0.0, %v2206
        %2208 = vmatmul.f32.gmra.mxu0 %v2080
        %v2209 = vpop.f32.mrf.mxu0
        %v2210 = vadd.f32 0.0, %v2209
        %2211 = vmatmul.f32.gmra.mxu0 %v2083
        %v2212 = vpop.f32.mrf.mxu0
        %v2213 = vadd.f32 0.0, %v2212
        %2214 = vmatmul.f32.gmra.mxu0 %v2086
        %v2215 = vpop.f32.mrf.mxu0
        %v2216 = vadd.f32 0.0, %v2215
        %2217 = vmatmul.f32.gmra.mxu0 %v2089
        %v2218 = vpop.f32.mrf.mxu0
        %v2219 = vadd.f32 0.0, %v2218
        %2220 = vdwg.mxu0
        %2221 = vmatpush.msra.mxu0 0.0
        %2222 = vmatpush.msra.mxu0 0.0
        %2223 = vmatpush.msra.mxu0 0.0
        %2224 = vmatpush.msra.mxu0 0.0
        %2225 = vmatpush.msra.mxu0 0.0
        %2226 = vmatpush.msra.mxu0 0.0
        %2227 = vmatpush.msra.mxu0 0.0
        %2228 = vmatpush.msra.mxu0 0.0
        %2229 = vmatpush.msra.mxu0 0.0
        %2230 = vmatpush.msra.mxu0 0.0
        %2231 = vmatpush.msra.mxu0 0.0
        %2232 = vmatpush.msra.mxu0 0.0
        %2233 = vmatpush.msra.mxu0 0.0
        %2234 = vmatpush.msra.mxu0 0.0
        %2235 = vmatpush.msra.mxu0 %v1709
        %2236 = vmatpush.msra.mxu0 %v1701
        %2237 = vmatmul.f32.gmra.mxu0 %v2044
        %v2238 = vpop.f32.mrf.mxu0
        %v2239 = vadd.f32 0.0, %v2238
        %2240 = vmatmul.f32.gmra.mxu0 %v2047
        %v2241 = vpop.f32.mrf.mxu0
        %v2242 = vadd.f32 0.0, %v2241
        %2243 = vmatmul.f32.gmra.mxu0 %v2050
        %v2244 = vpop.f32.mrf.mxu0
        %v2245 = vadd.f32 0.0, %v2244
        %2246 = vmatmul.f32.gmra.mxu0 %v2053
        %v2247 = vpop.f32.mrf.mxu0
        %v2248 = vadd.f32 0.0, %v2247
        %2249 = vmatmul.f32.gmra.mxu0 %v2056
        %v2250 = vpop.f32.mrf.mxu0
        %v2251 = vadd.f32 0.0, %v2250
        %2252 = vmatmul.f32.gmra.mxu0 %v2059
        %v2253 = vpop.f32.mrf.mxu0
        %v2254 = vadd.f32 0.0, %v2253
        %2255 = vmatmul.f32.gmra.mxu0 %v2062
        %v2256 = vpop.f32.mrf.mxu0
        %v2257 = vadd.f32 0.0, %v2256
        %2258 = vmatmul.f32.gmra.mxu0 %v2065
        %v2259 = vpop.f32.mrf.mxu0
        %v2260 = vadd.f32 0.0, %v2259
        %2261 = vmatmul.f32.gmra.mxu0 %v2068
        %v2262 = vpop.f32.mrf.mxu0
        %v2263 = vadd.f32 0.0, %v2262
        %2264 = vmatmul.f32.gmra.mxu0 %v2071
        %v2265 = vpop.f32.mrf.mxu0
        %v2266 = vadd.f32 0.0, %v2265
        %2267 = vmatmul.f32.gmra.mxu0 %v2074
        %v2268 = vpop.f32.mrf.mxu0
        %v2269 = vadd.f32 0.0, %v2268
        %2270 = vmatmul.f32.gmra.mxu0 %v2077
        %v2271 = vpop.f32.mrf.mxu0
        %v2272 = vadd.f32 0.0, %v2271
        %2273 = vmatmul.f32.gmra.mxu0 %v2080
        %v2274 = vpop.f32.mrf.mxu0
        %v2275 = vadd.f32 0.0, %v2274
        %2276 = vmatmul.f32.gmra.mxu0 %v2083
        %v2277 = vpop.f32.mrf.mxu0
        %v2278 = vadd.f32 0.0, %v2277
        %2279 = vmatmul.f32.gmra.mxu0 %v2086
        %v2280 = vpop.f32.mrf.mxu0
        %v2281 = vadd.f32 0.0, %v2280
        %2282 = vmatmul.f32.gmra.mxu0 %v2089
        %v2283 = vpop.f32.mrf.mxu0
        %v2284 = vadd.f32 0.0, %v2283
        %2285 = vdwg.mxu0
        %2286 = vmatpush.msra.mxu0 0.0
        %2287 = vmatpush.msra.mxu0 0.0
        %2288 = vmatpush.msra.mxu0 0.0
        %2289 = vmatpush.msra.mxu0 0.0
        %2290 = vmatpush.msra.mxu0 0.0
        %2291 = vmatpush.msra.mxu0 0.0
        %2292 = vmatpush.msra.mxu0 0.0
        %2293 = vmatpush.msra.mxu0 0.0
        %2294 = vmatpush.msra.mxu0 0.0
        %2295 = vmatpush.msra.mxu0 0.0
        %2296 = vmatpush.msra.mxu0 0.0
        %2297 = vmatpush.msra.mxu0 0.0
        %2298 = vmatpush.msra.mxu0 0.0
        %2299 = vmatpush.msra.mxu0 0.0
        %2300 = vmatpush.msra.mxu0 %v1710
        %2301 = vmatpush.msra.mxu0 %v1702
        %2302 = vmatmul.f32.gmra.mxu0 %v2044
        %v2303 = vpop.f32.mrf.mxu0
        %v2304 = vadd.f32 0.0, %v2303
        %2305 = vmatmul.f32.gmra.mxu0 %v2047
        %v2306 = vpop.f32.mrf.mxu0
        %v2307 = vadd.f32 0.0, %v2306
        %2308 = vmatmul.f32.gmra.mxu0 %v2050
        %v2309 = vpop.f32.mrf.mxu0
        %v2310 = vadd.f32 0.0, %v2309
        %2311 = vmatmul.f32.gmra.mxu0 %v2053
        %v2312 = vpop.f32.mrf.mxu0
        %v2313 = vadd.f32 0.0, %v2312
        %2314 = vmatmul.f32.gmra.mxu0 %v2056
        %v2315 = vpop.f32.mrf.mxu0
        %v2316 = vadd.f32 0.0, %v2315
        %2317 = vmatmul.f32.gmra.mxu0 %v2059
        %v2318 = vpop.f32.mrf.mxu0
        %v2319 = vadd.f32 0.0, %v2318
        %2320 = vmatmul.f32.gmra.mxu0 %v2062
        %v2321 = vpop.f32.mrf.mxu0
        %v2322 = vadd.f32 0.0, %v2321
        %2323 = vmatmul.f32.gmra.mxu0 %v2065
        %v2324 = vpop.f32.mrf.mxu0
        %v2325 = vadd.f32 0.0, %v2324
        %2326 = vmatmul.f32.gmra.mxu0 %v2068
        %v2327 = vpop.f32.mrf.mxu0
        %v2328 = vadd.f32 0.0, %v2327
        %2329 = vmatmul.f32.gmra.mxu0 %v2071
        %v2330 = vpop.f32.mrf.mxu0
        %v2331 = vadd.f32 0.0, %v2330
        %2332 = vmatmul.f32.gmra.mxu0 %v2074
        %v2333 = vpop.f32.mrf.mxu0
        %v2334 = vadd.f32 0.0, %v2333
        %2335 = vmatmul.f32.gmra.mxu0 %v2077
        %v2336 = vpop.f32.mrf.mxu0
        %v2337 = vadd.f32 0.0, %v2336
        %2338 = vmatmul.f32.gmra.mxu0 %v2080
        %v2339 = vpop.f32.mrf.mxu0
        %v2340 = vadd.f32 0.0, %v2339
        %2341 = vmatmul.f32.gmra.mxu0 %v2083
        %v2342 = vpop.f32.mrf.mxu0
        %v2343 = vadd.f32 0.0, %v2342
        %2344 = vmatmul.f32.gmra.mxu0 %v2086
        %v2345 = vpop.f32.mrf.mxu0
        %v2346 = vadd.f32 0.0, %v2345
        %2347 = vmatmul.f32.gmra.mxu0 %v2089
        %v2348 = vpop.f32.mrf.mxu0
        %v2349 = vadd.f32 0.0, %v2348
        %2350 = vdwg.mxu0
        %2351 = vmatpush.msra.mxu0 0.0
        %2352 = vmatpush.msra.mxu0 0.0
        %2353 = vmatpush.msra.mxu0 0.0
        %2354 = vmatpush.msra.mxu0 0.0
        %2355 = vmatpush.msra.mxu0 0.0
        %2356 = vmatpush.msra.mxu0 0.0
        %2357 = vmatpush.msra.mxu0 0.0
        %2358 = vmatpush.msra.mxu0 0.0
        %2359 = vmatpush.msra.mxu0 0.0
        %2360 = vmatpush.msra.mxu0 0.0
        %2361 = vmatpush.msra.mxu0 0.0
        %2362 = vmatpush.msra.mxu0 0.0
        %2363 = vmatpush.msra.mxu0 0.0
        %2364 = vmatpush.msra.mxu0 0.0
        %2365 = vmatpush.msra.mxu0 %v1711
        %2366 = vmatpush.msra.mxu0 %v1703
        %2367 = vmatmul.f32.gmra.mxu0 %v2044
        %v2368 = vpop.f32.mrf.mxu0
        %v2369 = vadd.f32 0.0, %v2368
        %2370 = vmatmul.f32.gmra.mxu0 %v2047
        %v2371 = vpop.f32.mrf.mxu0
        %v2372 = vadd.f32 0.0, %v2371
        %2373 = vmatmul.f32.gmra.mxu0 %v2050
        %v2374 = vpop.f32.mrf.mxu0
        %v2375 = vadd.f32 0.0, %v2374
        %2376 = vmatmul.f32.gmra.mxu0 %v2053
        %v2377 = vpop.f32.mrf.mxu0
        %v2378 = vadd.f32 0.0, %v2377
        %2379 = vmatmul.f32.gmra.mxu0 %v2056
        %v2380 = vpop.f32.mrf.mxu0
        %v2381 = vadd.f32 0.0, %v2380
        %2382 = vmatmul.f32.gmra.mxu0 %v2059
        %v2383 = vpop.f32.mrf.mxu0
        %v2384 = vadd.f32 0.0, %v2383
        %2385 = vmatmul.f32.gmra.mxu0 %v2062
        %v2386 = vpop.f32.mrf.mxu0
        %v2387 = vadd.f32 0.0, %v2386
        %2388 = vmatmul.f32.gmra.mxu0 %v2065
        %v2389 = vpop.f32.mrf.mxu0
        %v2390 = vadd.f32 0.0, %v2389
        %2391 = vmatmul.f32.gmra.mxu0 %v2068
        %v2392 = vpop.f32.mrf.mxu0
        %v2393 = vadd.f32 0.0, %v2392
        %2394 = vmatmul.f32.gmra.mxu0 %v2071
        %v2395 = vpop.f32.mrf.mxu0
        %v2396 = vadd.f32 0.0, %v2395
        %2397 = vmatmul.f32.gmra.mxu0 %v2074
        %v2398 = vpop.f32.mrf.mxu0
        %v2399 = vadd.f32 0.0, %v2398
        %2400 = vmatmul.f32.gmra.mxu0 %v2077
        %v2401 = vpop.f32.mrf.mxu0
        %v2402 = vadd.f32 0.0, %v2401
        %2403 = vmatmul.f32.gmra.mxu0 %v2080
        %v2404 = vpop.f32.mrf.mxu0
        %v2405 = vadd.f32 0.0, %v2404
        %2406 = vmatmul.f32.gmra.mxu0 %v2083
        %v2407 = vpop.f32.mrf.mxu0
        %v2408 = vadd.f32 0.0, %v2407
        %2409 = vmatmul.f32.gmra.mxu0 %v2086
        %v2410 = vpop.f32.mrf.mxu0
        %v2411 = vadd.f32 0.0, %v2410
        %2412 = vmatmul.f32.gmra.mxu0 %v2089
        %v2413 = vpop.f32.mrf.mxu0
        %v2414 = vadd.f32 0.0, %v2413
        %2415 = vdwg.mxu0
        %2416 = vmatpush.msra.mxu0 0.0
        %2417 = vmatpush.msra.mxu0 0.0
        %2418 = vmatpush.msra.mxu0 0.0
        %2419 = vmatpush.msra.mxu0 0.0
        %2420 = vmatpush.msra.mxu0 0.0
        %2421 = vmatpush.msra.mxu0 0.0
        %2422 = vmatpush.msra.mxu0 0.0
        %2423 = vmatpush.msra.mxu0 0.0
        %2424 = vmatpush.msra.mxu0 0.0
        %2425 = vmatpush.msra.mxu0 0.0
        %2426 = vmatpush.msra.mxu0 0.0
        %2427 = vmatpush.msra.mxu0 0.0
        %2428 = vmatpush.msra.mxu0 0.0
        %2429 = vmatpush.msra.mxu0 0.0
        %2430 = vmatpush.msra.mxu0 %v1712
        %2431 = vmatpush.msra.mxu0 %v1704
        %2432 = vmatmul.f32.gmra.mxu0 %v2044
        %v2433 = vpop.f32.mrf.mxu0
        %v2434 = vadd.f32 0.0, %v2433
        %2435 = vmatmul.f32.gmra.mxu0 %v2047
        %v2436 = vpop.f32.mrf.mxu0
        %v2437 = vadd.f32 0.0, %v2436
        %2438 = vmatmul.f32.gmra.mxu0 %v2050
        %v2439 = vpop.f32.mrf.mxu0
        %v2440 = vadd.f32 0.0, %v2439
        %2441 = vmatmul.f32.gmra.mxu0 %v2053
        %v2442 = vpop.f32.mrf.mxu0
        %v2443 = vadd.f32 0.0, %v2442
        %2444 = vmatmul.f32.gmra.mxu0 %v2056
        %v2445 = vpop.f32.mrf.mxu0
        %v2446 = vadd.f32 0.0, %v2445
        %2447 = vmatmul.f32.gmra.mxu0 %v2059
        %v2448 = vpop.f32.mrf.mxu0
        %v2449 = vadd.f32 0.0, %v2448
        %2450 = vmatmul.f32.gmra.mxu0 %v2062
        %v2451 = vpop.f32.mrf.mxu0
        %v2452 = vadd.f32 0.0, %v2451
        %2453 = vmatmul.f32.gmra.mxu0 %v2065
        %v2454 = vpop.f32.mrf.mxu0
        %v2455 = vadd.f32 0.0, %v2454
        %2456 = vmatmul.f32.gmra.mxu0 %v2068
        %v2457 = vpop.f32.mrf.mxu0
        %v2458 = vadd.f32 0.0, %v2457
        %2459 = vmatmul.f32.gmra.mxu0 %v2071
        %v2460 = vpop.f32.mrf.mxu0
        %v2461 = vadd.f32 0.0, %v2460
        %2462 = vmatmul.f32.gmra.mxu0 %v2074
        %v2463 = vpop.f32.mrf.mxu0
        %v2464 = vadd.f32 0.0, %v2463
        %2465 = vmatmul.f32.gmra.mxu0 %v2077
        %v2466 = vpop.f32.mrf.mxu0
        %v2467 = vadd.f32 0.0, %v2466
        %2468 = vmatmul.f32.gmra.mxu0 %v2080
        %v2469 = vpop.f32.mrf.mxu0
        %v2470 = vadd.f32 0.0, %v2469
        %2471 = vmatmul.f32.gmra.mxu0 %v2083
        %v2472 = vpop.f32.mrf.mxu0
        %v2473 = vadd.f32 0.0, %v2472
        %2474 = vmatmul.f32.gmra.mxu0 %v2086
        %v2475 = vpop.f32.mrf.mxu0
        %v2476 = vadd.f32 0.0, %v2475
        %2477 = vmatmul.f32.gmra.mxu0 %v2089
        %v2478 = vpop.f32.mrf.mxu0
        %v2479 = vadd.f32 0.0, %v2478
        %2480 = vdwg.mxu0
        %2481 = vmatpush.msra.mxu0 0.0
        %2482 = vmatpush.msra.mxu0 0.0
        %2483 = vmatpush.msra.mxu0 0.0
        %2484 = vmatpush.msra.mxu0 0.0
        %2485 = vmatpush.msra.mxu0 0.0
        %2486 = vmatpush.msra.mxu0 0.0
        %2487 = vmatpush.msra.mxu0 0.0
        %2488 = vmatpush.msra.mxu0 0.0
        %2489 = vmatpush.msra.mxu0 0.0
        %2490 = vmatpush.msra.mxu0 0.0
        %2491 = vmatpush.msra.mxu0 0.0
        %2492 = vmatpush.msra.mxu0 0.0
        %2493 = vmatpush.msra.mxu0 0.0
        %2494 = vmatpush.msra.mxu0 0.0
        %2495 = vmatpush.msra.mxu0 %v1713
        %2496 = vmatpush.msra.mxu0 %v1705
        %2497 = vmatmul.f32.gmra.mxu0 %v2044
        %v2498 = vpop.f32.mrf.mxu0
        %v2499 = vadd.f32 0.0, %v2498
        %2500 = vmatmul.f32.gmra.mxu0 %v2047
        %v2501 = vpop.f32.mrf.mxu0
        %v2502 = vadd.f32 0.0, %v2501
        %2503 = vmatmul.f32.gmra.mxu0 %v2050
        %v2504 = vpop.f32.mrf.mxu0
        %v2505 = vadd.f32 0.0, %v2504
        %2506 = vmatmul.f32.gmra.mxu0 %v2053
        %v2507 = vpop.f32.mrf.mxu0
        %v2508 = vadd.f32 0.0, %v2507
        %2509 = vmatmul.f32.gmra.mxu0 %v2056
        %v2510 = vpop.f32.mrf.mxu0
        %v2511 = vadd.f32 0.0, %v2510
        %2512 = vmatmul.f32.gmra.mxu0 %v2059
        %v2513 = vpop.f32.mrf.mxu0
        %v2514 = vadd.f32 0.0, %v2513
        %2515 = vmatmul.f32.gmra.mxu0 %v2062
        %v2516 = vpop.f32.mrf.mxu0
        %v2517 = vadd.f32 0.0, %v2516
        %2518 = vmatmul.f32.gmra.mxu0 %v2065
        %v2519 = vpop.f32.mrf.mxu0
        %v2520 = vadd.f32 0.0, %v2519
        %2521 = vmatmul.f32.gmra.mxu0 %v2068
        %v2522 = vpop.f32.mrf.mxu0
        %v2523 = vadd.f32 0.0, %v2522
        %2524 = vmatmul.f32.gmra.mxu0 %v2071
        %v2525 = vpop.f32.mrf.mxu0
        %v2526 = vadd.f32 0.0, %v2525
        %2527 = vmatmul.f32.gmra.mxu0 %v2074
        %v2528 = vpop.f32.mrf.mxu0
        %v2529 = vadd.f32 0.0, %v2528
        %2530 = vmatmul.f32.gmra.mxu0 %v2077
        %v2531 = vpop.f32.mrf.mxu0
        %v2532 = vadd.f32 0.0, %v2531
        %2533 = vmatmul.f32.gmra.mxu0 %v2080
        %v2534 = vpop.f32.mrf.mxu0
        %v2535 = vadd.f32 0.0, %v2534
        %2536 = vmatmul.f32.gmra.mxu0 %v2083
        %v2537 = vpop.f32.mrf.mxu0
        %v2538 = vadd.f32 0.0, %v2537
        %2539 = vmatmul.f32.gmra.mxu0 %v2086
        %v2540 = vpop.f32.mrf.mxu0
        %v2541 = vadd.f32 0.0, %v2540
        %2542 = vmatmul.f32.gmra.mxu0 %v2089
        %v2543 = vpop.f32.mrf.mxu0
        %v2544 = vadd.f32 0.0, %v2543
        %2545 = vdwg.mxu0
        %2546 = vmatpush.msra.mxu0 0.0
        %2547 = vmatpush.msra.mxu0 0.0
        %2548 = vmatpush.msra.mxu0 0.0
        %2549 = vmatpush.msra.mxu0 0.0
        %2550 = vmatpush.msra.mxu0 0.0
        %2551 = vmatpush.msra.mxu0 0.0
        %2552 = vmatpush.msra.mxu0 0.0
        %2553 = vmatpush.msra.mxu0 0.0
        %2554 = vmatpush.msra.mxu0 0.0
        %2555 = vmatpush.msra.mxu0 0.0
        %2556 = vmatpush.msra.mxu0 0.0
        %2557 = vmatpush.msra.mxu0 0.0
        %2558 = vmatpush.msra.mxu0 0.0
        %2559 = vmatpush.msra.mxu0 0.0
        %2560 = vmatpush.msra.mxu0 %v1714
        %2561 = vmatpush.msra.mxu0 %v1706
        %2562 = vmatmul.f32.gmra.mxu0 %v2044
        %v2563 = vpop.f32.mrf.mxu0
        %v2564 = vadd.f32 0.0, %v2563
        %2565 = vmatmul.f32.gmra.mxu0 %v2047
        %v2566 = vpop.f32.mrf.mxu0
        %v2567 = vadd.f32 0.0, %v2566
        %2568 = vmatmul.f32.gmra.mxu0 %v2050
        %v2569 = vpop.f32.mrf.mxu0
        %v2570 = vadd.f32 0.0, %v2569
        %2571 = vmatmul.f32.gmra.mxu0 %v2053
        %v2572 = vpop.f32.mrf.mxu0
        %v2573 = vadd.f32 0.0, %v2572
        %2574 = vmatmul.f32.gmra.mxu0 %v2056
        %v2575 = vpop.f32.mrf.mxu0
        %v2576 = vadd.f32 0.0, %v2575
        %2577 = vmatmul.f32.gmra.mxu0 %v2059
        %v2578 = vpop.f32.mrf.mxu0
        %v2579 = vadd.f32 0.0, %v2578
        %2580 = vmatmul.f32.gmra.mxu0 %v2062
        %v2581 = vpop.f32.mrf.mxu0
        %v2582 = vadd.f32 0.0, %v2581
        %2583 = vmatmul.f32.gmra.mxu0 %v2065
        %v2584 = vpop.f32.mrf.mxu0
        %v2585 = vadd.f32 0.0, %v2584
        %2586 = vmatmul.f32.gmra.mxu0 %v2068
        %v2587 = vpop.f32.mrf.mxu0
        %v2588 = vadd.f32 0.0, %v2587
        %2589 = vmatmul.f32.gmra.mxu0 %v2071
        %v2590 = vpop.f32.mrf.mxu0
        %v2591 = vadd.f32 0.0, %v2590
        %2592 = vmatmul.f32.gmra.mxu0 %v2074
        %v2593 = vpop.f32.mrf.mxu0
        %v2594 = vadd.f32 0.0, %v2593
        %2595 = vmatmul.f32.gmra.mxu0 %v2077
        %v2596 = vpop.f32.mrf.mxu0
        %v2597 = vadd.f32 0.0, %v2596
        %2598 = vmatmul.f32.gmra.mxu0 %v2080
        %v2599 = vpop.f32.mrf.mxu0
        %v2600 = vadd.f32 0.0, %v2599
        %2601 = vmatmul.f32.gmra.mxu0 %v2083
        %v2602 = vpop.f32.mrf.mxu0
        %v2603 = vadd.f32 0.0, %v2602
        %2604 = vmatmul.f32.gmra.mxu0 %v2086
        %v2605 = vpop.f32.mrf.mxu0
        %v2606 = vadd.f32 0.0, %v2605
        %2607 = vmatmul.f32.gmra.mxu0 %v2089
        %v2608 = vpop.f32.mrf.mxu0
        %v2609 = vadd.f32 0.0, %v2608
        %2610 = vdwg.mxu0
        %v2611 = vadd.f32 %v544, %v2109
        %v2612 = vadd.f32 %v609, %v2174
        %v2613 = vadd.f32 %v674, %v2239
        %v2614 = vadd.f32 %v739, %v2304
        %v2615 = vadd.f32 %v804, %v2369
        %v2616 = vadd.f32 %v869, %v2434
        %v2617 = vadd.f32 %v934, %v2499
        %v2618 = vadd.f32 %v999, %v2564
        %v2619 = vadd.f32 %v547, %v2112
        %v2620 = vadd.f32 %v612, %v2177
        %v2621 = vadd.f32 %v677, %v2242
        %v2622 = vadd.f32 %v742, %v2307
        %v2623 = vadd.f32 %v807, %v2372
        %v2624 = vadd.f32 %v872, %v2437
        %v2625 = vadd.f32 %v937, %v2502
        %v2626 = vadd.f32 %v1002, %v2567
        %v2627 = vadd.f32 %v550, %v2115
        %v2628 = vadd.f32 %v615, %v2180
        %v2629 = vadd.f32 %v680, %v2245
        %v2630 = vadd.f32 %v745, %v2310
        %v2631 = vadd.f32 %v810, %v2375
        %v2632 = vadd.f32 %v875, %v2440
        %v2633 = vadd.f32 %v940, %v2505
        %v2634 = vadd.f32 %v1005, %v2570
        %v2635 = vadd.f32 %v553, %v2118
        %v2636 = vadd.f32 %v618, %v2183
        %v2637 = vadd.f32 %v683, %v2248
        %v2638 = vadd.f32 %v748, %v2313
        %v2639 = vadd.f32 %v813, %v2378
        %v2640 = vadd.f32 %v878, %v2443
        %v2641 = vadd.f32 %v943, %v2508
        %v2642 = vadd.f32 %v1008, %v2573
        %v2643 = vadd.f32 %v556, %v2121
        %v2644 = vadd.f32 %v621, %v2186
        %v2645 = vadd.f32 %v686, %v2251
        %v2646 = vadd.f32 %v751, %v2316
        %v2647 = vadd.f32 %v816, %v2381
        %v2648 = vadd.f32 %v881, %v2446
        %v2649 = vadd.f32 %v946, %v2511
        %v2650 = vadd.f32 %v1011, %v2576
        %v2651 = vadd.f32 %v559, %v2124
        %v2652 = vadd.f32 %v624, %v2189
        %v2653 = vadd.f32 %v689, %v2254
        %v2654 = vadd.f32 %v754, %v2319
        %v2655 = vadd.f32 %v819, %v2384
        %v2656 = vadd.f32 %v884, %v2449
        %v2657 = vadd.f32 %v949, %v2514
        %v2658 = vadd.f32 %v1014, %v2579
        %v2659 = vadd.f32 %v562, %v2127
        %v2660 = vadd.f32 %v627, %v2192
        %v2661 = vadd.f32 %v692, %v2257
        %v2662 = vadd.f32 %v757, %v2322
        %v2663 = vadd.f32 %v822, %v2387
        %v2664 = vadd.f32 %v887, %v2452
        %v2665 = vadd.f32 %v952, %v2517
        %v2666 = vadd.f32 %v1017, %v2582
        %v2667 = vadd.f32 %v565, %v2130
        %v2668 = vadd.f32 %v630, %v2195
        %v2669 = vadd.f32 %v695, %v2260
        %v2670 = vadd.f32 %v760, %v2325
        %v2671 = vadd.f32 %v825, %v2390
        %v2672 = vadd.f32 %v890, %v2455
        %v2673 = vadd.f32 %v955, %v2520
        %v2674 = vadd.f32 %v1020, %v2585
        %v2675 = vadd.f32 %v568, %v2133
        %v2676 = vadd.f32 %v633, %v2198
        %v2677 = vadd.f32 %v698, %v2263
        %v2678 = vadd.f32 %v763, %v2328
        %v2679 = vadd.f32 %v828, %v2393
        %v2680 = vadd.f32 %v893, %v2458
        %v2681 = vadd.f32 %v958, %v2523
        %v2682 = vadd.f32 %v1023, %v2588
        %v2683 = vadd.f32 %v571, %v2136
        %v2684 = vadd.f32 %v636, %v2201
        %v2685 = vadd.f32 %v701, %v2266
        %v2686 = vadd.f32 %v766, %v2331
        %v2687 = vadd.f32 %v831, %v2396
        %v2688 = vadd.f32 %v896, %v2461
        %v2689 = vadd.f32 %v961, %v2526
        %v2690 = vadd.f32 %v1026, %v2591
        %v2691 = vadd.f32 %v574, %v2139
        %v2692 = vadd.f32 %v639, %v2204
        %v2693 = vadd.f32 %v704, %v2269
        %v2694 = vadd.f32 %v769, %v2334
        %v2695 = vadd.f32 %v834, %v2399
        %v2696 = vadd.f32 %v899, %v2464
        %v2697 = vadd.f32 %v964, %v2529
        %v2698 = vadd.f32 %v1029, %v2594
        %v2699 = vadd.f32 %v577, %v2142
        %v2700 = vadd.f32 %v642, %v2207
        %v2701 = vadd.f32 %v707, %v2272
        %v2702 = vadd.f32 %v772, %v2337
        %v2703 = vadd.f32 %v837, %v2402
        %v2704 = vadd.f32 %v902, %v2467
        %v2705 = vadd.f32 %v967, %v2532
        %v2706 = vadd.f32 %v1032, %v2597
        %v2707 = vadd.f32 %v580, %v2145
        %v2708 = vadd.f32 %v645, %v2210
        %v2709 = vadd.f32 %v710, %v2275
        %v2710 = vadd.f32 %v775, %v2340
        %v2711 = vadd.f32 %v840, %v2405
        %v2712 = vadd.f32 %v905, %v2470
        %v2713 = vadd.f32 %v970, %v2535
        %v2714 = vadd.f32 %v1035, %v2600
        %v2715 = vadd.f32 %v583, %v2148
        %v2716 = vadd.f32 %v648, %v2213
        %v2717 = vadd.f32 %v713, %v2278
        %v2718 = vadd.f32 %v778, %v2343
        %v2719 = vadd.f32 %v843, %v2408
        %v2720 = vadd.f32 %v908, %v2473
        %v2721 = vadd.f32 %v973, %v2538
        %v2722 = vadd.f32 %v1038, %v2603
        %v2723 = vadd.f32 %v586, %v2151
        %v2724 = vadd.f32 %v651, %v2216
        %v2725 = vadd.f32 %v716, %v2281
        %v2726 = vadd.f32 %v781, %v2346
        %v2727 = vadd.f32 %v846, %v2411
        %v2728 = vadd.f32 %v911, %v2476
        %v2729 = vadd.f32 %v976, %v2541
        %v2730 = vadd.f32 %v1041, %v2606
        %v2731 = vadd.f32 %v589, %v2154
        %v2732 = vadd.f32 %v654, %v2219
        %v2733 = vadd.f32 %v719, %v2284
        %v2734 = vadd.f32 %v784, %v2349
        %v2735 = vadd.f32 %v849, %v2414
        %v2736 = vadd.f32 %v914, %v2479
        %v2737 = vadd.f32 %v979, %v2544
        %v2738 = vadd.f32 %v1044, %v2609
        %v2739 = vld [vmem:[%s4] sm:$0xff]
        %v2740 = vld [vmem:[%s4 + $0x8] sm:$0xff]
        %v2741 = vld [vmem:[%s4 + $0x10] sm:$0xff]
        %v2742 = vld [vmem:[%s4 + $0x18] sm:$0xff]
        %v2743 = vld [vmem:[%s4 + $0x20] sm:$0xff]
        %v2744 = vld [vmem:[%s4 + $0x28] sm:$0xff]
        %v2745 = vld [vmem:[%s4 + $0x30] sm:$0xff]
        %v2746 = vld [vmem:[%s4 + $0x38] sm:$0xff]
        %v2747 = vld [vmem:[%s4 + $0x40] sm:$0xff]
        %v2748 = vld [vmem:[%s4 + $0x48] sm:$0xff]
        %v2749 = vld [vmem:[%s4 + $0x50] sm:$0xff]
        %v2750 = vld [vmem:[%s4 + $0x58] sm:$0xff]
        %v2751 = vld [vmem:[%s4 + $0x60] sm:$0xff]
        %v2752 = vld [vmem:[%s4 + $0x68] sm:$0xff]
        %v2753 = vld [vmem:[%s4 + $0x70] sm:$0xff]
        %v2754 = vld [vmem:[%s4 + $0x78] sm:$0xff]
        %v2756 = vsel %vm477, %v2739, 0
        %v2759 = vsel %vm477, %v2740, 0
        %v2762 = vsel %vm477, %v2741, 0
        %v2765 = vsel %vm477, %v2742, 0
        %v2768 = vsel %vm477, %v2743, 0
        %v2771 = vsel %vm477, %v2744, 0
        %v2774 = vsel %vm477, %v2745, 0
        %v2777 = vsel %vm477, %v2746, 0
        %v2780 = vsel %vm477, %v2747, 0
        %v2783 = vsel %vm477, %v2748, 0
        %v2786 = vsel %vm477, %v2749, 0
        %v2789 = vsel %vm477, %v2750, 0
        %v2792 = vsel %vm477, %v2751, 0
        %v2795 = vsel %vm477, %v2752, 0
        %v2798 = vsel %vm477, %v2753, 0
        %v2801 = vsel %vm477, %v2754, 0
        %2803 = vmatpush.msra.mxu0 0.0
        %2804 = vmatpush.msra.mxu0 0.0
        %2805 = vmatpush.msra.mxu0 0.0
        %2806 = vmatpush.msra.mxu0 0.0
        %2807 = vmatpush.msra.mxu0 0.0
        %2808 = vmatpush.msra.mxu0 0.0
        %2809 = vmatpush.msra.mxu0 0.0
        %2810 = vmatpush.msra.mxu0 0.0
        %2811 = vmatpush.msra.mxu0 0.0
        %2812 = vmatpush.msra.mxu0 0.0
        %2813 = vmatpush.msra.mxu0 0.0
        %2814 = vmatpush.msra.mxu0 0.0
        %2815 = vmatpush.msra.mxu0 0.0
        %2816 = vmatpush.msra.mxu0 0.0
        %2817 = vmatpush.msra.mxu0 %v1515
        %2818 = vmatpush.msra.mxu0 %v1507
        %2819 = vmatmul.f32.gmra.mxu0 %v2756
        %v2820 = vpop.f32.mrf.mxu0
        %v2821 = vadd.f32 0.0, %v2820
        %2822 = vmatmul.f32.gmra.mxu0 %v2759
        %v2823 = vpop.f32.mrf.mxu0
        %v2824 = vadd.f32 0.0, %v2823
        %2825 = vmatmul.f32.gmra.mxu0 %v2762
        %v2826 = vpop.f32.mrf.mxu0
        %v2827 = vadd.f32 0.0, %v2826
        %2828 = vmatmul.f32.gmra.mxu0 %v2765
        %v2829 = vpop.f32.mrf.mxu0
        %v2830 = vadd.f32 0.0, %v2829
        %2831 = vmatmul.f32.gmra.mxu0 %v2768
        %v2832 = vpop.f32.mrf.mxu0
        %v2833 = vadd.f32 0.0, %v2832
        %2834 = vmatmul.f32.gmra.mxu0 %v2771
        %v2835 = vpop.f32.mrf.mxu0
        %v2836 = vadd.f32 0.0, %v2835
        %2837 = vmatmul.f32.gmra.mxu0 %v2774
        %v2838 = vpop.f32.mrf.mxu0
        %v2839 = vadd.f32 0.0, %v2838
        %2840 = vmatmul.f32.gmra.mxu0 %v2777
        %v2841 = vpop.f32.mrf.mxu0
        %v2842 = vadd.f32 0.0, %v2841
        %2843 = vmatmul.f32.gmra.mxu0 %v2780
        %v2844 = vpop.f32.mrf.mxu0
        %v2845 = vadd.f32 0.0, %v2844
        %2846 = vmatmul.f32.gmra.mxu0 %v2783
        %v2847 = vpop.f32.mrf.mxu0
        %v2848 = vadd.f32 0.0, %v2847
        %2849 = vmatmul.f32.gmra.mxu0 %v2786
        %v2850 = vpop.f32.mrf.mxu0
        %v2851 = vadd.f32 0.0, %v2850
        %2852 = vmatmul.f32.gmra.mxu0 %v2789
        %v2853 = vpop.f32.mrf.mxu0
        %v2854 = vadd.f32 0.0, %v2853
        %2855 = vmatmul.f32.gmra.mxu0 %v2792
        %v2856 = vpop.f32.mrf.mxu0
        %v2857 = vadd.f32 0.0, %v2856
        %2858 = vmatmul.f32.gmra.mxu0 %v2795
        %v2859 = vpop.f32.mrf.mxu0
        %v2860 = vadd.f32 0.0, %v2859
        %2861 = vmatmul.f32.gmra.mxu0 %v2798
        %v2862 = vpop.f32.mrf.mxu0
        %v2863 = vadd.f32 0.0, %v2862
        %2864 = vmatmul.f32.gmra.mxu0 %v2801
        %v2865 = vpop.f32.mrf.mxu0
        %v2866 = vadd.f32 0.0, %v2865
        %2867 = vdwg.mxu0
        %2868 = vmatpush.msra.mxu0 0.0
        %2869 = vmatpush.msra.mxu0 0.0
        %2870 = vmatpush.msra.mxu0 0.0
        %2871 = vmatpush.msra.mxu0 0.0
        %2872 = vmatpush.msra.mxu0 0.0
        %2873 = vmatpush.msra.mxu0 0.0
        %2874 = vmatpush.msra.mxu0 0.0
        %2875 = vmatpush.msra.mxu0 0.0
        %2876 = vmatpush.msra.mxu0 0.0
        %2877 = vmatpush.msra.mxu0 0.0
        %2878 = vmatpush.msra.mxu0 0.0
        %2879 = vmatpush.msra.mxu0 0.0
        %2880 = vmatpush.msra.mxu0 0.0
        %2881 = vmatpush.msra.mxu0 0.0
        %2882 = vmatpush.msra.mxu0 %v1516
        %2883 = vmatpush.msra.mxu0 %v1508
        %2884 = vmatmul.f32.gmra.mxu0 %v2756
        %v2885 = vpop.f32.mrf.mxu0
        %v2886 = vadd.f32 0.0, %v2885
        %2887 = vmatmul.f32.gmra.mxu0 %v2759
        %v2888 = vpop.f32.mrf.mxu0
        %v2889 = vadd.f32 0.0, %v2888
        %2890 = vmatmul.f32.gmra.mxu0 %v2762
        %v2891 = vpop.f32.mrf.mxu0
        %v2892 = vadd.f32 0.0, %v2891
        %2893 = vmatmul.f32.gmra.mxu0 %v2765
        %v2894 = vpop.f32.mrf.mxu0
        %v2895 = vadd.f32 0.0, %v2894
        %2896 = vmatmul.f32.gmra.mxu0 %v2768
        %v2897 = vpop.f32.mrf.mxu0
        %v2898 = vadd.f32 0.0, %v2897
        %2899 = vmatmul.f32.gmra.mxu0 %v2771
        %v2900 = vpop.f32.mrf.mxu0
        %v2901 = vadd.f32 0.0, %v2900
        %2902 = vmatmul.f32.gmra.mxu0 %v2774
        %v2903 = vpop.f32.mrf.mxu0
        %v2904 = vadd.f32 0.0, %v2903
        %2905 = vmatmul.f32.gmra.mxu0 %v2777
        %v2906 = vpop.f32.mrf.mxu0
        %v2907 = vadd.f32 0.0, %v2906
        %2908 = vmatmul.f32.gmra.mxu0 %v2780
        %v2909 = vpop.f32.mrf.mxu0
        %v2910 = vadd.f32 0.0, %v2909
        %2911 = vmatmul.f32.gmra.mxu0 %v2783
        %v2912 = vpop.f32.mrf.mxu0
        %v2913 = vadd.f32 0.0, %v2912
        %2914 = vmatmul.f32.gmra.mxu0 %v2786
        %v2915 = vpop.f32.mrf.mxu0
        %v2916 = vadd.f32 0.0, %v2915
        %2917 = vmatmul.f32.gmra.mxu0 %v2789
        %v2918 = vpop.f32.mrf.mxu0
        %v2919 = vadd.f32 0.0, %v2918
        %2920 = vmatmul.f32.gmra.mxu0 %v2792
        %v2921 = vpop.f32.mrf.mxu0
        %v2922 = vadd.f32 0.0, %v2921
        %2923 = vmatmul.f32.gmra.mxu0 %v2795
        %v2924 = vpop.f32.mrf.mxu0
        %v2925 = vadd.f32 0.0, %v2924
        %2926 = vmatmul.f32.gmra.mxu0 %v2798
        %v2927 = vpop.f32.mrf.mxu0
        %v2928 = vadd.f32 0.0, %v2927
        %2929 = vmatmul.f32.gmra.mxu0 %v2801
        %v2930 = vpop.f32.mrf.mxu0
        %v2931 = vadd.f32 0.0, %v2930
        %2932 = vdwg.mxu0
        %2933 = vmatpush.msra.mxu0 0.0
        %2934 = vmatpush.msra.mxu0 0.0
        %2935 = vmatpush.msra.mxu0 0.0
        %2936 = vmatpush.msra.mxu0 0.0
        %2937 = vmatpush.msra.mxu0 0.0
        %2938 = vmatpush.msra.mxu0 0.0
        %2939 = vmatpush.msra.mxu0 0.0
        %2940 = vmatpush.msra.mxu0 0.0
        %2941 = vmatpush.msra.mxu0 0.0
        %2942 = vmatpush.msra.mxu0 0.0
        %2943 = vmatpush.msra.mxu0 0.0
        %2944 = vmatpush.msra.mxu0 0.0
        %2945 = vmatpush.msra.mxu0 0.0
        %2946 = vmatpush.msra.mxu0 0.0
        %2947 = vmatpush.msra.mxu0 %v1517
        %2948 = vmatpush.msra.mxu0 %v1509
        %2949 = vmatmul.f32.gmra.mxu0 %v2756
        %v2950 = vpop.f32.mrf.mxu0
        %v2951 = vadd.f32 0.0, %v2950
        %2952 = vmatmul.f32.gmra.mxu0 %v2759
        %v2953 = vpop.f32.mrf.mxu0
        %v2954 = vadd.f32 0.0, %v2953
        %2955 = vmatmul.f32.gmra.mxu0 %v2762
        %v2956 = vpop.f32.mrf.mxu0
        %v2957 = vadd.f32 0.0, %v2956
        %2958 = vmatmul.f32.gmra.mxu0 %v2765
        %v2959 = vpop.f32.mrf.mxu0
        %v2960 = vadd.f32 0.0, %v2959
        %2961 = vmatmul.f32.gmra.mxu0 %v2768
        %v2962 = vpop.f32.mrf.mxu0
        %v2963 = vadd.f32 0.0, %v2962
        %2964 = vmatmul.f32.gmra.mxu0 %v2771
        %v2965 = vpop.f32.mrf.mxu0
        %v2966 = vadd.f32 0.0, %v2965
        %2967 = vmatmul.f32.gmra.mxu0 %v2774
        %v2968 = vpop.f32.mrf.mxu0
        %v2969 = vadd.f32 0.0, %v2968
        %2970 = vmatmul.f32.gmra.mxu0 %v2777
        %v2971 = vpop.f32.mrf.mxu0
        %v2972 = vadd.f32 0.0, %v2971
        %2973 = vmatmul.f32.gmra.mxu0 %v2780
        %v2974 = vpop.f32.mrf.mxu0
        %v2975 = vadd.f32 0.0, %v2974
        %2976 = vmatmul.f32.gmra.mxu0 %v2783
        %v2977 = vpop.f32.mrf.mxu0
        %v2978 = vadd.f32 0.0, %v2977
        %2979 = vmatmul.f32.gmra.mxu0 %v2786
        %v2980 = vpop.f32.mrf.mxu0
        %v2981 = vadd.f32 0.0, %v2980
        %2982 = vmatmul.f32.gmra.mxu0 %v2789
        %v2983 = vpop.f32.mrf.mxu0
        %v2984 = vadd.f32 0.0, %v2983
        %2985 = vmatmul.f32.gmra.mxu0 %v2792
        %v2986 = vpop.f32.mrf.mxu0
        %v2987 = vadd.f32 0.0, %v2986
        %2988 = vmatmul.f32.gmra.mxu0 %v2795
        %v2989 = vpop.f32.mrf.mxu0
        %v2990 = vadd.f32 0.0, %v2989
        %2991 = vmatmul.f32.gmra.mxu0 %v2798
        %v2992 = vpop.f32.mrf.mxu0
        %v2993 = vadd.f32 0.0, %v2992
        %2994 = vmatmul.f32.gmra.mxu0 %v2801
        %v2995 = vpop.f32.mrf.mxu0
        %v2996 = vadd.f32 0.0, %v2995
        %2997 = vdwg.mxu0
        %2998 = vmatpush.msra.mxu0 0.0
        %2999 = vmatpush.msra.mxu0 0.0
        %3000 = vmatpush.msra.mxu0 0.0
        %3001 = vmatpush.msra.mxu0 0.0
        %3002 = vmatpush.msra.mxu0 0.0
        %3003 = vmatpush.msra.mxu0 0.0
        %3004 = vmatpush.msra.mxu0 0.0
        %3005 = vmatpush.msra.mxu0 0.0
        %3006 = vmatpush.msra.mxu0 0.0
        %3007 = vmatpush.msra.mxu0 0.0
        %3008 = vmatpush.msra.mxu0 0.0
        %3009 = vmatpush.msra.mxu0 0.0
        %3010 = vmatpush.msra.mxu0 0.0
        %3011 = vmatpush.msra.mxu0 0.0
        %3012 = vmatpush.msra.mxu0 %v1518
        %3013 = vmatpush.msra.mxu0 %v1510
        %3014 = vmatmul.f32.gmra.mxu0 %v2756
        %v3015 = vpop.f32.mrf.mxu0
        %v3016 = vadd.f32 0.0, %v3015
        %3017 = vmatmul.f32.gmra.mxu0 %v2759
        %v3018 = vpop.f32.mrf.mxu0
        %v3019 = vadd.f32 0.0, %v3018
        %3020 = vmatmul.f32.gmra.mxu0 %v2762
        %v3021 = vpop.f32.mrf.mxu0
        %v3022 = vadd.f32 0.0, %v3021
        %3023 = vmatmul.f32.gmra.mxu0 %v2765
        %v3024 = vpop.f32.mrf.mxu0
        %v3025 = vadd.f32 0.0, %v3024
        %3026 = vmatmul.f32.gmra.mxu0 %v2768
        %v3027 = vpop.f32.mrf.mxu0
        %v3028 = vadd.f32 0.0, %v3027
        %3029 = vmatmul.f32.gmra.mxu0 %v2771
        %v3030 = vpop.f32.mrf.mxu0
        %v3031 = vadd.f32 0.0, %v3030
        %3032 = vmatmul.f32.gmra.mxu0 %v2774
        %v3033 = vpop.f32.mrf.mxu0
        %v3034 = vadd.f32 0.0, %v3033
        %3035 = vmatmul.f32.gmra.mxu0 %v2777
        %v3036 = vpop.f32.mrf.mxu0
        %v3037 = vadd.f32 0.0, %v3036
        %3038 = vmatmul.f32.gmra.mxu0 %v2780
        %v3039 = vpop.f32.mrf.mxu0
        %v3040 = vadd.f32 0.0, %v3039
        %3041 = vmatmul.f32.gmra.mxu0 %v2783
        %v3042 = vpop.f32.mrf.mxu0
        %v3043 = vadd.f32 0.0, %v3042
        %3044 = vmatmul.f32.gmra.mxu0 %v2786
        %v3045 = vpop.f32.mrf.mxu0
        %v3046 = vadd.f32 0.0, %v3045
        %3047 = vmatmul.f32.gmra.mxu0 %v2789
        %v3048 = vpop.f32.mrf.mxu0
        %v3049 = vadd.f32 0.0, %v3048
        %3050 = vmatmul.f32.gmra.mxu0 %v2792
        %v3051 = vpop.f32.mrf.mxu0
        %v3052 = vadd.f32 0.0, %v3051
        %3053 = vmatmul.f32.gmra.mxu0 %v2795
        %v3054 = vpop.f32.mrf.mxu0
        %v3055 = vadd.f32 0.0, %v3054
        %3056 = vmatmul.f32.gmra.mxu0 %v2798
        %v3057 = vpop.f32.mrf.mxu0
        %v3058 = vadd.f32 0.0, %v3057
        %3059 = vmatmul.f32.gmra.mxu0 %v2801
        %v3060 = vpop.f32.mrf.mxu0
        %v3061 = vadd.f32 0.0, %v3060
        %3062 = vdwg.mxu0
        %3063 = vmatpush.msra.mxu0 0.0
        %3064 = vmatpush.msra.mxu0 0.0
        %3065 = vmatpush.msra.mxu0 0.0
        %3066 = vmatpush.msra.mxu0 0.0
        %3067 = vmatpush.msra.mxu0 0.0
        %3068 = vmatpush.msra.mxu0 0.0
        %3069 = vmatpush.msra.mxu0 0.0
        %3070 = vmatpush.msra.mxu0 0.0
        %3071 = vmatpush.msra.mxu0 0.0
        %3072 = vmatpush.msra.mxu0 0.0
        %3073 = vmatpush.msra.mxu0 0.0
        %3074 = vmatpush.msra.mxu0 0.0
        %3075 = vmatpush.msra.mxu0 0.0
        %3076 = vmatpush.msra.mxu0 0.0
        %3077 = vmatpush.msra.mxu0 %v1519
        %3078 = vmatpush.msra.mxu0 %v1511
        %3079 = vmatmul.f32.gmra.mxu0 %v2756
        %v3080 = vpop.f32.mrf.mxu0
        %v3081 = vadd.f32 0.0, %v3080
        %3082 = vmatmul.f32.gmra.mxu0 %v2759
        %v3083 = vpop.f32.mrf.mxu0
        %v3084 = vadd.f32 0.0, %v3083
        %3085 = vmatmul.f32.gmra.mxu0 %v2762
        %v3086 = vpop.f32.mrf.mxu0
        %v3087 = vadd.f32 0.0, %v3086
        %3088 = vmatmul.f32.gmra.mxu0 %v2765
        %v3089 = vpop.f32.mrf.mxu0
        %v3090 = vadd.f32 0.0, %v3089
        %3091 = vmatmul.f32.gmra.mxu0 %v2768
        %v3092 = vpop.f32.mrf.mxu0
        %v3093 = vadd.f32 0.0, %v3092
        %3094 = vmatmul.f32.gmra.mxu0 %v2771
        %v3095 = vpop.f32.mrf.mxu0
        %v3096 = vadd.f32 0.0, %v3095
        %3097 = vmatmul.f32.gmra.mxu0 %v2774
        %v3098 = vpop.f32.mrf.mxu0
        %v3099 = vadd.f32 0.0, %v3098
        %3100 = vmatmul.f32.gmra.mxu0 %v2777
        %v3101 = vpop.f32.mrf.mxu0
        %v3102 = vadd.f32 0.0, %v3101
        %3103 = vmatmul.f32.gmra.mxu0 %v2780
        %v3104 = vpop.f32.mrf.mxu0
        %v3105 = vadd.f32 0.0, %v3104
        %3106 = vmatmul.f32.gmra.mxu0 %v2783
        %v3107 = vpop.f32.mrf.mxu0
        %v3108 = vadd.f32 0.0, %v3107
        %3109 = vmatmul.f32.gmra.mxu0 %v2786
        %v3110 = vpop.f32.mrf.mxu0
        %v3111 = vadd.f32 0.0, %v3110
        %3112 = vmatmul.f32.gmra.mxu0 %v2789
        %v3113 = vpop.f32.mrf.mxu0
        %v3114 = vadd.f32 0.0, %v3113
        %3115 = vmatmul.f32.gmra.mxu0 %v2792
        %v3116 = vpop.f32.mrf.mxu0
        %v3117 = vadd.f32 0.0, %v3116
        %3118 = vmatmul.f32.gmra.mxu0 %v2795
        %v3119 = vpop.f32.mrf.mxu0
        %v3120 = vadd.f32 0.0, %v3119
        %3121 = vmatmul.f32.gmra.mxu0 %v2798
        %v3122 = vpop.f32.mrf.mxu0
        %v3123 = vadd.f32 0.0, %v3122
        %3124 = vmatmul.f32.gmra.mxu0 %v2801
        %v3125 = vpop.f32.mrf.mxu0
        %v3126 = vadd.f32 0.0, %v3125
        %3127 = vdwg.mxu0
        %3128 = vmatpush.msra.mxu0 0.0
        %3129 = vmatpush.msra.mxu0 0.0
        %3130 = vmatpush.msra.mxu0 0.0
        %3131 = vmatpush.msra.mxu0 0.0
        %3132 = vmatpush.msra.mxu0 0.0
        %3133 = vmatpush.msra.mxu0 0.0
        %3134 = vmatpush.msra.mxu0 0.0
        %3135 = vmatpush.msra.mxu0 0.0
        %3136 = vmatpush.msra.mxu0 0.0
        %3137 = vmatpush.msra.mxu0 0.0
        %3138 = vmatpush.msra.mxu0 0.0
        %3139 = vmatpush.msra.mxu0 0.0
        %3140 = vmatpush.msra.mxu0 0.0
        %3141 = vmatpush.msra.mxu0 0.0
        %3142 = vmatpush.msra.mxu0 %v1520
        %3143 = vmatpush.msra.mxu0 %v1512
        %3144 = vmatmul.f32.gmra.mxu0 %v2756
        %v3145 = vpop.f32.mrf.mxu0
        %v3146 = vadd.f32 0.0, %v3145
        %3147 = vmatmul.f32.gmra.mxu0 %v2759
        %v3148 = vpop.f32.mrf.mxu0
        %v3149 = vadd.f32 0.0, %v3148
        %3150 = vmatmul.f32.gmra.mxu0 %v2762
        %v3151 = vpop.f32.mrf.mxu0
        %v3152 = vadd.f32 0.0, %v3151
        %3153 = vmatmul.f32.gmra.mxu0 %v2765
        %v3154 = vpop.f32.mrf.mxu0
        %v3155 = vadd.f32 0.0, %v3154
        %3156 = vmatmul.f32.gmra.mxu0 %v2768
        %v3157 = vpop.f32.mrf.mxu0
        %v3158 = vadd.f32 0.0, %v3157
        %3159 = vmatmul.f32.gmra.mxu0 %v2771
        %v3160 = vpop.f32.mrf.mxu0
        %v3161 = vadd.f32 0.0, %v3160
        %3162 = vmatmul.f32.gmra.mxu0 %v2774
        %v3163 = vpop.f32.mrf.mxu0
        %v3164 = vadd.f32 0.0, %v3163
        %3165 = vmatmul.f32.gmra.mxu0 %v2777
        %v3166 = vpop.f32.mrf.mxu0
        %v3167 = vadd.f32 0.0, %v3166
        %3168 = vmatmul.f32.gmra.mxu0 %v2780
        %v3169 = vpop.f32.mrf.mxu0
        %v3170 = vadd.f32 0.0, %v3169
        %3171 = vmatmul.f32.gmra.mxu0 %v2783
        %v3172 = vpop.f32.mrf.mxu0
        %v3173 = vadd.f32 0.0, %v3172
        %3174 = vmatmul.f32.gmra.mxu0 %v2786
        %v3175 = vpop.f32.mrf.mxu0
        %v3176 = vadd.f32 0.0, %v3175
        %3177 = vmatmul.f32.gmra.mxu0 %v2789
        %v3178 = vpop.f32.mrf.mxu0
        %v3179 = vadd.f32 0.0, %v3178
        %3180 = vmatmul.f32.gmra.mxu0 %v2792
        %v3181 = vpop.f32.mrf.mxu0
        %v3182 = vadd.f32 0.0, %v3181
        %3183 = vmatmul.f32.gmra.mxu0 %v2795
        %v3184 = vpop.f32.mrf.mxu0
        %v3185 = vadd.f32 0.0, %v3184
        %3186 = vmatmul.f32.gmra.mxu0 %v2798
        %v3187 = vpop.f32.mrf.mxu0
        %v3188 = vadd.f32 0.0, %v3187
        %3189 = vmatmul.f32.gmra.mxu0 %v2801
        %v3190 = vpop.f32.mrf.mxu0
        %v3191 = vadd.f32 0.0, %v3190
        %3192 = vdwg.mxu0
        %3193 = vmatpush.msra.mxu0 0.0
        %3194 = vmatpush.msra.mxu0 0.0
        %3195 = vmatpush.msra.mxu0 0.0
        %3196 = vmatpush.msra.mxu0 0.0
        %3197 = vmatpush.msra.mxu0 0.0
        %3198 = vmatpush.msra.mxu0 0.0
        %3199 = vmatpush.msra.mxu0 0.0
        %3200 = vmatpush.msra.mxu0 0.0
        %3201 = vmatpush.msra.mxu0 0.0
        %3202 = vmatpush.msra.mxu0 0.0
        %3203 = vmatpush.msra.mxu0 0.0
        %3204 = vmatpush.msra.mxu0 0.0
        %3205 = vmatpush.msra.mxu0 0.0
        %3206 = vmatpush.msra.mxu0 0.0
        %3207 = vmatpush.msra.mxu0 %v1521
        %3208 = vmatpush.msra.mxu0 %v1513
        %3209 = vmatmul.f32.gmra.mxu0 %v2756
        %v3210 = vpop.f32.mrf.mxu0
        %v3211 = vadd.f32 0.0, %v3210
        %3212 = vmatmul.f32.gmra.mxu0 %v2759
        %v3213 = vpop.f32.mrf.mxu0
        %v3214 = vadd.f32 0.0, %v3213
        %3215 = vmatmul.f32.gmra.mxu0 %v2762
        %v3216 = vpop.f32.mrf.mxu0
        %v3217 = vadd.f32 0.0, %v3216
        %3218 = vmatmul.f32.gmra.mxu0 %v2765
        %v3219 = vpop.f32.mrf.mxu0
        %v3220 = vadd.f32 0.0, %v3219
        %3221 = vmatmul.f32.gmra.mxu0 %v2768
        %v3222 = vpop.f32.mrf.mxu0
        %v3223 = vadd.f32 0.0, %v3222
        %3224 = vmatmul.f32.gmra.mxu0 %v2771
        %v3225 = vpop.f32.mrf.mxu0
        %v3226 = vadd.f32 0.0, %v3225
        %3227 = vmatmul.f32.gmra.mxu0 %v2774
        %v3228 = vpop.f32.mrf.mxu0
        %v3229 = vadd.f32 0.0, %v3228
        %3230 = vmatmul.f32.gmra.mxu0 %v2777
        %v3231 = vpop.f32.mrf.mxu0
        %v3232 = vadd.f32 0.0, %v3231
        %3233 = vmatmul.f32.gmra.mxu0 %v2780
        %v3234 = vpop.f32.mrf.mxu0
        %v3235 = vadd.f32 0.0, %v3234
        %3236 = vmatmul.f32.gmra.mxu0 %v2783
        %v3237 = vpop.f32.mrf.mxu0
        %v3238 = vadd.f32 0.0, %v3237
        %3239 = vmatmul.f32.gmra.mxu0 %v2786
        %v3240 = vpop.f32.mrf.mxu0
        %v3241 = vadd.f32 0.0, %v3240
        %3242 = vmatmul.f32.gmra.mxu0 %v2789
        %v3243 = vpop.f32.mrf.mxu0
        %v3244 = vadd.f32 0.0, %v3243
        %3245 = vmatmul.f32.gmra.mxu0 %v2792
        %v3246 = vpop.f32.mrf.mxu0
        %v3247 = vadd.f32 0.0, %v3246
        %3248 = vmatmul.f32.gmra.mxu0 %v2795
        %v3249 = vpop.f32.mrf.mxu0
        %v3250 = vadd.f32 0.0, %v3249
        %3251 = vmatmul.f32.gmra.mxu0 %v2798
        %v3252 = vpop.f32.mrf.mxu0
        %v3253 = vadd.f32 0.0, %v3252
        %3254 = vmatmul.f32.gmra.mxu0 %v2801
        %v3255 = vpop.f32.mrf.mxu0
        %v3256 = vadd.f32 0.0, %v3255
        %3257 = vdwg.mxu0
        %3258 = vmatpush.msra.mxu0 0.0
        %3259 = vmatpush.msra.mxu0 0.0
        %3260 = vmatpush.msra.mxu0 0.0
        %3261 = vmatpush.msra.mxu0 0.0
        %3262 = vmatpush.msra.mxu0 0.0
        %3263 = vmatpush.msra.mxu0 0.0
        %3264 = vmatpush.msra.mxu0 0.0
        %3265 = vmatpush.msra.mxu0 0.0
        %3266 = vmatpush.msra.mxu0 0.0
        %3267 = vmatpush.msra.mxu0 0.0
        %3268 = vmatpush.msra.mxu0 0.0
        %3269 = vmatpush.msra.mxu0 0.0
        %3270 = vmatpush.msra.mxu0 0.0
        %3271 = vmatpush.msra.mxu0 0.0
        %3272 = vmatpush.msra.mxu0 %v1522
        %3273 = vmatpush.msra.mxu0 %v1514
        %3274 = vmatmul.f32.gmra.mxu0 %v2756
        %v3275 = vpop.f32.mrf.mxu0
        %v3276 = vadd.f32 0.0, %v3275
        %3277 = vmatmul.f32.gmra.mxu0 %v2759
        %v3278 = vpop.f32.mrf.mxu0
        %v3279 = vadd.f32 0.0, %v3278
        %3280 = vmatmul.f32.gmra.mxu0 %v2762
        %v3281 = vpop.f32.mrf.mxu0
        %v3282 = vadd.f32 0.0, %v3281
        %3283 = vmatmul.f32.gmra.mxu0 %v2765
        %v3284 = vpop.f32.mrf.mxu0
        %v3285 = vadd.f32 0.0, %v3284
        %3286 = vmatmul.f32.gmra.mxu0 %v2768
        %v3287 = vpop.f32.mrf.mxu0
        %v3288 = vadd.f32 0.0, %v3287
        %3289 = vmatmul.f32.gmra.mxu0 %v2771
        %v3290 = vpop.f32.mrf.mxu0
        %v3291 = vadd.f32 0.0, %v3290
        %3292 = vmatmul.f32.gmra.mxu0 %v2774
        %v3293 = vpop.f32.mrf.mxu0
        %v3294 = vadd.f32 0.0, %v3293
        %3295 = vmatmul.f32.gmra.mxu0 %v2777
        %v3296 = vpop.f32.mrf.mxu0
        %v3297 = vadd.f32 0.0, %v3296
        %3298 = vmatmul.f32.gmra.mxu0 %v2780
        %v3299 = vpop.f32.mrf.mxu0
        %v3300 = vadd.f32 0.0, %v3299
        %3301 = vmatmul.f32.gmra.mxu0 %v2783
        %v3302 = vpop.f32.mrf.mxu0
        %v3303 = vadd.f32 0.0, %v3302
        %3304 = vmatmul.f32.gmra.mxu0 %v2786
        %v3305 = vpop.f32.mrf.mxu0
        %v3306 = vadd.f32 0.0, %v3305
        %3307 = vmatmul.f32.gmra.mxu0 %v2789
        %v3308 = vpop.f32.mrf.mxu0
        %v3309 = vadd.f32 0.0, %v3308
        %3310 = vmatmul.f32.gmra.mxu0 %v2792
        %v3311 = vpop.f32.mrf.mxu0
        %v3312 = vadd.f32 0.0, %v3311
        %3313 = vmatmul.f32.gmra.mxu0 %v2795
        %v3314 = vpop.f32.mrf.mxu0
        %v3315 = vadd.f32 0.0, %v3314
        %3316 = vmatmul.f32.gmra.mxu0 %v2798
        %v3317 = vpop.f32.mrf.mxu0
        %v3318 = vadd.f32 0.0, %v3317
        %3319 = vmatmul.f32.gmra.mxu0 %v2801
        %v3320 = vpop.f32.mrf.mxu0
        %v3321 = vadd.f32 0.0, %v3320
        %3322 = vdwg.mxu0
        %v3323 = vadd.f32 %v2611, %v2821
        %v3324 = vadd.f32 %v2612, %v2886
        %v3325 = vadd.f32 %v2613, %v2951
        %v3326 = vadd.f32 %v2614, %v3016
        %v3327 = vadd.f32 %v2615, %v3081
        %v3328 = vadd.f32 %v2616, %v3146
        %v3329 = vadd.f32 %v2617, %v3211
        %v3330 = vadd.f32 %v2618, %v3276
        %v3331 = vadd.f32 %v2619, %v2824
        %v3332 = vadd.f32 %v2620, %v2889
        %v3333 = vadd.f32 %v2621, %v2954
        %v3334 = vadd.f32 %v2622, %v3019
        %v3335 = vadd.f32 %v2623, %v3084
        %v3336 = vadd.f32 %v2624, %v3149
        %v3337 = vadd.f32 %v2625, %v3214
        %v3338 = vadd.f32 %v2626, %v3279
        %v3339 = vadd.f32 %v2627, %v2827
        %v3340 = vadd.f32 %v2628, %v2892
        %v3341 = vadd.f32 %v2629, %v2957
        %v3342 = vadd.f32 %v2630, %v3022
        %v3343 = vadd.f32 %v2631, %v3087
        %v3344 = vadd.f32 %v2632, %v3152
        %v3345 = vadd.f32 %v2633, %v3217
        %v3346 = vadd.f32 %v2634, %v3282
        %v3347 = vadd.f32 %v2635, %v2830
        %v3348 = vadd.f32 %v2636, %v2895
        %v3349 = vadd.f32 %v2637, %v2960
        %v3350 = vadd.f32 %v2638, %v3025
        %v3351 = vadd.f32 %v2639, %v3090
        %v3352 = vadd.f32 %v2640, %v3155
        %v3353 = vadd.f32 %v2641, %v3220
        %v3354 = vadd.f32 %v2642, %v3285
        %v3355 = vadd.f32 %v2643, %v2833
        %v3356 = vadd.f32 %v2644, %v2898
        %v3357 = vadd.f32 %v2645, %v2963
        %v3358 = vadd.f32 %v2646, %v3028
        %v3359 = vadd.f32 %v2647, %v3093
        %v3360 = vadd.f32 %v2648, %v3158
        %v3361 = vadd.f32 %v2649, %v3223
        %v3362 = vadd.f32 %v2650, %v3288
        %v3363 = vadd.f32 %v2651, %v2836
        %v3364 = vadd.f32 %v2652, %v2901
        %v3365 = vadd.f32 %v2653, %v2966
        %v3366 = vadd.f32 %v2654, %v3031
        %v3367 = vadd.f32 %v2655, %v3096
        %v3368 = vadd.f32 %v2656, %v3161
        %v3369 = vadd.f32 %v2657, %v3226
        %v3370 = vadd.f32 %v2658, %v3291
        %v3371 = vadd.f32 %v2659, %v2839
        %v3372 = vadd.f32 %v2660, %v2904
        %v3373 = vadd.f32 %v2661, %v2969
        %v3374 = vadd.f32 %v2662, %v3034
        %v3375 = vadd.f32 %v2663, %v3099
        %v3376 = vadd.f32 %v2664, %v3164
        %v3377 = vadd.f32 %v2665, %v3229
        %v3378 = vadd.f32 %v2666, %v3294
        %v3379 = vadd.f32 %v2667, %v2842
        %v3380 = vadd.f32 %v2668, %v2907
        %v3381 = vadd.f32 %v2669, %v2972
        %v3382 = vadd.f32 %v2670, %v3037
        %v3383 = vadd.f32 %v2671, %v3102
        %v3384 = vadd.f32 %v2672, %v3167
        %v3385 = vadd.f32 %v2673, %v3232
        %v3386 = vadd.f32 %v2674, %v3297
        %v3387 = vadd.f32 %v2675, %v2845
        %v3388 = vadd.f32 %v2676, %v2910
        %v3389 = vadd.f32 %v2677, %v2975
        %v3390 = vadd.f32 %v2678, %v3040
        %v3391 = vadd.f32 %v2679, %v3105
        %v3392 = vadd.f32 %v2680, %v3170
        %v3393 = vadd.f32 %v2681, %v3235
        %v3394 = vadd.f32 %v2682, %v3300
        %v3395 = vadd.f32 %v2683, %v2848
        %v3396 = vadd.f32 %v2684, %v2913
        %v3397 = vadd.f32 %v2685, %v2978
        %v3398 = vadd.f32 %v2686, %v3043
        %v3399 = vadd.f32 %v2687, %v3108
        %v3400 = vadd.f32 %v2688, %v3173
        %v3401 = vadd.f32 %v2689, %v3238
        %v3402 = vadd.f32 %v2690, %v3303
        %v3403 = vadd.f32 %v2691, %v2851
        %v3404 = vadd.f32 %v2692, %v2916
        %v3405 = vadd.f32 %v2693, %v2981
        %v3406 = vadd.f32 %v2694, %v3046
        %v3407 = vadd.f32 %v2695, %v3111
        %v3408 = vadd.f32 %v2696, %v3176
        %v3409 = vadd.f32 %v2697, %v3241
        %v3410 = vadd.f32 %v2698, %v3306
        %v3411 = vadd.f32 %v2699, %v2854
        %v3412 = vadd.f32 %v2700, %v2919
        %v3413 = vadd.f32 %v2701, %v2984
        %v3414 = vadd.f32 %v2702, %v3049
        %v3415 = vadd.f32 %v2703, %v3114
        %v3416 = vadd.f32 %v2704, %v3179
        %v3417 = vadd.f32 %v2705, %v3244
        %v3418 = vadd.f32 %v2706, %v3309
        %v3419 = vadd.f32 %v2707, %v2857
        %v3420 = vadd.f32 %v2708, %v2922
        %v3421 = vadd.f32 %v2709, %v2987
        %v3422 = vadd.f32 %v2710, %v3052
        %v3423 = vadd.f32 %v2711, %v3117
        %v3424 = vadd.f32 %v2712, %v3182
        %v3425 = vadd.f32 %v2713, %v3247
        %v3426 = vadd.f32 %v2714, %v3312
        %v3427 = vadd.f32 %v2715, %v2860
        %v3428 = vadd.f32 %v2716, %v2925
        %v3429 = vadd.f32 %v2717, %v2990
        %v3430 = vadd.f32 %v2718, %v3055
        %v3431 = vadd.f32 %v2719, %v3120
        %v3432 = vadd.f32 %v2720, %v3185
        %v3433 = vadd.f32 %v2721, %v3250
        %v3434 = vadd.f32 %v2722, %v3315
        %v3435 = vadd.f32 %v2723, %v2863
        %v3436 = vadd.f32 %v2724, %v2928
        %v3437 = vadd.f32 %v2725, %v2993
        %v3438 = vadd.f32 %v2726, %v3058
        %v3439 = vadd.f32 %v2727, %v3123
        %v3440 = vadd.f32 %v2728, %v3188
        %v3441 = vadd.f32 %v2729, %v3253
        %v3442 = vadd.f32 %v2730, %v3318
        %v3443 = vadd.f32 %v2731, %v2866
        %v3444 = vadd.f32 %v2732, %v2931
        %v3445 = vadd.f32 %v2733, %v2996
        %v3446 = vadd.f32 %v2734, %v3061
        %v3447 = vadd.f32 %v2735, %v3126
        %v3448 = vadd.f32 %v2736, %v3191
        %v3449 = vadd.f32 %v2737, %v3256
        %v3450 = vadd.f32 %v2738, %v3321
        %v3451 = vmax.f32 %v3323, 0.0
        %v3452 = vmax.f32 %v3324, 0.0
        %v3453 = vmax.f32 %v3325, 0.0
        %v3454 = vmax.f32 %v3326, 0.0
        %v3455 = vmax.f32 %v3327, 0.0
        %v3456 = vmax.f32 %v3328, 0.0
        %v3457 = vmax.f32 %v3329, 0.0
        %v3458 = vmax.f32 %v3330, 0.0
        %v3459 = vmax.f32 %v3331, 0.0
        %v3460 = vmax.f32 %v3332, 0.0
        %v3461 = vmax.f32 %v3333, 0.0
        %v3462 = vmax.f32 %v3334, 0.0
        %v3463 = vmax.f32 %v3335, 0.0
        %v3464 = vmax.f32 %v3336, 0.0
        %v3465 = vmax.f32 %v3337, 0.0
        %v3466 = vmax.f32 %v3338, 0.0
        %v3467 = vmax.f32 %v3339, 0.0
        %v3468 = vmax.f32 %v3340, 0.0
        %v3469 = vmax.f32 %v3341, 0.0
        %v3470 = vmax.f32 %v3342, 0.0
        %v3471 = vmax.f32 %v3343, 0.0
        %v3472 = vmax.f32 %v3344, 0.0
        %v3473 = vmax.f32 %v3345, 0.0
        %v3474 = vmax.f32 %v3346, 0.0
        %v3475 = vmax.f32 %v3347, 0.0
        %v3476 = vmax.f32 %v3348, 0.0
        %v3477 = vmax.f32 %v3349, 0.0
        %v3478 = vmax.f32 %v3350, 0.0
        %v3479 = vmax.f32 %v3351, 0.0
        %v3480 = vmax.f32 %v3352, 0.0
        %v3481 = vmax.f32 %v3353, 0.0
        %v3482 = vmax.f32 %v3354, 0.0
        %v3483 = vmax.f32 %v3355, 0.0
        %v3484 = vmax.f32 %v3356, 0.0
        %v3485 = vmax.f32 %v3357, 0.0
        %v3486 = vmax.f32 %v3358, 0.0
        %v3487 = vmax.f32 %v3359, 0.0
        %v3488 = vmax.f32 %v3360, 0.0
        %v3489 = vmax.f32 %v3361, 0.0
        %v3490 = vmax.f32 %v3362, 0.0
        %v3491 = vmax.f32 %v3363, 0.0
        %v3492 = vmax.f32 %v3364, 0.0
        %v3493 = vmax.f32 %v3365, 0.0
        %v3494 = vmax.f32 %v3366, 0.0
        %v3495 = vmax.f32 %v3367, 0.0
        %v3496 = vmax.f32 %v3368, 0.0
        %v3497 = vmax.f32 %v3369, 0.0
        %v3498 = vmax.f32 %v3370, 0.0
        %v3499 = vmax.f32 %v3371, 0.0
        %v3500 = vmax.f32 %v3372, 0.0
        %v3501 = vmax.f32 %v3373, 0.0
        %v3502 = vmax.f32 %v3374, 0.0
        %v3503 = vmax.f32 %v3375, 0.0
        %v3504 = vmax.f32 %v3376, 0.0
        %v3505 = vmax.f32 %v3377, 0.0
        %v3506 = vmax.f32 %v3378, 0.0
        %v3507 = vmax.f32 %v3379, 0.0
        %v3508 = vmax.f32 %v3380, 0.0
        %v3509 = vmax.f32 %v3381, 0.0
        %v3510 = vmax.f32 %v3382, 0.0
        %v3511 = vmax.f32 %v3383, 0.0
        %v3512 = vmax.f32 %v3384, 0.0
        %v3513 = vmax.f32 %v3385, 0.0
        %v3514 = vmax.f32 %v3386, 0.0
        %v3515 = vmax.f32 %v3387, 0.0
        %v3516 = vmax.f32 %v3388, 0.0
        %v3517 = vmax.f32 %v3389, 0.0
        %v3518 = vmax.f32 %v3390, 0.0
        %v3519 = vmax.f32 %v3391, 0.0
        %v3520 = vmax.f32 %v3392, 0.0
        %v3521 = vmax.f32 %v3393, 0.0
        %v3522 = vmax.f32 %v3394, 0.0
        %v3523 = vmax.f32 %v3395, 0.0
        %v3524 = vmax.f32 %v3396, 0.0
        %v3525 = vmax.f32 %v3397, 0.0
        %v3526 = vmax.f32 %v3398, 0.0
        %v3527 = vmax.f32 %v3399, 0.0
        %v3528 = vmax.f32 %v3400, 0.0
        %v3529 = vmax.f32 %v3401, 0.0
        %v3530 = vmax.f32 %v3402, 0.0
        %v3531 = vmax.f32 %v3403, 0.0
        %v3532 = vmax.f32 %v3404, 0.0
        %v3533 = vmax.f32 %v3405, 0.0
        %v3534 = vmax.f32 %v3406, 0.0
        %v3535 = vmax.f32 %v3407, 0.0
        %v3536 = vmax.f32 %v3408, 0.0
        %v3537 = vmax.f32 %v3409, 0.0
        %v3538 = vmax.f32 %v3410, 0.0
        %v3539 = vmax.f32 %v3411, 0.0
        %v3540 = vmax.f32 %v3412, 0.0
        %v3541 = vmax.f32 %v3413, 0.0
        %v3542 = vmax.f32 %v3414, 0.0
        %v3543 = vmax.f32 %v3415, 0.0
        %v3544 = vmax.f32 %v3416, 0.0
        %v3545 = vmax.f32 %v3417, 0.0
        %v3546 = vmax.f32 %v3418, 0.0
        %v3547 = vmax.f32 %v3419, 0.0
        %v3548 = vmax.f32 %v3420, 0.0
        %v3549 = vmax.f32 %v3421, 0.0
        %v3550 = vmax.f32 %v3422, 0.0
        %v3551 = vmax.f32 %v3423, 0.0
        %v3552 = vmax.f32 %v3424, 0.0
        %v3553 = vmax.f32 %v3425, 0.0
        %v3554 = vmax.f32 %v3426, 0.0
        %v3555 = vmax.f32 %v3427, 0.0
        %v3556 = vmax.f32 %v3428, 0.0
        %v3557 = vmax.f32 %v3429, 0.0
        %v3558 = vmax.f32 %v3430, 0.0
        %v3559 = vmax.f32 %v3431, 0.0
        %v3560 = vmax.f32 %v3432, 0.0
        %v3561 = vmax.f32 %v3433, 0.0
        %v3562 = vmax.f32 %v3434, 0.0
        %v3563 = vmax.f32 %v3435, 0.0
        %v3564 = vmax.f32 %v3436, 0.0
        %v3565 = vmax.f32 %v3437, 0.0
        %v3566 = vmax.f32 %v3438, 0.0
        %v3567 = vmax.f32 %v3439, 0.0
        %v3568 = vmax.f32 %v3440, 0.0
        %v3569 = vmax.f32 %v3441, 0.0
        %v3570 = vmax.f32 %v3442, 0.0
        %v3571 = vmax.f32 %v3443, 0.0
        %v3572 = vmax.f32 %v3444, 0.0
        %v3573 = vmax.f32 %v3445, 0.0
        %v3574 = vmax.f32 %v3446, 0.0
        %v3575 = vmax.f32 %v3447, 0.0
        %v3576 = vmax.f32 %v3448, 0.0
        %v3577 = vmax.f32 %v3449, 0.0
        %v3578 = vmax.f32 %v3450, 0.0
        %v3579 = vld [vmem:[%s6] sm:$0xff]
        %v3580 = vld [vmem:[%s6 + $0x8] sm:$0xff]
        %3581 = vmatpush.msra.mxu0 %v3571
        %3582 = vmatpush.msra.mxu0 %v3563
        %3583 = vmatpush.msra.mxu0 %v3555
        %3584 = vmatpush.msra.mxu0 %v3547
        %3585 = vmatpush.msra.mxu0 %v3539
        %3586 = vmatpush.msra.mxu0 %v3531
        %3587 = vmatpush.msra.mxu0 %v3523
        %3588 = vmatpush.msra.mxu0 %v3515
        %3589 = vmatpush.msra.mxu0 %v3507
        %3590 = vmatpush.msra.mxu0 %v3499
        %3591 = vmatpush.msra.mxu0 %v3491
        %3592 = vmatpush.msra.mxu0 %v3483
        %3593 = vmatpush.msra.mxu0 %v3475
        %3594 = vmatpush.msra.mxu0 %v3467
        %3595 = vmatpush.msra.mxu0 %v3459
        %3596 = vmatpush.msra.mxu0 %v3451
        %3597 = vmatmul.f32.gmra.mxu0 %v3579
        %v3598 = vpop.f32.mrf.mxu0
        %v3599 = vadd.f32 0.0, %v3598
        %3600 = vmatmul.f32.gmra.mxu0 %v3580
        %v3601 = vpop.f32.mrf.mxu0
        %v3602 = vadd.f32 0.0, %v3601
        %3603 = vdwg.mxu0
        %3604 = vmatpush.msra.mxu0 %v3572
        %3605 = vmatpush.msra.mxu0 %v3564
        %3606 = vmatpush.msra.mxu0 %v3556
        %3607 = vmatpush.msra.mxu0 %v3548
        %3608 = vmatpush.msra.mxu0 %v3540
        %3609 = vmatpush.msra.mxu0 %v3532
        %3610 = vmatpush.msra.mxu0 %v3524
        %3611 = vmatpush.msra.mxu0 %v3516
        %3612 = vmatpush.msra.mxu0 %v3508
        %3613 = vmatpush.msra.mxu0 %v3500
        %3614 = vmatpush.msra.mxu0 %v3492
        %3615 = vmatpush.msra.mxu0 %v3484
        %3616 = vmatpush.msra.mxu0 %v3476
        %3617 = vmatpush.msra.mxu0 %v3468
        %3618 = vmatpush.msra.mxu0 %v3460
        %3619 = vmatpush.msra.mxu0 %v3452
        %3620 = vmatmul.f32.gmra.mxu0 %v3579
        %v3621 = vpop.f32.mrf.mxu0
        %v3622 = vadd.f32 0.0, %v3621
        %3623 = vmatmul.f32.gmra.mxu0 %v3580
        %v3624 = vpop.f32.mrf.mxu0
        %v3625 = vadd.f32 0.0, %v3624
        %3626 = vdwg.mxu0
        %3627 = vmatpush.msra.mxu0 %v3573
        %3628 = vmatpush.msra.mxu0 %v3565
        %3629 = vmatpush.msra.mxu0 %v3557
        %3630 = vmatpush.msra.mxu0 %v3549
        %3631 = vmatpush.msra.mxu0 %v3541
        %3632 = vmatpush.msra.mxu0 %v3533
        %3633 = vmatpush.msra.mxu0 %v3525
        %3634 = vmatpush.msra.mxu0 %v3517
        %3635 = vmatpush.msra.mxu0 %v3509
        %3636 = vmatpush.msra.mxu0 %v3501
        %3637 = vmatpush.msra.mxu0 %v3493
        %3638 = vmatpush.msra.mxu0 %v3485
        %3639 = vmatpush.msra.mxu0 %v3477
        %3640 = vmatpush.msra.mxu0 %v3469
        %3641 = vmatpush.msra.mxu0 %v3461
        %3642 = vmatpush.msra.mxu0 %v3453
        %3643 = vmatmul.f32.gmra.mxu0 %v3579
        %v3644 = vpop.f32.mrf.mxu0
        %v3645 = vadd.f32 0.0, %v3644
        %3646 = vmatmul.f32.gmra.mxu0 %v3580
        %v3647 = vpop.f32.mrf.mxu0
        %v3648 = vadd.f32 0.0, %v3647
        %3649 = vdwg.mxu0
        %3650 = vmatpush.msra.mxu0 %v3574
        %3651 = vmatpush.msra.mxu0 %v3566
        %3652 = vmatpush.msra.mxu0 %v3558
        %3653 = vmatpush.msra.mxu0 %v3550
        %3654 = vmatpush.msra.mxu0 %v3542
        %3655 = vmatpush.msra.mxu0 %v3534
        %3656 = vmatpush.msra.mxu0 %v3526
        %3657 = vmatpush.msra.mxu0 %v3518
        %3658 = vmatpush.msra.mxu0 %v3510
        %3659 = vmatpush.msra.mxu0 %v3502
        %3660 = vmatpush.msra.mxu0 %v3494
        %3661 = vmatpush.msra.mxu0 %v3486
        %3662 = vmatpush.msra.mxu0 %v3478
        %3663 = vmatpush.msra.mxu0 %v3470
        %3664 = vmatpush.msra.mxu0 %v3462
        %3665 = vmatpush.msra.mxu0 %v3454
        %3666 = vmatmul.f32.gmra.mxu0 %v3579
        %v3667 = vpop.f32.mrf.mxu0
        %v3668 = vadd.f32 0.0, %v3667
        %3669 = vmatmul.f32.gmra.mxu0 %v3580
        %v3670 = vpop.f32.mrf.mxu0
        %v3671 = vadd.f32 0.0, %v3670
        %3672 = vdwg.mxu0
        %3673 = vmatpush.msra.mxu0 %v3575
        %3674 = vmatpush.msra.mxu0 %v3567
        %3675 = vmatpush.msra.mxu0 %v3559
        %3676 = vmatpush.msra.mxu0 %v3551
        %3677 = vmatpush.msra.mxu0 %v3543
        %3678 = vmatpush.msra.mxu0 %v3535
        %3679 = vmatpush.msra.mxu0 %v3527
        %3680 = vmatpush.msra.mxu0 %v3519
        %3681 = vmatpush.msra.mxu0 %v3511
        %3682 = vmatpush.msra.mxu0 %v3503
        %3683 = vmatpush.msra.mxu0 %v3495
        %3684 = vmatpush.msra.mxu0 %v3487
        %3685 = vmatpush.msra.mxu0 %v3479
        %3686 = vmatpush.msra.mxu0 %v3471
        %3687 = vmatpush.msra.mxu0 %v3463
        %3688 = vmatpush.msra.mxu0 %v3455
        %3689 = vmatmul.f32.gmra.mxu0 %v3579
        %v3690 = vpop.f32.mrf.mxu0
        %v3691 = vadd.f32 0.0, %v3690
        %3692 = vmatmul.f32.gmra.mxu0 %v3580
        %v3693 = vpop.f32.mrf.mxu0
        %v3694 = vadd.f32 0.0, %v3693
        %3695 = vdwg.mxu0
        %3696 = vmatpush.msra.mxu0 %v3576
        %3697 = vmatpush.msra.mxu0 %v3568
        %3698 = vmatpush.msra.mxu0 %v3560
        %3699 = vmatpush.msra.mxu0 %v3552
        %3700 = vmatpush.msra.mxu0 %v3544
        %3701 = vmatpush.msra.mxu0 %v3536
        %3702 = vmatpush.msra.mxu0 %v3528
        %3703 = vmatpush.msra.mxu0 %v3520
        %3704 = vmatpush.msra.mxu0 %v3512
        %3705 = vmatpush.msra.mxu0 %v3504
        %3706 = vmatpush.msra.mxu0 %v3496
        %3707 = vmatpush.msra.mxu0 %v3488
        %3708 = vmatpush.msra.mxu0 %v3480
        %3709 = vmatpush.msra.mxu0 %v3472
        %3710 = vmatpush.msra.mxu0 %v3464
        %3711 = vmatpush.msra.mxu0 %v3456
        %3712 = vmatmul.f32.gmra.mxu0 %v3579
        %v3713 = vpop.f32.mrf.mxu0
        %v3714 = vadd.f32 0.0, %v3713
        %3715 = vmatmul.f32.gmra.mxu0 %v3580
        %v3716 = vpop.f32.mrf.mxu0
        %v3717 = vadd.f32 0.0, %v3716
        %3718 = vdwg.mxu0
        %3719 = vmatpush.msra.mxu0 %v3577
        %3720 = vmatpush.msra.mxu0 %v3569
        %3721 = vmatpush.msra.mxu0 %v3561
        %3722 = vmatpush.msra.mxu0 %v3553
        %3723 = vmatpush.msra.mxu0 %v3545
        %3724 = vmatpush.msra.mxu0 %v3537
        %3725 = vmatpush.msra.mxu0 %v3529
        %3726 = vmatpush.msra.mxu0 %v3521
        %3727 = vmatpush.msra.mxu0 %v3513
        %3728 = vmatpush.msra.mxu0 %v3505
        %3729 = vmatpush.msra.mxu0 %v3497
        %3730 = vmatpush.msra.mxu0 %v3489
        %3731 = vmatpush.msra.mxu0 %v3481
        %3732 = vmatpush.msra.mxu0 %v3473
        %3733 = vmatpush.msra.mxu0 %v3465
        %3734 = vmatpush.msra.mxu0 %v3457
        %3735 = vmatmul.f32.gmra.mxu0 %v3579
        %v3736 = vpop.f32.mrf.mxu0
        %v3737 = vadd.f32 0.0, %v3736
        %3738 = vmatmul.f32.gmra.mxu0 %v3580
        %v3739 = vpop.f32.mrf.mxu0
        %v3740 = vadd.f32 0.0, %v3739
        %3741 = vdwg.mxu0
        %3742 = vmatpush.msra.mxu0 %v3578
        %3743 = vmatpush.msra.mxu0 %v3570
        %3744 = vmatpush.msra.mxu0 %v3562
        %3745 = vmatpush.msra.mxu0 %v3554
        %3746 = vmatpush.msra.mxu0 %v3546
        %3747 = vmatpush.msra.mxu0 %v3538
        %3748 = vmatpush.msra.mxu0 %v3530
        %3749 = vmatpush.msra.mxu0 %v3522
        %3750 = vmatpush.msra.mxu0 %v3514
        %3751 = vmatpush.msra.mxu0 %v3506
        %3752 = vmatpush.msra.mxu0 %v3498
        %3753 = vmatpush.msra.mxu0 %v3490
        %3754 = vmatpush.msra.mxu0 %v3482
        %3755 = vmatpush.msra.mxu0 %v3474
        %3756 = vmatpush.msra.mxu0 %v3466
        %3757 = vmatpush.msra.mxu0 %v3458
        %3758 = vmatmul.f32.gmra.mxu0 %v3579
        %v3759 = vpop.f32.mrf.mxu0
        %v3760 = vadd.f32 0.0, %v3759
        %3761 = vmatmul.f32.gmra.mxu0 %v3580
        %v3762 = vpop.f32.mrf.mxu0
        %v3763 = vadd.f32 0.0, %v3762
        %3764 = vdwg.mxu0
        %v3766 = vperm.slane %v364, 0
        %v3767 = vperm.slane %v364, 1
        %v3768 = vperm.slane %v364, 2
        %v3769 = vperm.slane %v364, 3
        %v3770 = vperm.slane %v364, 4
        %v3771 = vperm.slane %v364, 5
        %v3772 = vperm.slane %v364, 6
        %v3773 = vperm.slane %v364, 7
        %v3782 = vmul.f32 %v3599, %v3766
        %v3783 = vmul.f32 %v3622, %v3767
        %v3784 = vmul.f32 %v3645, %v3768
        %v3785 = vmul.f32 %v3668, %v3769
        %v3786 = vmul.f32 %v3691, %v3770
        %v3787 = vmul.f32 %v3714, %v3771
        %v3788 = vmul.f32 %v3737, %v3772
        %v3789 = vmul.f32 %v3760, %v3773
        %v3790 = vmul.f32 %v3602, %v3766
        %v3791 = vmul.f32 %v3625, %v3767
        %v3792 = vmul.f32 %v3648, %v3768
        %v3793 = vmul.f32 %v3671, %v3769
        %v3794 = vmul.f32 %v3694, %v3770
        %v3795 = vmul.f32 %v3717, %v3771
        %v3796 = vmul.f32 %v3740, %v3772
        %v3797 = vmul.f32 %v3763, %v3773
        %v3798 = vadd.f32 %v348, %v3782
        %v3799 = vadd.f32 %v349, %v3783
        %v3800 = vadd.f32 %v350, %v3784
        %v3801 = vadd.f32 %v351, %v3785
        %v3802 = vadd.f32 %v352, %v3786
        %v3803 = vadd.f32 %v353, %v3787
        %v3804 = vadd.f32 %v354, %v3788
        %v3805 = vadd.f32 %v355, %v3789
        %v3806 = vadd.f32 %v356, %v3790
        %v3807 = vadd.f32 %v357, %v3791
        %v3808 = vadd.f32 %v358, %v3792
        %v3809 = vadd.f32 %v359, %v3793
        %v3810 = vadd.f32 %v360, %v3794
        %v3811 = vadd.f32 %v361, %v3795
        %v3812 = vadd.f32 %v362, %v3796
        %v3813 = vadd.f32 %v363, %v3797
        %v3822 = vrot.slane %v3798, 3
        %v3823 = vrot.slane %v3799, 3
        %v3824 = vrot.slane %v3800, 3
        %v3825 = vrot.slane %v3801, 3
        %v3826 = vrot.slane %v3802, 3
        %v3827 = vrot.slane %v3803, 3
        %v3828 = vrot.slane %v3804, 3
        %v3829 = vrot.slane %v3805, 3
        %3838 = vrot.lane.b32.xlu0 %v3822, 127
        %v3839 = vpop.permute.xlu0 %3838
        %3840 = vrot.lane.b32.xlu0 %v3823, 127
        %v3841 = vpop.permute.xlu0 %3840
        %3842 = vrot.lane.b32.xlu0 %v3824, 127
        %v3843 = vpop.permute.xlu0 %3842
        %3844 = vrot.lane.b32.xlu0 %v3825, 127
        %v3845 = vpop.permute.xlu0 %3844
        %3846 = vrot.lane.b32.xlu0 %v3826, 127
        %v3847 = vpop.permute.xlu0 %3846
        %3848 = vrot.lane.b32.xlu0 %v3827, 127
        %v3849 = vpop.permute.xlu0 %3848
        %3850 = vrot.lane.b32.xlu0 %v3828, 127
        %v3851 = vpop.permute.xlu0 %3850
        %3852 = vrot.lane.b32.xlu0 %v3829, 127
        %v3853 = vpop.permute.xlu0 %3852
        %v3854 = vsel %vm1199, %v3851, %v3853
        %v3855 = vsel %vm1199, %v3849, %v3851
        %v3856 = vsel %vm1199, %v3847, %v3849
        %v3857 = vsel %vm1199, %v3845, %v3847
        %v3858 = vsel %vm1199, %v3843, %v3845
        %v3859 = vsel %vm1199, %v3841, %v3843
        %v3860 = vsel %vm1199, %v3839, %v3841
        %v3861 = vsel %vm1199, %v3853, %v3839
        %v3862 = vsel %vm1087, %v3860, 0.0
        %v3863 = vsel %vm1088, %v3859, 0.0
        %v3864 = vsel %vm1089, %v3858, 0.0
        %v3865 = vsel %vm1090, %v3857, 0.0
        %v3866 = vsel %vm1091, %v3856, 0.0
        %v3867 = vsel %vm1092, %v3855, 0.0
        %v3868 = vsel %vm1093, %v3854, 0.0
        %v3869 = vsel %vm1094, %v3861, 0.0
        %v3878 = vrot.slane %v3862, 5
        %v3879 = vrot.slane %v3863, 5
        %v3880 = vrot.slane %v3864, 5
        %v3881 = vrot.slane %v3865, 5
        %v3882 = vrot.slane %v3866, 5
        %v3883 = vrot.slane %v3867, 5
        %v3884 = vrot.slane %v3868, 5
        %v3885 = vrot.slane %v3869, 5
        %v3894 = vmax.f32 %v3798, %v3878
        %v3895 = vmax.f32 %v3799, %v3879
        %v3896 = vmax.f32 %v3800, %v3880
        %v3897 = vmax.f32 %v3801, %v3881
        %v3898 = vmax.f32 %v3802, %v3882
        %v3899 = vmax.f32 %v3803, %v3883
        %v3900 = vmax.f32 %v3804, %v3884
        %v3901 = vmax.f32 %v3805, %v3885
        %3902 = vrot.lane.b32.xlu0 %v3822, 1
        %v3903 = vpop.permute.xlu0 %3902
        %3904 = vrot.lane.b32.xlu0 %v3823, 1
        %v3905 = vpop.permute.xlu0 %3904
        %3906 = vrot.lane.b32.xlu0 %v3824, 1
        %v3907 = vpop.permute.xlu0 %3906
        %3908 = vrot.lane.b32.xlu0 %v3825, 1
        %v3909 = vpop.permute.xlu0 %3908
        %3910 = vrot.lane.b32.xlu0 %v3826, 1
        %v3911 = vpop.permute.xlu0 %3910
        %3912 = vrot.lane.b32.xlu0 %v3827, 1
        %v3913 = vpop.permute.xlu0 %3912
        %3914 = vrot.lane.b32.xlu0 %v3828, 1
        %v3915 = vpop.permute.xlu0 %3914
        %3916 = vrot.lane.b32.xlu0 %v3829, 1
        %v3917 = vpop.permute.xlu0 %3916
        %v3918 = vsel %vm1264, %v3915, %v3917
        %v3919 = vsel %vm1264, %v3913, %v3915
        %v3920 = vsel %vm1264, %v3911, %v3913
        %v3921 = vsel %vm1264, %v3909, %v3911
        %v3922 = vsel %vm1264, %v3907, %v3909
        %v3923 = vsel %vm1264, %v3905, %v3907
        %v3924 = vsel %vm1264, %v3903, %v3905
        %v3925 = vsel %vm1264, %v3917, %v3903
        %v3926 = vsel %vm1095, %v3925, 0.0
        %v3927 = vsel %vm1096, %v3924, 0.0
        %v3928 = vsel %vm1097, %v3923, 0.0
        %v3929 = vsel %vm1098, %v3922, 0.0
        %v3930 = vsel %vm1099, %v3921, 0.0
        %v3931 = vsel %vm1100, %v3920, 0.0
        %v3932 = vsel %vm1101, %v3919, 0.0
        %v3933 = vsel %vm1102, %v3918, 0.0
        %v3942 = vrot.slane %v3926, 5
        %v3943 = vrot.slane %v3927, 5
        %v3944 = vrot.slane %v3928, 5
        %v3945 = vrot.slane %v3929, 5
        %v3946 = vrot.slane %v3930, 5
        %v3947 = vrot.slane %v3931, 5
        %v3948 = vrot.slane %v3932, 5
        %v3949 = vrot.slane %v3933, 5
        %v3958 = vmax.f32 %v3894, %v3942
        %v3959 = vmax.f32 %v3895, %v3943
        %v3960 = vmax.f32 %v3896, %v3944
        %v3961 = vmax.f32 %v3897, %v3945
        %v3962 = vmax.f32 %v3898, %v3946
        %v3963 = vmax.f32 %v3899, %v3947
        %v3964 = vmax.f32 %v3900, %v3948
        %v3965 = vmax.f32 %v3901, %v3949
        %v3974 = vrot.slane %v3958, 3
        %v3975 = vrot.slane %v3959, 3
        %v3976 = vrot.slane %v3960, 3
        %v3977 = vrot.slane %v3961, 3
        %v3978 = vrot.slane %v3962, 3
        %v3979 = vrot.slane %v3963, 3
        %v3980 = vrot.slane %v3964, 3
        %v3981 = vrot.slane %v3965, 3
        %3990 = vrot.lane.b32.xlu0 %v3974, 112
        %v3991 = vpop.permute.xlu0 %3990
        %3992 = vrot.lane.b32.xlu0 %v3975, 112
        %v3993 = vpop.permute.xlu0 %3992
        %3994 = vrot.lane.b32.xlu0 %v3976, 112
        %v3995 = vpop.permute.xlu0 %3994
        %3996 = vrot.lane.b32.xlu0 %v3977, 112
        %v3997 = vpop.permute.xlu0 %3996
        %3998 = vrot.lane.b32.xlu0 %v3978, 112
        %v3999 = vpop.permute.xlu0 %3998
        %4000 = vrot.lane.b32.xlu0 %v3979, 112
        %v4001 = vpop.permute.xlu0 %4000
        %4002 = vrot.lane.b32.xlu0 %v3980, 112
        %v4003 = vpop.permute.xlu0 %4002
        %4004 = vrot.lane.b32.xlu0 %v3981, 112
        %v4005 = vpop.permute.xlu0 %4004
        %v4006 = vsel %vm1393, %v4003, %v4005
        %v4007 = vsel %vm1393, %v4001, %v4003
        %v4008 = vsel %vm1393, %v3999, %v4001
        %v4009 = vsel %vm1393, %v3997, %v3999
        %v4010 = vsel %vm1393, %v3995, %v3997
        %v4011 = vsel %vm1393, %v3993, %v3995
        %v4012 = vsel %vm1393, %v3991, %v3993
        %v4013 = vsel %vm1393, %v4005, %v3991
        %v4014 = vsel %vm1071, %v4012, 0.0
        %v4015 = vsel %vm1072, %v4011, 0.0
        %v4016 = vsel %vm1073, %v4010, 0.0
        %v4017 = vsel %vm1074, %v4009, 0.0
        %v4018 = vsel %vm1075, %v4008, 0.0
        %v4019 = vsel %vm1076, %v4007, 0.0
        %v4020 = vsel %vm1077, %v4006, 0.0
        %v4021 = vsel %vm1078, %v4013, 0.0
        %v4030 = vrot.slane %v4014, 5
        %v4031 = vrot.slane %v4015, 5
        %v4032 = vrot.slane %v4016, 5
        %v4033 = vrot.slane %v4017, 5
        %v4034 = vrot.slane %v4018, 5
        %v4035 = vrot.slane %v4019, 5
        %v4036 = vrot.slane %v4020, 5
        %v4037 = vrot.slane %v4021, 5
        %v4046 = vmax.f32 %v3958, %v4030
        %v4047 = vmax.f32 %v3959, %v4031
        %v4048 = vmax.f32 %v3960, %v4032
        %v4049 = vmax.f32 %v3961, %v4033
        %v4050 = vmax.f32 %v3962, %v4034
        %v4051 = vmax.f32 %v3963, %v4035
        %v4052 = vmax.f32 %v3964, %v4036
        %v4053 = vmax.f32 %v3965, %v4037
        %4054 = vrot.lane.b32.xlu0 %v3974, 16
        %v4055 = vpop.permute.xlu0 %4054
        %4056 = vrot.lane.b32.xlu0 %v3975, 16
        %v4057 = vpop.permute.xlu0 %4056
        %4058 = vrot.lane.b32.xlu0 %v3976, 16
        %v4059 = vpop.permute.xlu0 %4058
        %4060 = vrot.lane.b32.xlu0 %v3977, 16
        %v4061 = vpop.permute.xlu0 %4060
        %4062 = vrot.lane.b32.xlu0 %v3978, 16
        %v4063 = vpop.permute.xlu0 %4062
        %4064 = vrot.lane.b32.xlu0 %v3979, 16
        %v4065 = vpop.permute.xlu0 %4064
        %4066 = vrot.lane.b32.xlu0 %v3980, 16
        %v4067 = vpop.permute.xlu0 %4066
        %4068 = vrot.lane.b32.xlu0 %v3981, 16
        %v4069 = vpop.permute.xlu0 %4068
        %v4070 = vsel %vm1458, %v4067, %v4069
        %v4071 = vsel %vm1458, %v4065, %v4067
        %v4072 = vsel %vm1458, %v4063, %v4065
        %v4073 = vsel %vm1458, %v4061, %v4063
        %v4074 = vsel %vm1458, %v4059, %v4061
        %v4075 = vsel %vm1458, %v4057, %v4059
        %v4076 = vsel %vm1458, %v4055, %v4057
        %v4077 = vsel %vm1458, %v4069, %v4055
        %v4078 = vsel %vm1079, %v4077, 0.0
        %v4079 = vsel %vm1080, %v4076, 0.0
        %v4080 = vsel %vm1081, %v4075, 0.0
        %v4081 = vsel %vm1082, %v4074, 0.0
        %v4082 = vsel %vm1083, %v4073, 0.0
        %v4083 = vsel %vm1084, %v4072, 0.0
        %v4084 = vsel %vm1085, %v4071, 0.0
        %v4085 = vsel %vm1086, %v4070, 0.0
        %v4094 = vrot.slane %v4078, 5
        %v4095 = vrot.slane %v4079, 5
        %v4096 = vrot.slane %v4080, 5
        %v4097 = vrot.slane %v4081, 5
        %v4098 = vrot.slane %v4082, 5
        %v4099 = vrot.slane %v4083, 5
        %v4100 = vrot.slane %v4084, 5
        %v4101 = vrot.slane %v4085, 5
        %v4110 = vmax.f32 %v4046, %v4094
        %v4111 = vmax.f32 %v4047, %v4095
        %v4112 = vmax.f32 %v4048, %v4096
        %v4113 = vmax.f32 %v4049, %v4097
        %v4114 = vmax.f32 %v4050, %v4098
        %v4115 = vmax.f32 %v4051, %v4099
        %v4116 = vmax.f32 %v4052, %v4100
        %v4117 = vmax.f32 %v4053, %v4101
        %vm4118 = vcmp.gt.f32.partialorder %v4110, 0.1
        %vm4119 = vcmp.gt.f32.partialorder %v4111, 0.1
        %vm4120 = vcmp.gt.f32.partialorder %v4112, 0.1
        %vm4121 = vcmp.gt.f32.partialorder %v4113, 0.1
        %vm4122 = vcmp.gt.f32.partialorder %v4114, 0.1
        %vm4123 = vcmp.gt.f32.partialorder %v4115, 0.1
        %vm4124 = vcmp.gt.f32.partialorder %v4116, 0.1
        %vm4125 = vcmp.gt.f32.partialorder %v4117, 0.1
        %vm4126 = vmand %vm2019, %vm4118
        %vm4127 = vmand %vm2020, %vm4119
        %vm4128 = vmand %vm2021, %vm4120
        %vm4129 = vmand %vm2022, %vm4121
        %vm4130 = vmand %vm2023, %vm4122
        %vm4131 = vmand %vm2024, %vm4123
        %vm4132 = vmand %vm2025, %vm4124
        %vm4133 = vmand %vm2026, %vm4125
        %v4134 = vsel %vm4126, 1, 0
        %v4135 = vsel %vm4127, 1, 0
        %v4136 = vsel %vm4128, 1, 0
        %v4137 = vsel %vm4129, 1, 0
        %v4138 = vsel %vm4130, 1, 0
        %v4139 = vsel %vm4131, 1, 0
        %v4140 = vsel %vm4132, 1, 0
        %v4141 = vsel %vm4133, 1, 0
        %v4142 = vperm.slane %v4134, 3
        %v4143 = vperm.slane %v4135, 3
        %v4144 = vperm.slane %v4136, 3
        %v4145 = vperm.slane %v4137, 3
        %v4146 = vperm.slane %v4138, 3
        %v4147 = vperm.slane %v4139, 3
        %v4148 = vperm.slane %v4140, 3
        %v4149 = vperm.slane %v4141, 3
        %vm4150 = vcmp.eq.s32.totalorder %v4142, 1
        %vm4151 = vcmp.eq.s32.totalorder %v4143, 1
        %vm4152 = vcmp.eq.s32.totalorder %v4144, 1
        %vm4153 = vcmp.eq.s32.totalorder %v4145, 1
        %vm4154 = vcmp.eq.s32.totalorder %v4146, 1
        %vm4155 = vcmp.eq.s32.totalorder %v4147, 1
        %vm4156 = vcmp.eq.s32.totalorder %v4148, 1
        %vm4157 = vcmp.eq.s32.totalorder %v4149, 1
        %v4158 = vsel %vm4150, %v3798, 0.0
        %v4159 = vsel %vm4151, %v3799, 0.0
        %v4160 = vsel %vm4152, %v3800, 0.0
        %v4161 = vsel %vm4153, %v3801, 0.0
        %v4162 = vsel %vm4154, %v3802, 0.0
        %v4163 = vsel %vm4155, %v3803, 0.0
        %v4164 = vsel %vm4156, %v3804, 0.0
        %v4165 = vsel %vm4157, %v3805, 0.0
        %v4166 = vsel %vm4150, %v3806, 0.0
        %v4167 = vsel %vm4151, %v3807, 0.0
        %v4168 = vsel %vm4152, %v3808, 0.0
        %v4169 = vsel %vm4153, %v3809, 0.0
        %v4170 = vsel %vm4154, %v3810, 0.0
        %v4171 = vsel %vm4155, %v3811, 0.0
        %v4172 = vsel %vm4156, %v3812, 0.0
        %v4173 = vsel %vm4157, %v3813, 0.0
        %4174 = vst [vmem:[%s340] sm:$0xff] %v4158
        %4175 = vst [vmem:[%s340 + $0x8] sm:$0xff] %v4159
        %4176 = vst [vmem:[%s340 + $0x10] sm:$0xff] %v4160
        %4177 = vst [vmem:[%s340 + $0x18] sm:$0xff] %v4161
        %4178 = vst [vmem:[%s340 + $0x20] sm:$0xff] %v4162
        %4179 = vst [vmem:[%s340 + $0x28] sm:$0xff] %v4163
        %4180 = vst [vmem:[%s340 + $0x30] sm:$0xff] %v4164
        %4181 = vst [vmem:[%s340 + $0x38] sm:$0xff] %v4165
        %4182 = vst [vmem:[%s340 + $0x40] sm:$0xff] %v4166
        %4183 = vst [vmem:[%s340 + $0x48] sm:$0xff] %v4167
        %4184 = vst [vmem:[%s340 + $0x50] sm:$0xff] %v4168
        %4185 = vst [vmem:[%s340 + $0x58] sm:$0xff] %v4169
        %4186 = vst [vmem:[%s340 + $0x60] sm:$0xff] %v4170
        %4187 = vst [vmem:[%s340 + $0x68] sm:$0xff] %v4171
        %4188 = vst [vmem:[%s340 + $0x70] sm:$0xff] %v4172
        %4189 = vst [vmem:[%s340 + $0x78] sm:$0xff] %v4173
        %s4190 = sand.u32 %s186, 1
        %s4191 = scalar_lea.sflag [#allocation4], %s4190
        %s4192 = sand.u32 %s186, 1
        %s4193 = smul.addr %s4192, 128
        %s4194 = scalar_lea.vmem [#allocation3], %s4193
        // Predicated region
        $region72: #{tpu_custom_call.1} parent=66 // pred_check
          %p4195 = pneg %p196
        $region73: #{tpu_custom_call.1} parent=66 // pred_check_branch
          %4197 = sbr.rel (%p4195) target = $region75
        $region74: #{tpu_custom_call.1} parent=66 // pred_region
          %s4198 = smul.u32 8, %s21
          %4200 = vsyncadd %s4191, 0
          %s4201 = smul.addr %s4198, 8
          %s4202 = scalar_lea.hbm %s7, %s4201
          %s4203 = sshll.u32 %s4194, 4
          %s4204 = int_to_ptr.vmem [resolvable:$true] %s4203
          %s4205 = sshll.u32 %s4202, 4
          %s4206 = int_to_ptr.hbm [resolvable:$true] %s4205
          %4211 = dma.vmem_to_hbm [thread:$0]  %s4204, 2048, %s4206, %s4191, 1024, 2048, 64
        $region75: #{tpu_custom_call.1} parent=66 // pred_fallthru
          _
      $region67: #{tpu_custom_call.1} parent=5 // pred_fallthru
        _
      %p4212 = scmp.le.s32.totalorder 2, %s16
      // Predicated region
      $region76: #{tpu_custom_call.1} parent=5 // pred_check
        %p4213 = pneg %p4212
      $region77: #{tpu_custom_call.1} parent=5 // pred_check_branch
        %4215 = sbr.rel (%p4213) target = $region79
      $region78: #{tpu_custom_call.1} parent=5 // pred_region
        %s4216 = ssub.s32 %s16, 2
        // Predicated region
        $region80: #{tpu_custom_call.1} parent=78 // pred_check
          %p4217 = pneg %p202
        $region81: #{tpu_custom_call.1} parent=78 // pred_check_branch
          %4219 = sbr.rel (%p4217) target = $region83
        $region82: #{tpu_custom_call.1} parent=78 // pred_region
          %s4220 = sand.u32 %s187, 1
          %s4221 = scalar_lea.sflag [#allocation4], %s4220
          %s4222 = sand.u32 %s187, 1
          %s4223 = smul.addr %s4222, 128
          %s4224 = scalar_lea.vmem [#allocation3], %s4223
          %4226 = dma.done %s4221, 2048
        $region83: #{tpu_custom_call.1} parent=78 // pred_fallthru
          _
      $region79: #{tpu_custom_call.1} parent=5 // pred_fallthru
        _
    $region6: #{tpu_custom_call.1} parent=1 // loop_footer
      %s20 = sadd.s32 1, %s16
    $region7: #{tpu_custom_call.1} parent=1 // loop_footer_branch
      %15 = sbr.rel target = $region3
    $region8: #{tpu_custom_call.1} parent=1 // loop_exit
      _
    %4227 = vsyncpa [#allocation4], 1
    %s4228 = scalar_lea.sflag [#allocation4], 1
    %4229 = vsyncpa %s4228, 1

</llo_original>
